<compile_context>
chip_gen: v5e
topology: v5e:2x2
jax: 0.10.0
libtpu: 0.0.40
codegen_flags: <defaults>
</compile_context>

<pallas_src>
import jax
import jax.numpy as jnp
from jax.experimental import pallas as pl
from jax.experimental.pallas import tpu as pltpu


def _divisors_desc(n):
    return [d for d in range(n, 0, -1) if n % d == 0]


def _vmem_limits():
    """(budget, scoped_limit, physical_cap) bytes, generation-aware."""
    cap = 64 * 1024 * 1024                       # conservative fallback (v7x-sized)
    try:
        cap = int(pltpu.get_tpu_info().vmem_capacity_bytes)
    except Exception:
        pass
    limit = min((cap * 3) // 4, 96 * 1024 * 1024)   # ~96 MiB v5e/v6e, ~48 MiB v7x
    limit = max(limit, 32 * 1024 * 1024)
    return limit - (4 << 20), limit, cap


# ----------------------------------------------------------------------------
# with_conv=True: fused pad(0,1,0,1) + Conv2d(C, C, k=3, s=2) + bias
# ----------------------------------------------------------------------------
def _conv3x3s2_kernel(ee_ref, eeb_ref, eo_ref, eob_ref, oe_ref, oo_ref,
                      w_ref, b_ref, o_ref):
    """One (batch, row-tile) output block.

    ee/eo   : even input rows (even / odd input cols), rows [i*tho, (i+1)*tho)
    eeb/eob : the single extra even row (i+1)*tho needed by the kh=2 taps
    oe/oo   : odd input rows (even / odd input cols), rows [i*tho, (i+1)*tho)
    w_ref   : (9, C, C) per-tap (cin, cout) weights, or (3, 3C, C) K-fused
    b_ref   : (1, C) f32 bias
    """
    _, tho, Wo, C = o_ref.shape
    M = tho * Wo
    fuse_k = (w_ref.shape[0] == 3)
    prec = (jax.lax.Precision.HIGHEST
            if ee_ref.dtype == jnp.float32 else jax.lax.Precision.DEFAULT)

    col_off = (0, 0, 1)                                 # column offset per kw
    top_plane = (ee_ref, eo_ref, ee_ref)                # kh = 0 (row 2*ho)
    mid_plane = (oe_ref, oo_ref, oe_ref)                # kh = 1 (row 2*ho + 1)
    bot_plane = ((ee_ref, eeb_ref), (eo_ref, eob_ref), (ee_ref, eeb_ref))  # kh = 2

    def load_top(kw):
        c0 = col_off[kw]
        return top_plane[kw][0, :, c0:c0 + Wo, :].reshape(M, C)

    def load_mid(kw):
        c0 = col_off[kw]
        return mid_plane[kw][0, :, c0:c0 + Wo, :].reshape(M, C)

    def load_bot(kw):
        c0 = col_off[kw]
        rm, rx = bot_plane[kw]
        extra = rx[0, :, c0:c0 + Wo, :]                 # row (i+1)*tho
        if tho > 1:
            main = rm[0, 1:tho, c0:c0 + Wo, :]          # rows 1 .. tho-1
            full = jnp.concatenate([main, extra], axis=0)
        else:
            full = extra
        return full.reshape(M, C)

    loaders = (load_top, load_mid, load_bot)

    # Bias-as-init accumulator (f32).
    acc = jnp.broadcast_to(b_ref[...].astype(jnp.float32), (M, C))

    if fuse_k:
        # C == 128: fuse the 3 kw taps of each kh row along the K axis
        # (K = 3C = 384 fills the 256-deep MXUs of v6e/v7x).
        for kh in range(3):
            xcat = jnp.concatenate([loaders[kh](kw) for kw in range(3)], axis=-1)
            acc = acc + jnp.dot(xcat, w_ref[kh],
                                preferred_element_type=jnp.float32,
                                precision=prec)
    else:
        for kh in range(3):
            for kw in range(3):
                acc = acc + jnp.dot(loaders[kh](kw), w_ref[kh * 3 + kw],
                                    preferred_element_type=jnp.float32,
                                    precision=prec)

    o_ref[0] = acc.reshape(tho, Wo, C).astype(o_ref.dtype)


def _conv_working_set(tho, wo_t, c, esize):
    """Rough per-step VMEM bytes (double-buffered blocks + kernel temps)."""
    fixed = 2 * 9 * c * c * esize + 2 * 4 * c            # weights + bias (x2 buf)
    extra = 2 * esize * c * (2 * wo_t + 1)               # the two single-row blocks
    per_row = c * (2 * esize * (5 * wo_t + 2)            # in/out blocks (x2 buf)
                   + wo_t * (4 + 4 * esize))             # f32 acc + live tap temps
    return fixed + extra + tho * per_row


def _pick_conv_row_tile(ho, wo_t, c, esize, budget):
    """Largest row tile (<= Ho, M = tho*Wo capped ~2048) fitting the budget."""
    cap_rows = max(1, 2048 // wo_t)
    for cand in range(min(ho, cap_rows), 0, -1):
        if _conv_working_set(cand, wo_t, c, esize) + (2 << 20) <= budget:
            return cand
    return 1


def _conv_downsample(x, weight, bias):
    B, C, H, W = x.shape
    Ho = (H - 2) // 2 + 1
    Wo = (W - 2) // 2 + 1
    Wo_t = ((Wo + 7) // 8) * 8            # sublane-aligned tap/output width
    esize = jnp.dtype(x.dtype).itemsize

    budget, vmem_limit, cap = _vmem_limits()
    tho = _pick_conv_row_tile(Ho, Wo_t, C, esize, budget)
    if B * pl.cdiv(Ho, tho) < 2 and Ho > 1:
        tho = pl.cdiv(Ho, 2)              # keep both v7x TensorCores fed
    Ho_pad = pl.cdiv(Ho, tho) * tho
    # Degrade gracefully for very large C: raise the scoped limit toward
    # physical VMEM rather than failing to compile.
    ws = _conv_working_set(tho, Wo_t, C, esize) + (2 << 20)
    vmem_limit = max(vmem_limit, min(ws, cap - (2 << 20)))

    # Single wrapper-level layout pass (fused by XLA): NCHW->NHWC transpose,
    # zero-pad bottom/right (covers the module's F.pad plus row/col rounding),
    # even/odd deinterleave of rows and columns.
    Hp = 2 * Ho_pad + 1
    Wp = 2 * Wo_t + 1
    xp = jnp.pad(jnp.transpose(x, (0, 2, 3, 1)),
                 ((0, 0), (0, Hp - H), (0, Wp - W), (0, 0)))
    x_ee = xp[:, 0::2, 0::2, :]           # (B, Ho_pad+1, Wo_t+1, C)
    x_eo = xp[:, 0::2, 1::2, :]           # (B, Ho_pad+1, Wo_t,   C)
    x_oe = xp[:, 1::2, 0::2, :]           # (B, Ho_pad,   Wo_t+1, C)
    x_oo = xp[:, 1::2, 1::2, :]           # (B, Ho_pad,   Wo_t,   C)
    We, Wod = Wo_t + 1, Wo_t

    # Per-tap (cin, cout) weights in the activation dtype; f32 bias row.
    w9 = jnp.transpose(weight, (2, 3, 1, 0)).reshape(9, C, C).astype(x.dtype)
    fuse_k = (C == 128)                   # K-fusion (lane-aligned concat) case
    w_arr = w9.reshape(3, 3 * C, C) if fuse_k else w9
    b_row = bias.reshape(1, C).astype(jnp.float32)

    grid = (B, Ho_pad // tho)
    in_specs = [
        pl.BlockSpec((1, tho, We, C), lambda b, i: (b, i, 0, 0)),            # ee
        pl.BlockSpec((1, 1, We, C), lambda b, i: (b, (i + 1) * tho, 0, 0)),  # ee extra row
        pl.BlockSpec((1, tho, Wod, C), lambda b, i: (b, i, 0, 0)),           # eo
        pl.BlockSpec((1, 1, Wod, C), lambda b, i: (b, (i + 1) * tho, 0, 0)), # eo extra row
        pl.BlockSpec((1, tho, We, C), lambda b, i: (b, i, 0, 0)),            # oe
        pl.BlockSpec((1, tho, Wod, C), lambda b, i: (b, i, 0, 0)),           # oo
        pl.BlockSpec(w_arr.shape, lambda b, i: (0, 0, 0)),                   # weights
        pl.BlockSpec((1, C), lambda b, i: (0, 0)),                           # bias
    ]
    out_specs = pl.BlockSpec((1, tho, Wo_t, C), lambda b, i: (b, i, 0, 0))

    out_nhwc = pl.pallas_call(
        _conv3x3s2_kernel,
        out_shape=jax.ShapeDtypeStruct((B, Ho_pad, Wo_t, C), x.dtype),
        grid=grid,
        in_specs=in_specs,
        out_specs=out_specs,
        compiler_params=pltpu.CompilerParams(
            dimension_semantics=("parallel", "parallel"),
            vmem_limit_bytes=int(vmem_limit)),
    )(x_ee, x_ee, x_eo, x_eo, x_oe, x_oo, w_arr, b_row)

    # Drop the row/col rounding padding and return to the module's NCHW
    # interface (slice + transpose fuse into one XLA pass).
    return jnp.transpose(out_nhwc[:, :Ho, :Wo, :], (0, 3, 1, 2))


# ----------------------------------------------------------------------------
# with_conv=False: AvgPool2d(kernel_size=2, stride=2), lane-dense VPU kernel
# ----------------------------------------------------------------------------
def _avgpool2x2_kernel(a_ref, b_ref, c_ref, d_ref, o_ref):
    s = (a_ref[...].astype(jnp.float32) + b_ref[...].astype(jnp.float32) +
         c_ref[...].astype(jnp.float32) + d_ref[...].astype(jnp.float32))
    o_ref[...] = (s * 0.25).astype(o_ref.dtype)


def _avgpool_downsample(x):
    B, C, H, W = x.shape
    Ho, Wo = H // 2, W // 2               # PyTorch AvgPool2d floor behaviour
    S = Ho * Wo
    # Four 2x2 parity planes via one strided-slice pass; spatial dims are
    # flattened so the kernel's last axis (Ho*Wo) is lane-dense.
    a = x[:, :, 0:2 * Ho:2, 0:2 * Wo:2].reshape(B, C, S)
    b = x[:, :, 0:2 * Ho:2, 1:2 * Wo:2].reshape(B, C, S)
    c = x[:, :, 1:2 * Ho:2, 0:2 * Wo:2].reshape(B, C, S)
    d = x[:, :, 1:2 * Ho:2, 1:2 * Wo:2].reshape(B, C, S)

    esize = jnp.dtype(x.dtype).itemsize
    budget, vmem_limit, cap = _vmem_limits()

    def fits(tc_, ts_):
        return (10 * esize + 8) * tc_ * ts_ + (1 << 20) <= budget

    tc, ts = C, S
    if not fits(tc, ts):
        found = False
        for cand in _divisors_desc(C):
            if (cand % 8 == 0 or cand == C) and fits(cand, S):
                tc, found = cand, True
                break
        if not found:
            tc = 8 if C % 8 == 0 else C
            for cand in _divisors_desc(S):
                if (cand % 128 == 0 or cand == S) and fits(tc, cand):
                    ts = cand
                    break
    ws = (10 * esize + 8) * tc * ts + (1 << 20)
    vmem_limit = max(vmem_limit, min(ws, cap - (2 << 20)))

    grid = (B, C // tc, S // ts)
    spec = pl.BlockSpec((1, tc, ts), lambda bb, ci, si: (bb, ci, si))

    out = pl.pallas_call(
        _avgpool2x2_kernel,
        out_shape=jax.ShapeDtypeStruct((B, C, S), x.dtype),
        grid=grid,
        in_specs=[spec, spec, spec, spec],
        out_specs=spec,
        compiler_params=pltpu.CompilerParams(
            dimension_semantics=("parallel", "parallel", "parallel"),
            vmem_limit_bytes=int(vmem_limit)),
    )(a, b, c, d)
    return out.reshape(B, C, Ho, Wo)


# ----------------------------------------------------------------------------
# Public forward (matches the PyTorch Downsample module)
# ----------------------------------------------------------------------------
def downsample(x, weight=None, bias=None, *, with_conv=True):
    """x: (B, C, H, W) NCHW.  weight: (C, C, 3, 3) OIHW, bias: (C,) if with_conv."""
    if with_conv:
        return _conv_downsample(x, weight, bias)
    return _avgpool_downsample(x)


# ----------------------------------------------------------------------------
# Pure-JAX references for verification
# ----------------------------------------------------------------------------
def _ref_conv(x, weight, bias):
    xp = jnp.pad(x, ((0, 0), (0, 0), (0, 1), (0, 1)))
    out = jax.lax.conv_general_dilated(
        xp.astype(jnp.float32), weight.astype(jnp.float32),
        window_strides=(2, 2), padding="VALID",
        dimension_numbers=("NCHW", "OIHW", "NCHW"),
        precision=jax.lax.Precision.HIGHEST)
    return out + bias.astype(jnp.float32).reshape(1, -1, 1, 1)


def _ref_avgpool(x):
    B, C, H, W = x.shape
    Ho, Wo = H // 2, W // 2
    return x[:, :, :2 * Ho, :2 * Wo].reshape(B, C, Ho, 2, Wo, 2).mean(axis=(3, 5))


# ----------------------------------------------------------------------------
if __name__ == "__main__":
    key = jax.random.PRNGKey(0)
    k_x, k_w, k_b, k_x2, k_w2, k_b2 = jax.random.split(key, 6)

    downsample_jit = jax.jit(downsample, static_argnames=("with_conv",))

    # --- small f32 smoke shape --------------------------------------------
    B, C, H, W = 2, 4, 16, 16
    x = jax.random.normal(k_x, (B, C, H, W), dtype=jnp.float32)
    fan_in = C * 9
    bound = 1.0 / (fan_in ** 0.5)
    weight = jax.random.uniform(k_w, (C, C, 3, 3), jnp.float32, -bound, bound)
    bias = jax.random.uniform(k_b, (C,), jnp.float32, -bound, bound)

    y_conv = jax.block_until_ready(downsample_jit(x, weight, bias, with_conv=True))
    y_conv_ref = _ref_conv(x, weight, bias)
    assert y_conv.shape == (B, C, 8, 8), y_conv.shape
    assert y_conv.dtype == x.dtype
    assert jnp.allclose(y_conv, y_conv_ref, atol=2e-3, rtol=2e-3), (
        float(jnp.max(jnp.abs(y_conv - y_conv_ref))))

    y_pool = jax.block_until_ready(downsample_jit(x, with_conv=False))
    y_pool_ref = _ref_avgpool(x)
    assert y_pool.shape == (B, C, 8, 8), y_pool.shape
    assert jnp.allclose(y_pool, y_pool_ref, atol=1e-5, rtol=1e-5)

    # --- bf16 check at C=128: exercises the K-fused MXU path, a ragged Ho,
    #     and a non-multiple-of-8 Wo (per the review's correctness concerns) --
    B2, C2, H2, W2 = 1, 128, 10, 12
    x2 = jax.random.normal(k_x2, (B2, C2, H2, W2), jnp.float32).astype(jnp.bfloat16)
    bound2 = 1.0 / ((C2 * 9) ** 0.5)
    w2 = jax.random.uniform(k_w2, (C2, C2, 3, 3), jnp.float32,
                            -bound2, bound2).astype(jnp.bfloat16)
    b2 = jax.random.uniform(k_b2, (C2,), jnp.float32, -bound2, bound2)

    y2 = jax.block_until_ready(downsample_jit(x2, w2, b2, with_conv=True))
    y2_ref = _ref_conv(x2.astype(jnp.float32), w2.astype(jnp.float32), b2)
    assert y2.shape == (B2, C2, 5, 6), y2.shape
    assert y2.dtype == jnp.bfloat16
    assert jnp.allclose(y2.astype(jnp.float32), y2_ref, atol=6e-2, rtol=6e-2), (
        float(jnp.max(jnp.abs(y2.astype(jnp.float32) - y2_ref))))

    print("KERNEL_OK")
</pallas_src>

<mosaic_0001>
module attributes {stable_mosaic.version = 11 : i64} {
  func.func @_conv3x3s2_kernel(%arg0: i32, %arg1: i32, %arg2: memref<1x8x9x4xf32, #tpu.memory_space<vmem>>, %arg3: memref<1x1x9x4xf32, #tpu.memory_space<vmem>>, %arg4: memref<1x8x8x4xf32, #tpu.memory_space<vmem>>, %arg5: memref<1x1x8x4xf32, #tpu.memory_space<vmem>>, %arg6: memref<1x8x9x4xf32, #tpu.memory_space<vmem>>, %arg7: memref<1x8x8x4xf32, #tpu.memory_space<vmem>>, %arg8: memref<9x4x4xf32, #tpu.memory_space<vmem>>, %arg9: memref<1x4xf32, #tpu.memory_space<vmem>>, %arg10: memref<1x8x8x4xf32, #tpu.memory_space<vmem>>) attributes {dimension_semantics = [#tpu.dimension_semantics<parallel>, #tpu.dimension_semantics<parallel>], iteration_bounds = array<i64: 2, 1>, scalar_prefetch = 0 : i64, scratch_operands = 0 : i64, tpu.core_type = #tpu.core_type<tc>, window_params = [{transform_indices = @transform_0, window_bounds = array<i64: 1, 8, 9, 4>}, {transform_indices = @transform_1, window_bounds = array<i64: 1, 1, 9, 4>}, {transform_indices = @transform_2, window_bounds = array<i64: 1, 8, 8, 4>}, {transform_indices = @transform_3, window_bounds = array<i64: 1, 1, 8, 4>}, {transform_indices = @transform_4, window_bounds = array<i64: 1, 8, 9, 4>}, {transform_indices = @transform_5, window_bounds = array<i64: 1, 8, 8, 4>}, {pipeline_mode = #tpu.pipeline_mode<synchronous>, transform_indices = @transform_6, window_bounds = array<i64: 9, 4, 4>}, {pipeline_mode = #tpu.pipeline_mode<synchronous>, transform_indices = @transform_7, window_bounds = array<i64: 1, 4>}, {transform_indices = @transform_8, window_bounds = array<i64: 1, 8, 8, 4>}]} {
    %c0 = arith.constant 0 : index
    %c0_0 = arith.constant 0 : index
    %0 = vector.load %arg9[%c0, %c0_0] : memref<1x4xf32, #tpu.memory_space<vmem>>, vector<1x4xf32>
    %1 = vector.shape_cast %0 : vector<1x4xf32> to vector<1x4xf32>
    %2 = vector.broadcast %1 : vector<1x4xf32> to vector<64x4xf32>
    %c0_1 = arith.constant 0 : index
    %c0_2 = arith.constant 0 : index
    %c0_3 = arith.constant 0 : index
    %c0_4 = arith.constant 0 : index
    %3 = vector.load %arg2[%c0_1, %c0_2, %c0_3, %c0_4] : memref<1x8x9x4xf32, #tpu.memory_space<vmem>>, vector<1x8x8x4xf32>
    %4 = vector.shape_cast %3 : vector<1x8x8x4xf32> to vector<8x8x4xf32>
    %5 = vector.shape_cast %4 : vector<8x8x4xf32> to vector<64x4xf32>
    %c0_5 = arith.constant 0 : index
    %c0_6 = arith.constant 0 : index
    %c0_7 = arith.constant 0 : index
    %6 = vector.load %arg8[%c0_5, %c0_6, %c0_7] : memref<9x4x4xf32, #tpu.memory_space<vmem>>, vector<1x4x4xf32>
    %7 = vector.shape_cast %6 : vector<1x4x4xf32> to vector<4x4xf32>
    %cst = arith.constant dense<0.000000e+00> : vector<64x4xf32>
    %8 = tpu.matmul %5, %7, %cst {dimension_numbers = #tpu.dot_dimension_numbers<[1], [0], [0], [1], [0, 0, 1, 1], [], []>, precision = #tpu.contract_precision<fp32>} : vector<64x4xf32>, vector<4x4xf32>, vector<64x4xf32> -> vector<64x4xf32>
    %9 = arith.addf %2, %8 : vector<64x4xf32>
    %c0_8 = arith.constant 0 : index
    %c0_9 = arith.constant 0 : index
    %c0_10 = arith.constant 0 : index
    %c0_11 = arith.constant 0 : index
    %10 = vector.load %arg4[%c0_8, %c0_9, %c0_10, %c0_11] : memref<1x8x8x4xf32, #tpu.memory_space<vmem>>, vector<1x8x8x4xf32>
    %11 = vector.shape_cast %10 : vector<1x8x8x4xf32> to vector<8x8x4xf32>
    %12 = vector.shape_cast %11 : vector<8x8x4xf32> to vector<64x4xf32>
    %c1 = arith.constant 1 : index
    %c0_12 = arith.constant 0 : index
    %c0_13 = arith.constant 0 : index
    %13 = vector.load %arg8[%c1, %c0_12, %c0_13] : memref<9x4x4xf32, #tpu.memory_space<vmem>>, vector<1x4x4xf32>
    %14 = vector.shape_cast %13 : vector<1x4x4xf32> to vector<4x4xf32>
    %cst_14 = arith.constant dense<0.000000e+00> : vector<64x4xf32>
    %15 = tpu.matmul %12, %14, %cst_14 {dimension_numbers = #tpu.dot_dimension_numbers<[1], [0], [0], [1], [0, 0, 1, 1], [], []>, precision = #tpu.contract_precision<fp32>} : vector<64x4xf32>, vector<4x4xf32>, vector<64x4xf32> -> vector<64x4xf32>
    %16 = arith.addf %9, %15 : vector<64x4xf32>
    %c0_15 = arith.constant 0 : index
    %c0_16 = arith.constant 0 : index
    %c1_17 = arith.constant 1 : index
    %c0_18 = arith.constant 0 : index
    %17 = vector.load %arg2[%c0_15, %c0_16, %c1_17, %c0_18] : memref<1x8x9x4xf32, #tpu.memory_space<vmem>>, vector<1x8x8x4xf32>
    %18 = vector.shape_cast %17 : vector<1x8x8x4xf32> to vector<8x8x4xf32>
    %19 = vector.shape_cast %18 : vector<8x8x4xf32> to vector<64x4xf32>
    %c2 = arith.constant 2 : index
    %c0_19 = arith.constant 0 : index
    %c0_20 = arith.constant 0 : index
    %20 = vector.load %arg8[%c2, %c0_19, %c0_20] : memref<9x4x4xf32, #tpu.memory_space<vmem>>, vector<1x4x4xf32>
    %21 = vector.shape_cast %20 : vector<1x4x4xf32> to vector<4x4xf32>
    %cst_21 = arith.constant dense<0.000000e+00> : vector<64x4xf32>
    %22 = tpu.matmul %19, %21, %cst_21 {dimension_numbers = #tpu.dot_dimension_numbers<[1], [0], [0], [1], [0, 0, 1, 1], [], []>, precision = #tpu.contract_precision<fp32>} : vector<64x4xf32>, vector<4x4xf32>, vector<64x4xf32> -> vector<64x4xf32>
    %23 = arith.addf %16, %22 : vector<64x4xf32>
    %c0_22 = arith.constant 0 : index
    %c0_23 = arith.constant 0 : index
    %c0_24 = arith.constant 0 : index
    %c0_25 = arith.constant 0 : index
    %24 = vector.load %arg6[%c0_22, %c0_23, %c0_24, %c0_25] : memref<1x8x9x4xf32, #tpu.memory_space<vmem>>, vector<1x8x8x4xf32>
    %25 = vector.shape_cast %24 : vector<1x8x8x4xf32> to vector<8x8x4xf32>
    %26 = vector.shape_cast %25 : vector<8x8x4xf32> to vector<64x4xf32>
    %c3 = arith.constant 3 : index
    %c0_26 = arith.constant 0 : index
    %c0_27 = arith.constant 0 : index
    %27 = vector.load %arg8[%c3, %c0_26, %c0_27] : memref<9x4x4xf32, #tpu.memory_space<vmem>>, vector<1x4x4xf32>
    %28 = vector.shape_cast %27 : vector<1x4x4xf32> to vector<4x4xf32>
    %cst_28 = arith.constant dense<0.000000e+00> : vector<64x4xf32>
    %29 = tpu.matmul %26, %28, %cst_28 {dimension_numbers = #tpu.dot_dimension_numbers<[1], [0], [0], [1], [0, 0, 1, 1], [], []>, precision = #tpu.contract_precision<fp32>} : vector<64x4xf32>, vector<4x4xf32>, vector<64x4xf32> -> vector<64x4xf32>
    %30 = arith.addf %23, %29 : vector<64x4xf32>
    %c0_29 = arith.constant 0 : index
    %c0_30 = arith.constant 0 : index
    %c0_31 = arith.constant 0 : index
    %c0_32 = arith.constant 0 : index
    %31 = vector.load %arg7[%c0_29, %c0_30, %c0_31, %c0_32] : memref<1x8x8x4xf32, #tpu.memory_space<vmem>>, vector<1x8x8x4xf32>
    %32 = vector.shape_cast %31 : vector<1x8x8x4xf32> to vector<8x8x4xf32>
    %33 = vector.shape_cast %32 : vector<8x8x4xf32> to vector<64x4xf32>
    %c4 = arith.constant 4 : index
    %c0_33 = arith.constant 0 : index
    %c0_34 = arith.constant 0 : index
    %34 = vector.load %arg8[%c4, %c0_33, %c0_34] : memref<9x4x4xf32, #tpu.memory_space<vmem>>, vector<1x4x4xf32>
    %35 = vector.shape_cast %34 : vector<1x4x4xf32> to vector<4x4xf32>
    %cst_35 = arith.constant dense<0.000000e+00> : vector<64x4xf32>
    %36 = tpu.matmul %33, %35, %cst_35 {dimension_numbers = #tpu.dot_dimension_numbers<[1], [0], [0], [1], [0, 0, 1, 1], [], []>, precision = #tpu.contract_precision<fp32>} : vector<64x4xf32>, vector<4x4xf32>, vector<64x4xf32> -> vector<64x4xf32>
    %37 = arith.addf %30, %36 : vector<64x4xf32>
    %c0_36 = arith.constant 0 : index
    %c0_37 = arith.constant 0 : index
    %c1_38 = arith.constant 1 : index
    %c0_39 = arith.constant 0 : index
    %38 = vector.load %arg6[%c0_36, %c0_37, %c1_38, %c0_39] : memref<1x8x9x4xf32, #tpu.memory_space<vmem>>, vector<1x8x8x4xf32>
    %39 = vector.shape_cast %38 : vector<1x8x8x4xf32> to vector<8x8x4xf32>
    %40 = vector.shape_cast %39 : vector<8x8x4xf32> to vector<64x4xf32>
    %c5 = arith.constant 5 : index
    %c0_40 = arith.constant 0 : index
    %c0_41 = arith.constant 0 : index
    %41 = vector.load %arg8[%c5, %c0_40, %c0_41] : memref<9x4x4xf32, #tpu.memory_space<vmem>>, vector<1x4x4xf32>
    %42 = vector.shape_cast %41 : vector<1x4x4xf32> to vector<4x4xf32>
    %cst_42 = arith.constant dense<0.000000e+00> : vector<64x4xf32>
    %43 = tpu.matmul %40, %42, %cst_42 {dimension_numbers = #tpu.dot_dimension_numbers<[1], [0], [0], [1], [0, 0, 1, 1], [], []>, precision = #tpu.contract_precision<fp32>} : vector<64x4xf32>, vector<4x4xf32>, vector<64x4xf32> -> vector<64x4xf32>
    %44 = arith.addf %37, %43 : vector<64x4xf32>
    %c0_43 = arith.constant 0 : index
    %c0_44 = arith.constant 0 : index
    %c0_45 = arith.constant 0 : index
    %c0_46 = arith.constant 0 : index
    %45 = vector.load %arg3[%c0_43, %c0_44, %c0_45, %c0_46] : memref<1x1x9x4xf32, #tpu.memory_space<vmem>>, vector<1x1x8x4xf32>
    %46 = vector.shape_cast %45 : vector<1x1x8x4xf32> to vector<1x8x4xf32>
    %c0_47 = arith.constant 0 : index
    %c1_48 = arith.constant 1 : index
    %c0_49 = arith.constant 0 : index
    %c0_50 = arith.constant 0 : index
    %47 = vector.load %arg2[%c0_47, %c1_48, %c0_49, %c0_50] : memref<1x8x9x4xf32, #tpu.memory_space<vmem>>, vector<1x7x8x4xf32>
    %48 = vector.shape_cast %47 : vector<1x7x8x4xf32> to vector<7x8x4xf32>
    %49 = tpu.concatenate %48, %46 in 0 : vector<7x8x4xf32>, vector<1x8x4xf32> -> vector<8x8x4xf32>
    %50 = vector.shape_cast %49 : vector<8x8x4xf32> to vector<64x4xf32>
    %c6 = arith.constant 6 : index
    %c0_51 = arith.constant 0 : index
    %c0_52 = arith.constant 0 : index
    %51 = vector.load %arg8[%c6, %c0_51, %c0_52] : memref<9x4x4xf32, #tpu.memory_space<vmem>>, vector<1x4x4xf32>
    %52 = vector.shape_cast %51 : vector<1x4x4xf32> to vector<4x4xf32>
    %cst_53 = arith.constant dense<0.000000e+00> : vector<64x4xf32>
    %53 = tpu.matmul %50, %52, %cst_53 {dimension_numbers = #tpu.dot_dimension_numbers<[1], [0], [0], [1], [0, 0, 1, 1], [], []>, precision = #tpu.contract_precision<fp32>} : vector<64x4xf32>, vector<4x4xf32>, vector<64x4xf32> -> vector<64x4xf32>
    %54 = arith.addf %44, %53 : vector<64x4xf32>
    %c0_54 = arith.constant 0 : index
    %c0_55 = arith.constant 0 : index
    %c0_56 = arith.constant 0 : index
    %c0_57 = arith.constant 0 : index
    %55 = vector.load %arg5[%c0_54, %c0_55, %c0_56, %c0_57] : memref<1x1x8x4xf32, #tpu.memory_space<vmem>>, vector<1x1x8x4xf32>
    %56 = vector.shape_cast %55 : vector<1x1x8x4xf32> to vector<1x8x4xf32>
    %c0_58 = arith.constant 0 : index
    %c1_59 = arith.constant 1 : index
    %c0_60 = arith.constant 0 : index
    %c0_61 = arith.constant 0 : index
    %57 = vector.load %arg4[%c0_58, %c1_59, %c0_60, %c0_61] : memref<1x8x8x4xf32, #tpu.memory_space<vmem>>, vector<1x7x8x4xf32>
    %58 = vector.shape_cast %57 : vector<1x7x8x4xf32> to vector<7x8x4xf32>
    %59 = tpu.concatenate %58, %56 in 0 : vector<7x8x4xf32>, vector<1x8x4xf32> -> vector<8x8x4xf32>
    %60 = vector.shape_cast %59 : vector<8x8x4xf32> to vector<64x4xf32>
    %c7 = arith.constant 7 : index
    %c0_62 = arith.constant 0 : index
    %c0_63 = arith.constant 0 : index
    %61 = vector.load %arg8[%c7, %c0_62, %c0_63] : memref<9x4x4xf32, #tpu.memory_space<vmem>>, vector<1x4x4xf32>
    %62 = vector.shape_cast %61 : vector<1x4x4xf32> to vector<4x4xf32>
    %cst_64 = arith.constant dense<0.000000e+00> : vector<64x4xf32>
    %63 = tpu.matmul %60, %62, %cst_64 {dimension_numbers = #tpu.dot_dimension_numbers<[1], [0], [0], [1], [0, 0, 1, 1], [], []>, precision = #tpu.contract_precision<fp32>} : vector<64x4xf32>, vector<4x4xf32>, vector<64x4xf32> -> vector<64x4xf32>
    %64 = arith.addf %54, %63 : vector<64x4xf32>
    %c0_65 = arith.constant 0 : index
    %c0_66 = arith.constant 0 : index
    %c1_67 = arith.constant 1 : index
    %c0_68 = arith.constant 0 : index
    %65 = vector.load %arg3[%c0_65, %c0_66, %c1_67, %c0_68] : memref<1x1x9x4xf32, #tpu.memory_space<vmem>>, vector<1x1x8x4xf32>
    %66 = vector.shape_cast %65 : vector<1x1x8x4xf32> to vector<1x8x4xf32>
    %c0_69 = arith.constant 0 : index
    %c1_70 = arith.constant 1 : index
    %c1_71 = arith.constant 1 : index
    %c0_72 = arith.constant 0 : index
    %67 = vector.load %arg2[%c0_69, %c1_70, %c1_71, %c0_72] : memref<1x8x9x4xf32, #tpu.memory_space<vmem>>, vector<1x7x8x4xf32>
    %68 = vector.shape_cast %67 : vector<1x7x8x4xf32> to vector<7x8x4xf32>
    %69 = tpu.concatenate %68, %66 in 0 : vector<7x8x4xf32>, vector<1x8x4xf32> -> vector<8x8x4xf32>
    %70 = vector.shape_cast %69 : vector<8x8x4xf32> to vector<64x4xf32>
    %c8 = arith.constant 8 : index
    %c0_73 = arith.constant 0 : index
    %c0_74 = arith.constant 0 : index
    %71 = vector.load %arg8[%c8, %c0_73, %c0_74] : memref<9x4x4xf32, #tpu.memory_space<vmem>>, vector<1x4x4xf32>
    %72 = vector.shape_cast %71 : vector<1x4x4xf32> to vector<4x4xf32>
    %cst_75 = arith.constant dense<0.000000e+00> : vector<64x4xf32>
    %73 = tpu.matmul %70, %72, %cst_75 {dimension_numbers = #tpu.dot_dimension_numbers<[1], [0], [0], [1], [0, 0, 1, 1], [], []>, precision = #tpu.contract_precision<fp32>} : vector<64x4xf32>, vector<4x4xf32>, vector<64x4xf32> -> vector<64x4xf32>
    %74 = arith.addf %64, %73 : vector<64x4xf32>
    %75 = vector.shape_cast %74 : vector<64x4xf32> to vector<8x8x4xf32>
    %c0_76 = arith.constant 0 : index
    %c0_77 = arith.constant 0 : index
    %c0_78 = arith.constant 0 : index
    %c0_79 = arith.constant 0 : index
    %76 = vector.load %arg10[%c0_76, %c0_77, %c0_78, %c0_79] : memref<1x8x8x4xf32, #tpu.memory_space<vmem>>, vector<1x8x8x4xf32>
    %77 = vector.shape_cast %76 : vector<1x8x8x4xf32> to vector<8x8x4xf32>
    %78 = vector.shape_cast %75 : vector<8x8x4xf32> to vector<1x8x8x4xf32>
    tpu.vector_store %arg10[%c0_76, %c0_77, %c0_78, %c0_79], %78 {strides = array<i32>} : memref<1x8x8x4xf32, #tpu.memory_space<vmem>>, vector<1x8x8x4xf32>,
    return
  }
  func.func @transform_0(%arg0: i32, %arg1: i32) -> (i32, i32, i32, i32) {
    %c0_i32 = arith.constant 0 : i32
    %c0_i32_0 = arith.constant 0 : i32
    %c0_i32_1 = arith.constant 0 : i32
    return %arg0, %arg1, %c0_i32, %c0_i32_0 : i32, i32, i32, i32
  }
  func.func @transform_1(%arg0: i32, %arg1: i32) -> (i32, i32, i32, i32) {
    %c1_i32 = arith.constant 1 : i32
    %0 = arith.addi %arg1, %c1_i32 : i32
    %c8_i32 = arith.constant 8 : i32
    %1 = arith.muli %0, %c8_i32 : i32
    %c0_i32 = arith.constant 0 : i32
    %c0_i32_0 = arith.constant 0 : i32
    %c0_i32_1 = arith.constant 0 : i32
    return %arg0, %1, %c0_i32, %c0_i32_0 : i32, i32, i32, i32
  }
  func.func @transform_2(%arg0: i32, %arg1: i32) -> (i32, i32, i32, i32) {
    %c0_i32 = arith.constant 0 : i32
    %c0_i32_0 = arith.constant 0 : i32
    %c0_i32_1 = arith.constant 0 : i32
    return %arg0, %arg1, %c0_i32, %c0_i32_0 : i32, i32, i32, i32
  }
  func.func @transform_3(%arg0: i32, %arg1: i32) -> (i32, i32, i32, i32) {
    %c1_i32 = arith.constant 1 : i32
    %0 = arith.addi %arg1, %c1_i32 : i32
    %c8_i32 = arith.constant 8 : i32
    %1 = arith.muli %0, %c8_i32 : i32
    %c0_i32 = arith.constant 0 : i32
    %c0_i32_0 = arith.constant 0 : i32
    %c0_i32_1 = arith.constant 0 : i32
    return %arg0, %1, %c0_i32, %c0_i32_0 : i32, i32, i32, i32
  }
  func.func @transform_4(%arg0: i32, %arg1: i32) -> (i32, i32, i32, i32) {
    %c0_i32 = arith.constant 0 : i32
    %c0_i32_0 = arith.constant 0 : i32
    %c0_i32_1 = arith.constant 0 : i32
    return %arg0, %arg1, %c0_i32, %c0_i32_0 : i32, i32, i32, i32
  }
  func.func @transform_5(%arg0: i32, %arg1: i32) -> (i32, i32, i32, i32) {
    %c0_i32 = arith.constant 0 : i32
    %c0_i32_0 = arith.constant 0 : i32
    %c0_i32_1 = arith.constant 0 : i32
    return %arg0, %arg1, %c0_i32, %c0_i32_0 : i32, i32, i32, i32
  }
  func.func @transform_6(%arg0: i32, %arg1: i32) -> (i32, i32, i32) {
    %c0_i32 = arith.constant 0 : i32
    %c0_i32_0 = arith.constant 0 : i32
    %c0_i32_1 = arith.constant 0 : i32
    %c0_i32_2 = arith.constant 0 : i32
    return %c0_i32, %c0_i32_0, %c0_i32_1 : i32, i32, i32
  }
  func.func @transform_7(%arg0: i32, %arg1: i32) -> (i32, i32) {
    %c0_i32 = arith.constant 0 : i32
    %c0_i32_0 = arith.constant 0 : i32
    %c0_i32_1 = arith.constant 0 : i32
    return %c0_i32, %c0_i32_0 : i32, i32
  }
  func.func @transform_8(%arg0: i32, %arg1: i32) -> (i32, i32, i32, i32) {
    %c0_i32 = arith.constant 0 : i32
    %c0_i32_0 = arith.constant 0 : i32
    %c0_i32_1 = arith.constant 0 : i32
    return %arg0, %arg1, %c0_i32, %c0_i32_0 : i32, i32, i32, i32
  }
}

</mosaic_0001>

<llo_original>
// kernel: downsample.1
$region0: #{downsample.1}
  #allocation0 [shape = 'u32[]', space=smem, size = 0x4, offset = 0x4, fixed_abs, tag = 'smem constant byte address 0x4 - core index']
  #allocation1 [shape = 'u32[72,128]{1,0:T(1,128)}', space=vmem, size = 0x9000, scoped, tag = 'internal scratch']
  %s0 = inlined_call_operand.vmem [shape: f32[2,9,9,4], index: 0, kind: input, shape index: {}, may-alias: {0,1}]
  %s1 = inlined_call_operand.vmem [shape: f32[2,9,9,4], index: 1, kind: input, shape index: {}, may-alias: {0,1}]
  %s2 = inlined_call_operand.vmem [shape: f32[2,9,8,4], index: 2, kind: input, shape index: {}, may-alias: {2,3}]
  %s3 = inlined_call_operand.vmem [shape: f32[2,9,8,4], index: 3, kind: input, shape index: {}, may-alias: {2,3}]
  %s4 = inlined_call_operand.vmem [shape: f32[2,8,9,4], index: 4, kind: input, shape index: {}]
  %s5 = inlined_call_operand.vmem [shape: f32[2,8,8,4], index: 5, kind: input, shape index: {}]
  %s6 = inlined_call_operand.vmem [shape: f32[9,4,4], index: 6, kind: input, shape index: {}]
  %s7 = inlined_call_operand.vmem [shape: f32[1,4], index: 7, kind: input, shape index: {}]
  %s8 = inlined_call_operand.vmem [shape: f32[2,8,8,4], index: 8, kind: output, shape index: {}]
  %s9 = sld [smem:[#allocation0]]
  $region65: #{downsample.1} parent=0
    _
  %s11 = ssub.s32 1, %s9
  %s12 = scalar_select 0, %s11, %s9
  loop: start=0, step=1, limit=4
  $region2: #{downsample.1} parent=0 // loop_pre_header
    _
  $region3: #{downsample.1} parent=0 // loop_header
    %s14 = sphi 0, %s18
    %p15 = scmp.ge.s32.totalorder %s14, 4
    %s21 = sphi 0, %s33
    %s22 = sphi 0, %s29
    %s23 = sphi 0, %s21
    %s24 = sphi 0, %s22
    %s25 = sphi 0, %s23
    %s26 = sphi 0, %s24
    %s38 = sphi 0, %s40
    %s41 = sphi 0, %s38
    %s42 = sphi 0, %s41
    %s58 = sphi 0, %s42
    %s70 = sphi 0, %s72
    %s73 = sphi 0, %s70
    %s74 = sphi 0, %s73
    %s90 = sphi 0, %s74
    %s98 = sphi 0, %s100
    %s101 = sphi 0, %s98
    %s102 = sphi 0, %s101
    %s118 = sphi 0, %s102
    %s130 = sphi 0, %s132
    %s133 = sphi 0, %s130
    %s134 = sphi 0, %s133
    %s150 = sphi 0, %s134
    %s158 = sphi 0, %s160
    %s161 = sphi 0, %s158
    %s162 = sphi 0, %s161
    %s178 = sphi 0, %s162
    %s186 = sphi 0, %s188
    %s189 = sphi 0, %s186
    %s190 = sphi 0, %s189
    %s206 = sphi 0, %s190
    %s210 = sphi 0, %s210
    %s212 = sphi 0, %s210
    %s213 = sphi 0, %s212
    %s227 = sphi 0, %s213
    %s231 = sphi 0, %s231
    %s233 = sphi 0, %s231
    %s234 = sphi 0, %s233
    %s248 = sphi 0, %s234
    %s256 = sphi 0, %s258
    %s259 = sphi 0, %s256
    %s260 = sphi 0, %s259
    %s276 = sphi 0, %s260
  $region4: #{downsample.1} parent=0 // loop_header_branch
    %17 = sbr.rel (%p15) target = $region8
  $region5: #{downsample.1} parent=0 // loop_body
    %s19 = ssub.s32 %s14, 1
    %s20 = ssub.s32 %s14, 2
    %s27 = sadd.s32 1, %s22
    %p28 = scmp.ge.s32.totalorder %s27, 1
    %s29 = scalar_select %p28, 0, %s27
    %s30 = sadd.s32 1, %s21
    %s31 = scalar_select %p28, %s30, %s21
    %p32 = scmp.ge.s32.totalorder %s31, 2
    %s33 = scalar_select %p32, 0, %s31
    %s34 = ssub.s32 %s21, %s33
    %s35 = ssub.s32 %s22, %s29
    %s36 = sor.u32 %s34, %s35
    %p37 = scmp.eq.s32.totalorder %s36, 0
    %s39 = sadd.s32 %s38, 1
    %s40 = scalar_select %p37, %s38, %s39
    %p43 = pneg %p37
    %p44 = scmp.eq.s32.totalorder %s14, 1
    %p45 = por %p43, %p44
    %p46 = scmp.ne.s32.totalorder %s38, %s41
    %p47 = scmp.eq.s32.totalorder %s14, 0
    %p48 = por %p46, %p47
    %p49 = scmp.ne.s32.totalorder %s38, %s41
    %p50 = scmp.eq.s32.totalorder %s19, 1
    %p51 = por %p49, %p50
    %p52 = scmp.ne.s32.totalorder %s41, %s42
    %p53 = scmp.eq.s32.totalorder %s19, 0
    %p54 = por %p52, %p53
    %p55 = scmp.ne.s32.totalorder %s41, %s42
    %p56 = scmp.eq.s32.totalorder %s20, 1
    %p57 = por %p55, %p56
    %p59 = scmp.ne.s32.totalorder %s42, %s58
    %p60 = scmp.eq.s32.totalorder %s20, 0
    %p61 = por %p59, %p60
    %s62 = sadd.s32 %s22, 1
    %s63 = smul.u32 %s62, 8
    %s64 = sadd.s32 %s29, 1
    %s65 = smul.u32 %s64, 8
    %s66 = ssub.s32 %s21, %s33
    %s67 = ssub.s32 %s63, %s65
    %s68 = sor.u32 %s66, %s67
    %p69 = scmp.eq.s32.totalorder %s68, 0
    %s71 = sadd.s32 %s70, 1
    %s72 = scalar_select %p69, %s70, %s71
    %p75 = pneg %p69
    %p76 = scmp.eq.s32.totalorder %s14, 1
    %p77 = por %p75, %p76
    %p78 = scmp.ne.s32.totalorder %s70, %s73
    %p79 = scmp.eq.s32.totalorder %s14, 0
    %p80 = por %p78, %p79
    %p81 = scmp.ne.s32.totalorder %s70, %s73
    %p82 = scmp.eq.s32.totalorder %s19, 1
    %p83 = por %p81, %p82
    %p84 = scmp.ne.s32.totalorder %s73, %s74
    %p85 = scmp.eq.s32.totalorder %s19, 0
    %p86 = por %p84, %p85
    %p87 = scmp.ne.s32.totalorder %s73, %s74
    %p88 = scmp.eq.s32.totalorder %s20, 1
    %p89 = por %p87, %p88
    %p91 = scmp.ne.s32.totalorder %s74, %s90
    %p92 = scmp.eq.s32.totalorder %s20, 0
    %p93 = por %p91, %p92
    %s94 = ssub.s32 %s21, %s33
    %s95 = ssub.s32 %s22, %s29
    %s96 = sor.u32 %s94, %s95
    %p97 = scmp.eq.s32.totalorder %s96, 0
    %s99 = sadd.s32 %s98, 1
    %s100 = scalar_select %p97, %s98, %s99
    %p103 = pneg %p97
    %p104 = scmp.eq.s32.totalorder %s14, 1
    %p105 = por %p103, %p104
    %p106 = scmp.ne.s32.totalorder %s98, %s101
    %p107 = scmp.eq.s32.totalorder %s14, 0
    %p108 = por %p106, %p107
    %p109 = scmp.ne.s32.totalorder %s98, %s101
    %p110 = scmp.eq.s32.totalorder %s19, 1
    %p111 = por %p109, %p110
    %p112 = scmp.ne.s32.totalorder %s101, %s102
    %p113 = scmp.eq.s32.totalorder %s19, 0
    %p114 = por %p112, %p113
    %p115 = scmp.ne.s32.totalorder %s101, %s102
    %p116 = scmp.eq.s32.totalorder %s20, 1
    %p117 = por %p115, %p116
    %p119 = scmp.ne.s32.totalorder %s102, %s118
    %p120 = scmp.eq.s32.totalorder %s20, 0
    %p121 = por %p119, %p120
    %s122 = sadd.s32 %s22, 1
    %s123 = smul.u32 %s122, 8
    %s124 = sadd.s32 %s29, 1
    %s125 = smul.u32 %s124, 8
    %s126 = ssub.s32 %s21, %s33
    %s127 = ssub.s32 %s123, %s125
    %s128 = sor.u32 %s126, %s127
    %p129 = scmp.eq.s32.totalorder %s128, 0
    %s131 = sadd.s32 %s130, 1
    %s132 = scalar_select %p129, %s130, %s131
    %p135 = pneg %p129
    %p136 = scmp.eq.s32.totalorder %s14, 1
    %p137 = por %p135, %p136
    %p138 = scmp.ne.s32.totalorder %s130, %s133
    %p139 = scmp.eq.s32.totalorder %s14, 0
    %p140 = por %p138, %p139
    %p141 = scmp.ne.s32.totalorder %s130, %s133
    %p142 = scmp.eq.s32.totalorder %s19, 1
    %p143 = por %p141, %p142
    %p144 = scmp.ne.s32.totalorder %s133, %s134
    %p145 = scmp.eq.s32.totalorder %s19, 0
    %p146 = por %p144, %p145
    %p147 = scmp.ne.s32.totalorder %s133, %s134
    %p148 = scmp.eq.s32.totalorder %s20, 1
    %p149 = por %p147, %p148
    %p151 = scmp.ne.s32.totalorder %s134, %s150
    %p152 = scmp.eq.s32.totalorder %s20, 0
    %p153 = por %p151, %p152
    %s154 = ssub.s32 %s21, %s33
    %s155 = ssub.s32 %s22, %s29
    %s156 = sor.u32 %s154, %s155
    %p157 = scmp.eq.s32.totalorder %s156, 0
    %s159 = sadd.s32 %s158, 1
    %s160 = scalar_select %p157, %s158, %s159
    %p163 = pneg %p157
    %p164 = scmp.eq.s32.totalorder %s14, 1
    %p165 = por %p163, %p164
    %p166 = scmp.ne.s32.totalorder %s158, %s161
    %p167 = scmp.eq.s32.totalorder %s14, 0
    %p168 = por %p166, %p167
    %p169 = scmp.ne.s32.totalorder %s158, %s161
    %p170 = scmp.eq.s32.totalorder %s19, 1
    %p171 = por %p169, %p170
    %p172 = scmp.ne.s32.totalorder %s161, %s162
    %p173 = scmp.eq.s32.totalorder %s19, 0
    %p174 = por %p172, %p173
    %p175 = scmp.ne.s32.totalorder %s161, %s162
    %p176 = scmp.eq.s32.totalorder %s20, 1
    %p177 = por %p175, %p176
    %p179 = scmp.ne.s32.totalorder %s162, %s178
    %p180 = scmp.eq.s32.totalorder %s20, 0
    %p181 = por %p179, %p180
    %s182 = ssub.s32 %s21, %s33
    %s183 = ssub.s32 %s22, %s29
    %s184 = sor.u32 %s182, %s183
    %p185 = scmp.eq.s32.totalorder %s184, 0
    %s187 = sadd.s32 %s186, 1
    %s188 = scalar_select %p185, %s186, %s187
    %p191 = pneg %p185
    %p192 = scmp.eq.s32.totalorder %s14, 1
    %p193 = por %p191, %p192
    %p194 = scmp.ne.s32.totalorder %s186, %s189
    %p195 = scmp.eq.s32.totalorder %s14, 0
    %p196 = por %p194, %p195
    %p197 = scmp.ne.s32.totalorder %s186, %s189
    %p198 = scmp.eq.s32.totalorder %s19, 1
    %p199 = por %p197, %p198
    %p200 = scmp.ne.s32.totalorder %s189, %s190
    %p201 = scmp.eq.s32.totalorder %s19, 0
    %p202 = por %p200, %p201
    %p203 = scmp.ne.s32.totalorder %s189, %s190
    %p204 = scmp.eq.s32.totalorder %s20, 1
    %p205 = por %p203, %p204
    %p207 = scmp.ne.s32.totalorder %s190, %s206
    %p208 = scmp.eq.s32.totalorder %s20, 0
    %p209 = por %p207, %p208
    %s211 = sadd.s32 %s210, 1
    %p214 = scmp.eq.s32.totalorder %s14, 1
    %p215 = scmp.ne.s32.totalorder %s210, %s212
    %p216 = scmp.eq.s32.totalorder %s14, 0
    %p217 = por %p215, %p216
    %p218 = scmp.ne.s32.totalorder %s210, %s212
    %p219 = scmp.eq.s32.totalorder %s19, 1
    %p220 = por %p218, %p219
    %p221 = scmp.ne.s32.totalorder %s212, %s213
    %p222 = scmp.eq.s32.totalorder %s19, 0
    %p223 = por %p221, %p222
    %p224 = scmp.ne.s32.totalorder %s212, %s213
    %p225 = scmp.eq.s32.totalorder %s20, 1
    %p226 = por %p224, %p225
    %p228 = scmp.ne.s32.totalorder %s213, %s227
    %p229 = scmp.eq.s32.totalorder %s20, 0
    %p230 = por %p228, %p229
    %s232 = sadd.s32 %s231, 1
    %p235 = scmp.eq.s32.totalorder %s14, 1
    %p236 = scmp.ne.s32.totalorder %s231, %s233
    %p237 = scmp.eq.s32.totalorder %s14, 0
    %p238 = por %p236, %p237
    %p239 = scmp.ne.s32.totalorder %s231, %s233
    %p240 = scmp.eq.s32.totalorder %s19, 1
    %p241 = por %p239, %p240
    %p242 = scmp.ne.s32.totalorder %s233, %s234
    %p243 = scmp.eq.s32.totalorder %s19, 0
    %p244 = por %p242, %p243
    %p245 = scmp.ne.s32.totalorder %s233, %s234
    %p246 = scmp.eq.s32.totalorder %s20, 1
    %p247 = por %p245, %p246
    %p249 = scmp.ne.s32.totalorder %s234, %s248
    %p250 = scmp.eq.s32.totalorder %s20, 0
    %p251 = por %p249, %p250
    %s252 = ssub.s32 %s21, %s33
    %s253 = ssub.s32 %s22, %s29
    %s254 = sor.u32 %s252, %s253
    %p255 = scmp.eq.s32.totalorder %s254, 0
    %s257 = sadd.s32 %s256, 1
    %s258 = scalar_select %p255, %s256, %s257
    %p261 = pneg %p255
    %p262 = scmp.eq.s32.totalorder %s14, 1
    %p263 = por %p261, %p262
    %p264 = scmp.ne.s32.totalorder %s256, %s259
    %p265 = scmp.eq.s32.totalorder %s14, 0
    %p266 = por %p264, %p265
    %p267 = scmp.ne.s32.totalorder %s256, %s259
    %p268 = scmp.eq.s32.totalorder %s19, 1
    %p269 = por %p267, %p268
    %p270 = scmp.ne.s32.totalorder %s259, %s260
    %p271 = scmp.eq.s32.totalorder %s19, 0
    %p272 = por %p270, %p271
    %p273 = scmp.ne.s32.totalorder %s259, %s260
    %p274 = scmp.eq.s32.totalorder %s20, 1
    %p275 = por %p273, %p274
    %p277 = scmp.ne.s32.totalorder %s260, %s276
    %p278 = scmp.eq.s32.totalorder %s20, 0
    %p279 = por %p277, %p278
    %p280 = scmp.le.s32.totalorder 1, %s14
    %p281 = scmp.lt.s32.totalorder %s14, 3
    %p282 = pnand %p280, %p281
    %p283 = pneg %p282
    // Predicated region
    $region9: #{downsample.1} parent=5 // pred_check
      _
    $region10: #{downsample.1} parent=5 // pred_check_branch
      %285 = sbr.rel (%p282) target = $region12
    $region11: #{downsample.1} parent=5 // pred_region
      %s286 = ssub.s32 %s14, 1
      // Predicated region
      $region13: #{downsample.1} parent=11 // pred_check
        %p287 = pneg %p223
      $region14: #{downsample.1} parent=11 // pred_check_branch
        %289 = sbr.rel (%p287) target = $region16
      $region15: #{downsample.1} parent=11 // pred_region
        _
      $region16: #{downsample.1} parent=11 // pred_fallthru
        _
      // Predicated region
      $region17: #{downsample.1} parent=11 // pred_check
        %p290 = pneg %p244
      $region18: #{downsample.1} parent=11 // pred_check_branch
        %292 = sbr.rel (%p290) target = $region20
      $region19: #{downsample.1} parent=11 // pred_region
        _
      $region20: #{downsample.1} parent=11 // pred_fallthru
        _
    $region12: #{downsample.1} parent=5 // pred_fallthru
      _
    %p293 = scmp.lt.s32.totalorder %s14, 2
    // Predicated region
    $region21: #{downsample.1} parent=5 // pred_check
      %p294 = pneg %p293
    $region22: #{downsample.1} parent=5 // pred_check_branch
      %296 = sbr.rel (%p294) target = $region24
    $region23: #{downsample.1} parent=5 // pred_region
      // Predicated region
      $region25: #{downsample.1} parent=23 // pred_check
        %p297 = pneg %p48
      $region26: #{downsample.1} parent=23 // pred_check_branch
        %299 = sbr.rel (%p297) target = $region28
      $region27: #{downsample.1} parent=23 // pred_region
        %s300 = smul.u32 8, %s22
        %s301 = ssub.s32 9, %s300
        %p302 = scmp.lt.s32.totalorder %s301, 8
        %s303 = scalar_select %p302, %s301, 8
        %s304 = smul.u32 8, %s303
        %s305 = smul.u32 %s304, 2
        %p306 = scmp.lt.s32.totalorder %s21, 1
        %s307 = scalar_select %p306, %s21, 1
        %p308 = scmp.lt.s32.totalorder %s300, 8
        %s309 = scalar_select %p308, %s300, 8
        %s310 = smul.addr %s309, 2
        %s311 = smul.addr %s307, 18
        %s312 = sadd.s32 %s310, %s311
        %s313 = smul.addr %s312, 8
        %s314 = scalar_lea.vmem %s0, %s313
        %s315 = smul.u32 8, %s22
        %s316 = ssub.s32 9, %s315
        %p317 = scmp.lt.s32.totalorder %s316, 8
        %s318 = scalar_select %p317, %s316, 8
        %s319 = smul.u32 8, %s318
        %s320 = smul.u32 %s319, 2
      $region28: #{downsample.1} parent=23 // pred_fallthru
        _
      // Predicated region
      $region29: #{downsample.1} parent=23 // pred_check
        %p321 = pneg %p80
      $region30: #{downsample.1} parent=23 // pred_check_branch
        %323 = sbr.rel (%p321) target = $region32
      $region31: #{downsample.1} parent=23 // pred_region
        %s324 = sadd.s32 %s22, 1
        %s325 = smul.u32 %s324, 8
        %p326 = scmp.lt.s32.totalorder %s21, 1
        %s327 = scalar_select %p326, %s21, 1
        %p328 = scmp.lt.s32.totalorder %s325, 8
        %s329 = scalar_select %p328, %s325, 8
        %s330 = smul.addr %s329, 2
        %s331 = smul.addr %s327, 18
        %s332 = sadd.s32 %s330, %s331
        %s333 = smul.addr %s332, 8
        %s334 = scalar_lea.vmem %s1, %s333
        %s335 = sadd.s32 %s22, 1
        %s336 = smul.u32 %s335, 8
      $region32: #{downsample.1} parent=23 // pred_fallthru
        _
      // Predicated region
      $region33: #{downsample.1} parent=23 // pred_check
        %p337 = pneg %p108
      $region34: #{downsample.1} parent=23 // pred_check_branch
        %339 = sbr.rel (%p337) target = $region36
      $region35: #{downsample.1} parent=23 // pred_region
        %s340 = smul.u32 8, %s22
        %s341 = ssub.s32 9, %s340
        %p342 = scmp.lt.s32.totalorder %s341, 8
        %s343 = scalar_select %p342, %s341, 8
        %s344 = smul.u32 8, %s343
        %p345 = scmp.lt.s32.totalorder %s21, 1
        %s346 = scalar_select %p345, %s21, 1
        %p347 = scmp.lt.s32.totalorder %s340, 8
        %s348 = scalar_select %p347, %s340, 8
        %s349 = smul.addr %s346, 9
        %s350 = sadd.s32 %s348, %s349
        %s351 = smul.addr %s350, 8
        %s352 = scalar_lea.vmem %s2, %s351
        %s353 = smul.u32 8, %s22
        %s354 = ssub.s32 9, %s353
        %p355 = scmp.lt.s32.totalorder %s354, 8
        %s356 = scalar_select %p355, %s354, 8
        %s357 = smul.u32 8, %s356
      $region36: #{downsample.1} parent=23 // pred_fallthru
        _
      // Predicated region
      $region37: #{downsample.1} parent=23 // pred_check
        %p358 = pneg %p140
      $region38: #{downsample.1} parent=23 // pred_check_branch
        %360 = sbr.rel (%p358) target = $region40
      $region39: #{downsample.1} parent=23 // pred_region
        %s361 = sadd.s32 %s22, 1
        %s362 = smul.u32 %s361, 8
        %p363 = scmp.lt.s32.totalorder %s21, 1
        %s364 = scalar_select %p363, %s21, 1
        %p365 = scmp.lt.s32.totalorder %s362, 8
        %s366 = scalar_select %p365, %s362, 8
        %s367 = smul.addr %s364, 9
        %s368 = sadd.s32 %s366, %s367
        %s369 = smul.addr %s368, 8
        %s370 = scalar_lea.vmem %s3, %s369
        %s371 = sadd.s32 %s22, 1
        %s372 = smul.u32 %s371, 8
      $region40: #{downsample.1} parent=23 // pred_fallthru
        _
      // Predicated region
      $region41: #{downsample.1} parent=23 // pred_check
        %p373 = pneg %p168
      $region42: #{downsample.1} parent=23 // pred_check_branch
        %375 = sbr.rel (%p373) target = $region44
      $region43: #{downsample.1} parent=23 // pred_region
        %s376 = smul.u32 8, %s22
        %p377 = scmp.lt.s32.totalorder %s21, 1
        %s378 = scalar_select %p377, %s21, 1
        %p379 = scmp.lt.s32.totalorder %s376, 7
        %s380 = scalar_select %p379, %s376, 7
        %s381 = smul.addr %s380, 2
        %s382 = smul.addr %s378, 16
        %s383 = sadd.s32 %s381, %s382
        %s384 = smul.addr %s383, 8
        %s385 = scalar_lea.vmem %s4, %s384
        %s386 = smul.u32 8, %s22
      $region44: #{downsample.1} parent=23 // pred_fallthru
        _
      // Predicated region
      $region45: #{downsample.1} parent=23 // pred_check
        %p387 = pneg %p196
      $region46: #{downsample.1} parent=23 // pred_check_branch
        %389 = sbr.rel (%p387) target = $region48
      $region47: #{downsample.1} parent=23 // pred_region
        %s390 = smul.u32 8, %s22
        %p391 = scmp.lt.s32.totalorder %s21, 1
        %s392 = scalar_select %p391, %s21, 1
        %p393 = scmp.lt.s32.totalorder %s390, 7
        %s394 = scalar_select %p393, %s390, 7
        %s395 = smul.addr %s392, 8
        %s396 = sadd.s32 %s394, %s395
        %s397 = smul.addr %s396, 8
        %s398 = scalar_lea.vmem %s5, %s397
        %s399 = smul.u32 8, %s22
      $region48: #{downsample.1} parent=23 // pred_fallthru
        _
    $region24: #{downsample.1} parent=5 // pred_fallthru
      _
    %p400 = scmp.le.s32.totalorder 1, %s14
    %p401 = scmp.lt.s32.totalorder %s14, 3
    %p402 = pnand %p400, %p401
    %p403 = pneg %p402
    // Predicated region
    $region49: #{downsample.1} parent=5 // pred_check
      _
    $region50: #{downsample.1} parent=5 // pred_check_branch
      %405 = sbr.rel (%p402) target = $region52
    $region51: #{downsample.1} parent=5 // pred_region
      %s406 = ssub.s32 %s14, 1
      %s407 = smul.u32 8, %s24
      %s408 = ssub.s32 9, %s407
      %p409 = scmp.lt.s32.totalorder %s408, 8
      %s410 = scalar_select %p409, %s408, 8
      %s411 = smul.u32 8, %s410
      %s412 = smul.u32 %s411, 2
      %p413 = scmp.lt.s32.totalorder %s23, 1
      %s414 = scalar_select %p413, %s23, 1
      %p415 = scmp.lt.s32.totalorder %s407, 8
      %s416 = scalar_select %p415, %s407, 8
      %s417 = smul.addr %s416, 2
      %s418 = smul.addr %s414, 18
      %s419 = sadd.s32 %s417, %s418
      %s420 = smul.addr %s419, 8
      %s421 = scalar_lea.vmem %s0, %s420
      %p422 = pneg %p54
      %p423 = pneg %p51
      %s424 = sadd.s32 %s24, 1
      %s425 = smul.u32 %s424, 8
      %p426 = scmp.lt.s32.totalorder %s23, 1
      %s427 = scalar_select %p426, %s23, 1
      %p428 = scmp.lt.s32.totalorder %s425, 8
      %s429 = scalar_select %p428, %s425, 8
      %s430 = smul.addr %s429, 2
      %s431 = smul.addr %s427, 18
      %s432 = sadd.s32 %s430, %s431
      %s433 = smul.addr %s432, 8
      %s434 = scalar_lea.vmem %s1, %s433
      %p435 = pneg %p86
      %p436 = pneg %p83
      %s437 = smul.u32 8, %s24
      %s438 = ssub.s32 9, %s437
      %p439 = scmp.lt.s32.totalorder %s438, 8
      %s440 = scalar_select %p439, %s438, 8
      %s441 = smul.u32 8, %s440
      %p442 = scmp.lt.s32.totalorder %s23, 1
      %s443 = scalar_select %p442, %s23, 1
      %p444 = scmp.lt.s32.totalorder %s437, 8
      %s445 = scalar_select %p444, %s437, 8
      %s446 = smul.addr %s443, 9
      %s447 = sadd.s32 %s445, %s446
      %s448 = smul.addr %s447, 8
      %s449 = scalar_lea.vmem %s2, %s448
      %p450 = pneg %p114
      %p451 = pneg %p111
      %s452 = sadd.s32 %s24, 1
      %s453 = smul.u32 %s452, 8
      %p454 = scmp.lt.s32.totalorder %s23, 1
      %s455 = scalar_select %p454, %s23, 1
      %p456 = scmp.lt.s32.totalorder %s453, 8
      %s457 = scalar_select %p456, %s453, 8
      %s458 = smul.addr %s455, 9
      %s459 = sadd.s32 %s457, %s458
      %s460 = smul.addr %s459, 8
      %s461 = scalar_lea.vmem %s3, %s460
      %p462 = pneg %p146
      %p463 = pneg %p143
      %s464 = smul.u32 8, %s24
      %p465 = scmp.lt.s32.totalorder %s23, 1
      %s466 = scalar_select %p465, %s23, 1
      %p467 = scmp.lt.s32.totalorder %s464, 7
      %s468 = scalar_select %p467, %s464, 7
      %s469 = smul.addr %s468, 2
      %s470 = smul.addr %s466, 16
      %s471 = sadd.s32 %s469, %s470
      %s472 = smul.addr %s471, 8
      %s473 = scalar_lea.vmem %s4, %s472
      %p474 = pneg %p174
      %p475 = pneg %p171
      %s476 = smul.u32 8, %s24
      %p477 = scmp.lt.s32.totalorder %s23, 1
      %s478 = scalar_select %p477, %s23, 1
      %p479 = scmp.lt.s32.totalorder %s476, 7
      %s480 = scalar_select %p479, %s476, 7
      %s481 = smul.addr %s478, 8
      %s482 = sadd.s32 %s480, %s481
      %s483 = smul.addr %s482, 8
      %s484 = scalar_lea.vmem %s5, %s483
      %p485 = pneg %p202
      %p486 = pneg %p199
      %p487 = pneg %p223
      %p488 = pneg %p220
      %p489 = pneg %p244
      %p490 = pneg %p241
      %p491 = pneg %p272
      %p492 = pneg %p269
      %s493 = smul.u32 8, %s24
      %p494 = scmp.lt.s32.totalorder %s23, 1
      %s495 = scalar_select %p494, %s23, 1
      %p496 = scmp.lt.s32.totalorder %s493, 7
      %s497 = scalar_select %p496, %s493, 7
      %s498 = smul.addr %s495, 8
      %s499 = sadd.s32 %s497, %s498
      %s500 = smul.addr %s499, 8
      %s501 = scalar_lea.vmem %s8, %s500
      %s502 = smul.u32 8, %s24
      %s503 = ssub.s32 9, %s502
      %p504 = scmp.lt.s32.totalorder %s503, 8
      %s505 = scalar_select %p504, %s503, 8
      %s506 = smul.u32 8, %s505
      %s507 = smul.u32 %s506, 2
      %p508 = scmp.lt.s32.totalorder %s23, 1
      %s509 = scalar_select %p508, %s23, 1
      %p510 = scmp.lt.s32.totalorder %s502, 8
      %s511 = scalar_select %p510, %s502, 8
      %s512 = smul.addr %s511, 2
      %s513 = smul.addr %s509, 18
      %s514 = sadd.s32 %s512, %s513
      %s515 = smul.addr %s514, 8
      %s516 = scalar_lea.vmem %s0, %s515
      %s517 = smul.u32 8, %s24
      %s518 = ssub.s32 9, %s517
      %p519 = scmp.lt.s32.totalorder %s518, 8
      %s520 = scalar_select %p519, %s518, 8
      %s521 = smul.u32 8, %s520
      %s522 = smul.u32 %s521, 2
      %s523 = sadd.s32 %s24, 1
      %s524 = smul.u32 %s523, 8
      %p525 = scmp.lt.s32.totalorder %s23, 1
      %s526 = scalar_select %p525, %s23, 1
      %p527 = scmp.lt.s32.totalorder %s524, 8
      %s528 = scalar_select %p527, %s524, 8
      %s529 = smul.addr %s528, 2
      %s530 = smul.addr %s526, 18
      %s531 = sadd.s32 %s529, %s530
      %s532 = smul.addr %s531, 8
      %s533 = scalar_lea.vmem %s1, %s532
      %s534 = sadd.s32 %s24, 1
      %s535 = smul.u32 %s534, 8
      %s536 = smul.u32 8, %s24
      %s537 = ssub.s32 9, %s536
      %p538 = scmp.lt.s32.totalorder %s537, 8
      %s539 = scalar_select %p538, %s537, 8
      %s540 = smul.u32 8, %s539
      %p541 = scmp.lt.s32.totalorder %s23, 1
      %s542 = scalar_select %p541, %s23, 1
      %p543 = scmp.lt.s32.totalorder %s536, 8
      %s544 = scalar_select %p543, %s536, 8
      %s545 = smul.addr %s542, 9
      %s546 = sadd.s32 %s544, %s545
      %s547 = smul.addr %s546, 8
      %s548 = scalar_lea.vmem %s2, %s547
      %s549 = smul.u32 8, %s24
      %s550 = ssub.s32 9, %s549
      %p551 = scmp.lt.s32.totalorder %s550, 8
      %s552 = scalar_select %p551, %s550, 8
      %s553 = smul.u32 8, %s552
      %s554 = sadd.s32 %s24, 1
      %s555 = smul.u32 %s554, 8
      %p556 = scmp.lt.s32.totalorder %s23, 1
      %s557 = scalar_select %p556, %s23, 1
      %p558 = scmp.lt.s32.totalorder %s555, 8
      %s559 = scalar_select %p558, %s555, 8
      %s560 = smul.addr %s557, 9
      %s561 = sadd.s32 %s559, %s560
      %s562 = smul.addr %s561, 8
      %s563 = scalar_lea.vmem %s3, %s562
      %s564 = sadd.s32 %s24, 1
      %s565 = smul.u32 %s564, 8
      %s566 = smul.u32 8, %s24
      %p567 = scmp.lt.s32.totalorder %s23, 1
      %s568 = scalar_select %p567, %s23, 1
      %p569 = scmp.lt.s32.totalorder %s566, 7
      %s570 = scalar_select %p569, %s566, 7
      %s571 = smul.addr %s570, 2
      %s572 = smul.addr %s568, 16
      %s573 = sadd.s32 %s571, %s572
      %s574 = smul.addr %s573, 8
      %s575 = scalar_lea.vmem %s4, %s574
      %s576 = smul.u32 8, %s24
      %s577 = smul.u32 8, %s24
      %p578 = scmp.lt.s32.totalorder %s23, 1
      %s579 = scalar_select %p578, %s23, 1
      %p580 = scmp.lt.s32.totalorder %s577, 7
      %s581 = scalar_select %p580, %s577, 7
      %s582 = smul.addr %s579, 8
      %s583 = sadd.s32 %s581, %s582
      %s584 = smul.addr %s583, 8
      %s585 = scalar_lea.vmem %s5, %s584
      %s586 = smul.u32 8, %s24
      %s587 = smul.u32 8, %s24
      %p588 = scmp.lt.s32.totalorder %s23, 1
      %s589 = scalar_select %p588, %s23, 1
      %p590 = scmp.lt.s32.totalorder %s587, 7
      %s591 = scalar_select %p590, %s587, 7
      %s592 = smul.addr %s589, 8
      %s593 = sadd.s32 %s591, %s592
      %s594 = smul.addr %s593, 8
      %s595 = scalar_lea.vmem %s8, %s594
      %s596 = smul.u32 8, %s24
      %v597 = vld [vmem:[%s7] sm:$0x1]
      %v599 = vperm.slane %v597, 0
      %v601 = vld [vmem:[%s516] sm:$0xff]
      %v602 = vld [vmem:[%s516 + $0x10] sm:$0xff]
      %v603 = vld [vmem:[%s516 + $0x20] sm:$0xff]
      %v604 = vld [vmem:[%s516 + $0x30] sm:$0xff]
      %v605 = vld [vmem:[%s516 + $0x40] sm:$0xff]
      %v606 = vld [vmem:[%s516 + $0x50] sm:$0xff]
      %v607 = vld [vmem:[%s516 + $0x60] sm:$0xff]
      %v608 = vld [vmem:[%s516 + $0x70] sm:$0xff]
      %v609 = vld [vmem:[%s6] sm:$0xf]
      %vm610 = vcmask 31744
      %v612 = vsel %vm610, %v601, 0
      %v615 = vsel %vm610, %v602, 0
      %v618 = vsel %vm610, %v603, 0
      %v621 = vsel %vm610, %v604, 0
      %v624 = vsel %vm610, %v605, 0
      %v627 = vsel %vm610, %v606, 0
      %v630 = vsel %vm610, %v607, 0
      %v633 = vsel %vm610, %v608, 0
      %vm635 = vcmask 1043456
      %v637 = vsel %vm635, %v609, 0
      %639 = vmatpush.msra.mxu0 0.0
      %640 = vmatpush.msra.mxu0 0.0
      %641 = vmatpush.msra.mxu0 0.0
      %642 = vmatpush.msra.mxu0 0.0
      %643 = vmatpush.msra.mxu0 0.0
      %644 = vmatpush.msra.mxu0 0.0
      %645 = vmatpush.msra.mxu0 0.0
      %646 = vmatpush.msra.mxu0 0.0
      %647 = vmatpush.msra.mxu0 0.0
      %648 = vmatpush.msra.mxu0 0.0
      %649 = vmatpush.msra.mxu0 0.0
      %650 = vmatpush.msra.mxu0 0.0
      %651 = vmatpush.msra.mxu0 0.0
      %652 = vmatpush.msra.mxu0 0.0
      %653 = vmatpush.msra.mxu0 0.0
      %v654 = vand.u32 %v637, 4294901760
      %655 = vmatpush.msra.mxu0 %v654
      %v656 = vand.u32 %v612, 4294901760
      %v657 = vsub.f32 %v612, %v656
      %v658 = vand.u32 %v657, 4294901760
      %v659 = vsub.f32 %v657, %v658
      %v660 = vand.u32 %v659, 4294901760
      %661 = vmatmul.f32.gmra.mxu0 %v660
      %v662 = vpop.f32.mrf.mxu0
      %v663 = vadd.f32 0.0, %v662
      %v664 = vand.u32 %v615, 4294901760
      %v665 = vsub.f32 %v615, %v664
      %v666 = vand.u32 %v665, 4294901760
      %v667 = vsub.f32 %v665, %v666
      %v668 = vand.u32 %v667, 4294901760
      %669 = vmatmul.f32.gmra.mxu0 %v668
      %v670 = vpop.f32.mrf.mxu0
      %v671 = vadd.f32 0.0, %v670
      %v672 = vand.u32 %v618, 4294901760
      %v673 = vsub.f32 %v618, %v672
      %v674 = vand.u32 %v673, 4294901760
      %v675 = vsub.f32 %v673, %v674
      %v676 = vand.u32 %v675, 4294901760
      %677 = vmatmul.f32.gmra.mxu0 %v676
      %v678 = vpop.f32.mrf.mxu0
      %v679 = vadd.f32 0.0, %v678
      %v680 = vand.u32 %v621, 4294901760
      %v681 = vsub.f32 %v621, %v680
      %v682 = vand.u32 %v681, 4294901760
      %v683 = vsub.f32 %v681, %v682
      %v684 = vand.u32 %v683, 4294901760
      %685 = vmatmul.f32.gmra.mxu0 %v684
      %v686 = vpop.f32.mrf.mxu0
      %v687 = vadd.f32 0.0, %v686
      %v688 = vand.u32 %v624, 4294901760
      %v689 = vsub.f32 %v624, %v688
      %v690 = vand.u32 %v689, 4294901760
      %v691 = vsub.f32 %v689, %v690
      %v692 = vand.u32 %v691, 4294901760
      %693 = vmatmul.f32.gmra.mxu0 %v692
      %v694 = vpop.f32.mrf.mxu0
      %v695 = vadd.f32 0.0, %v694
      %v696 = vand.u32 %v627, 4294901760
      %v697 = vsub.f32 %v627, %v696
      %v698 = vand.u32 %v697, 4294901760
      %v699 = vsub.f32 %v697, %v698
      %v700 = vand.u32 %v699, 4294901760
      %701 = vmatmul.f32.gmra.mxu0 %v700
      %v702 = vpop.f32.mrf.mxu0
      %v703 = vadd.f32 0.0, %v702
      %v704 = vand.u32 %v630, 4294901760
      %v705 = vsub.f32 %v630, %v704
      %v706 = vand.u32 %v705, 4294901760
      %v707 = vsub.f32 %v705, %v706
      %v708 = vand.u32 %v707, 4294901760
      %709 = vmatmul.f32.gmra.mxu0 %v708
      %v710 = vpop.f32.mrf.mxu0
      %v711 = vadd.f32 0.0, %v710
      %v712 = vand.u32 %v633, 4294901760
      %v713 = vsub.f32 %v633, %v712
      %v714 = vand.u32 %v713, 4294901760
      %v715 = vsub.f32 %v713, %v714
      %v716 = vand.u32 %v715, 4294901760
      %717 = vmatmul.f32.gmra.mxu0 %v716
      %v718 = vpop.f32.mrf.mxu0
      %v719 = vadd.f32 0.0, %v718
      %720 = vdwg.mxu0
      %721 = vmatpush.msra.mxu0 0.0
      %722 = vmatpush.msra.mxu0 0.0
      %723 = vmatpush.msra.mxu0 0.0
      %724 = vmatpush.msra.mxu0 0.0
      %725 = vmatpush.msra.mxu0 0.0
      %726 = vmatpush.msra.mxu0 0.0
      %727 = vmatpush.msra.mxu0 0.0
      %728 = vmatpush.msra.mxu0 0.0
      %729 = vmatpush.msra.mxu0 0.0
      %730 = vmatpush.msra.mxu0 0.0
      %731 = vmatpush.msra.mxu0 0.0
      %732 = vmatpush.msra.mxu0 0.0
      %733 = vmatpush.msra.mxu0 0.0
      %734 = vmatpush.msra.mxu0 0.0
      %735 = vmatpush.msra.mxu0 0.0
      %v736 = vand.u32 %v637, 4294901760
      %v737 = vsub.f32 %v637, %v736
      %v738 = vand.u32 %v737, 4294901760
      %v739 = vsub.f32 %v737, %v738
      %v740 = vand.u32 %v739, 4294901760
      %741 = vmatpush.msra.mxu0 %v740
      %v742 = vand.u32 %v612, 4294901760
      %743 = vmatmul.f32.gmra.mxu0 %v742
      %v744 = vpop.f32.mrf.mxu0
      %v745 = vadd.f32 %v663, %v744
      %v746 = vand.u32 %v615, 4294901760
      %747 = vmatmul.f32.gmra.mxu0 %v746
      %v748 = vpop.f32.mrf.mxu0
      %v749 = vadd.f32 %v671, %v748
      %v750 = vand.u32 %v618, 4294901760
      %751 = vmatmul.f32.gmra.mxu0 %v750
      %v752 = vpop.f32.mrf.mxu0
      %v753 = vadd.f32 %v679, %v752
      %v754 = vand.u32 %v621, 4294901760
      %755 = vmatmul.f32.gmra.mxu0 %v754
      %v756 = vpop.f32.mrf.mxu0
      %v757 = vadd.f32 %v687, %v756
      %v758 = vand.u32 %v624, 4294901760
      %759 = vmatmul.f32.gmra.mxu0 %v758
      %v760 = vpop.f32.mrf.mxu0
      %v761 = vadd.f32 %v695, %v760
      %v762 = vand.u32 %v627, 4294901760
      %763 = vmatmul.f32.gmra.mxu0 %v762
      %v764 = vpop.f32.mrf.mxu0
      %v765 = vadd.f32 %v703, %v764
      %v766 = vand.u32 %v630, 4294901760
      %767 = vmatmul.f32.gmra.mxu0 %v766
      %v768 = vpop.f32.mrf.mxu0
      %v769 = vadd.f32 %v711, %v768
      %v770 = vand.u32 %v633, 4294901760
      %771 = vmatmul.f32.gmra.mxu0 %v770
      %v772 = vpop.f32.mrf.mxu0
      %v773 = vadd.f32 %v719, %v772
      %774 = vdwg.mxu0
      %775 = vmatpush.msra.mxu0 0.0
      %776 = vmatpush.msra.mxu0 0.0
      %777 = vmatpush.msra.mxu0 0.0
      %778 = vmatpush.msra.mxu0 0.0
      %779 = vmatpush.msra.mxu0 0.0
      %780 = vmatpush.msra.mxu0 0.0
      %781 = vmatpush.msra.mxu0 0.0
      %782 = vmatpush.msra.mxu0 0.0
      %783 = vmatpush.msra.mxu0 0.0
      %784 = vmatpush.msra.mxu0 0.0
      %785 = vmatpush.msra.mxu0 0.0
      %786 = vmatpush.msra.mxu0 0.0
      %787 = vmatpush.msra.mxu0 0.0
      %788 = vmatpush.msra.mxu0 0.0
      %789 = vmatpush.msra.mxu0 0.0
      %v790 = vand.u32 %v637, 4294901760
      %v791 = vsub.f32 %v637, %v790
      %792 = vmatpush.msra.mxu0 %v791
      %v793 = vand.u32 %v612, 4294901760
      %v794 = vsub.f32 %v612, %v793
      %795 = vmatmul.f32.gmra.mxu0 %v794
      %v796 = vpop.f32.mrf.mxu0
      %v797 = vadd.f32 %v745, %v796
      %v798 = vand.u32 %v615, 4294901760
      %v799 = vsub.f32 %v615, %v798
      %800 = vmatmul.f32.gmra.mxu0 %v799
      %v801 = vpop.f32.mrf.mxu0
      %v802 = vadd.f32 %v749, %v801
      %v803 = vand.u32 %v618, 4294901760
      %v804 = vsub.f32 %v618, %v803
      %805 = vmatmul.f32.gmra.mxu0 %v804
      %v806 = vpop.f32.mrf.mxu0
      %v807 = vadd.f32 %v753, %v806
      %v808 = vand.u32 %v621, 4294901760
      %v809 = vsub.f32 %v621, %v808
      %810 = vmatmul.f32.gmra.mxu0 %v809
      %v811 = vpop.f32.mrf.mxu0
      %v812 = vadd.f32 %v757, %v811
      %v813 = vand.u32 %v624, 4294901760
      %v814 = vsub.f32 %v624, %v813
      %815 = vmatmul.f32.gmra.mxu0 %v814
      %v816 = vpop.f32.mrf.mxu0
      %v817 = vadd.f32 %v761, %v816
      %v818 = vand.u32 %v627, 4294901760
      %v819 = vsub.f32 %v627, %v818
      %820 = vmatmul.f32.gmra.mxu0 %v819
      %v821 = vpop.f32.mrf.mxu0
      %v822 = vadd.f32 %v765, %v821
      %v823 = vand.u32 %v630, 4294901760
      %v824 = vsub.f32 %v630, %v823
      %825 = vmatmul.f32.gmra.mxu0 %v824
      %v826 = vpop.f32.mrf.mxu0
      %v827 = vadd.f32 %v769, %v826
      %v828 = vand.u32 %v633, 4294901760
      %v829 = vsub.f32 %v633, %v828
      %830 = vmatmul.f32.gmra.mxu0 %v829
      %v831 = vpop.f32.mrf.mxu0
      %v832 = vadd.f32 %v773, %v831
      %833 = vdwg.mxu0
      %834 = vmatpush.msra.mxu0 0.0
      %835 = vmatpush.msra.mxu0 0.0
      %836 = vmatpush.msra.mxu0 0.0
      %837 = vmatpush.msra.mxu0 0.0
      %838 = vmatpush.msra.mxu0 0.0
      %839 = vmatpush.msra.mxu0 0.0
      %840 = vmatpush.msra.mxu0 0.0
      %841 = vmatpush.msra.mxu0 0.0
      %842 = vmatpush.msra.mxu0 0.0
      %843 = vmatpush.msra.mxu0 0.0
      %844 = vmatpush.msra.mxu0 0.0
      %845 = vmatpush.msra.mxu0 0.0
      %846 = vmatpush.msra.mxu0 0.0
      %847 = vmatpush.msra.mxu0 0.0
      %848 = vmatpush.msra.mxu0 0.0
      %v849 = vand.u32 %v637, 4294901760
      %850 = vmatpush.msra.mxu0 %v849
      %v851 = vand.u32 %v612, 4294901760
      %v852 = vsub.f32 %v612, %v851
      %v853 = vand.u32 %v852, 4294901760
      %854 = vmatmul.f32.gmra.mxu0 %v853
      %v855 = vpop.f32.mrf.mxu0
      %v856 = vadd.f32 %v797, %v855
      %v857 = vand.u32 %v615, 4294901760
      %v858 = vsub.f32 %v615, %v857
      %v859 = vand.u32 %v858, 4294901760
      %860 = vmatmul.f32.gmra.mxu0 %v859
      %v861 = vpop.f32.mrf.mxu0
      %v862 = vadd.f32 %v802, %v861
      %v863 = vand.u32 %v618, 4294901760
      %v864 = vsub.f32 %v618, %v863
      %v865 = vand.u32 %v864, 4294901760
      %866 = vmatmul.f32.gmra.mxu0 %v865
      %v867 = vpop.f32.mrf.mxu0
      %v868 = vadd.f32 %v807, %v867
      %v869 = vand.u32 %v621, 4294901760
      %v870 = vsub.f32 %v621, %v869
      %v871 = vand.u32 %v870, 4294901760
      %872 = vmatmul.f32.gmra.mxu0 %v871
      %v873 = vpop.f32.mrf.mxu0
      %v874 = vadd.f32 %v812, %v873
      %v875 = vand.u32 %v624, 4294901760
      %v876 = vsub.f32 %v624, %v875
      %v877 = vand.u32 %v876, 4294901760
      %878 = vmatmul.f32.gmra.mxu0 %v877
      %v879 = vpop.f32.mrf.mxu0
      %v880 = vadd.f32 %v817, %v879
      %v881 = vand.u32 %v627, 4294901760
      %v882 = vsub.f32 %v627, %v881
      %v883 = vand.u32 %v882, 4294901760
      %884 = vmatmul.f32.gmra.mxu0 %v883
      %v885 = vpop.f32.mrf.mxu0
      %v886 = vadd.f32 %v822, %v885
      %v887 = vand.u32 %v630, 4294901760
      %v888 = vsub.f32 %v630, %v887
      %v889 = vand.u32 %v888, 4294901760
      %890 = vmatmul.f32.gmra.mxu0 %v889
      %v891 = vpop.f32.mrf.mxu0
      %v892 = vadd.f32 %v827, %v891
      %v893 = vand.u32 %v633, 4294901760
      %v894 = vsub.f32 %v633, %v893
      %v895 = vand.u32 %v894, 4294901760
      %896 = vmatmul.f32.gmra.mxu0 %v895
      %v897 = vpop.f32.mrf.mxu0
      %v898 = vadd.f32 %v832, %v897
      %899 = vdwg.mxu0
      %900 = vmatpush.msra.mxu0 0.0
      %901 = vmatpush.msra.mxu0 0.0
      %902 = vmatpush.msra.mxu0 0.0
      %903 = vmatpush.msra.mxu0 0.0
      %904 = vmatpush.msra.mxu0 0.0
      %905 = vmatpush.msra.mxu0 0.0
      %906 = vmatpush.msra.mxu0 0.0
      %907 = vmatpush.msra.mxu0 0.0
      %908 = vmatpush.msra.mxu0 0.0
      %909 = vmatpush.msra.mxu0 0.0
      %910 = vmatpush.msra.mxu0 0.0
      %911 = vmatpush.msra.mxu0 0.0
      %912 = vmatpush.msra.mxu0 0.0
      %913 = vmatpush.msra.mxu0 0.0
      %914 = vmatpush.msra.mxu0 0.0
      %v915 = vand.u32 %v637, 4294901760
      %v916 = vsub.f32 %v637, %v915
      %v917 = vand.u32 %v916, 4294901760
      %918 = vmatpush.msra.mxu0 %v917
      %v919 = vand.u32 %v612, 4294901760
      %920 = vmatmul.f32.gmra.mxu0 %v919
      %v921 = vpop.f32.mrf.mxu0
      %v922 = vadd.f32 %v856, %v921
      %v923 = vand.u32 %v615, 4294901760
      %924 = vmatmul.f32.gmra.mxu0 %v923
      %v925 = vpop.f32.mrf.mxu0
      %v926 = vadd.f32 %v862, %v925
      %v927 = vand.u32 %v618, 4294901760
      %928 = vmatmul.f32.gmra.mxu0 %v927
      %v929 = vpop.f32.mrf.mxu0
      %v930 = vadd.f32 %v868, %v929
      %v931 = vand.u32 %v621, 4294901760
      %932 = vmatmul.f32.gmra.mxu0 %v931
      %v933 = vpop.f32.mrf.mxu0
      %v934 = vadd.f32 %v874, %v933
      %v935 = vand.u32 %v624, 4294901760
      %936 = vmatmul.f32.gmra.mxu0 %v935
      %v937 = vpop.f32.mrf.mxu0
      %v938 = vadd.f32 %v880, %v937
      %v939 = vand.u32 %v627, 4294901760
      %940 = vmatmul.f32.gmra.mxu0 %v939
      %v941 = vpop.f32.mrf.mxu0
      %v942 = vadd.f32 %v886, %v941
      %v943 = vand.u32 %v630, 4294901760
      %944 = vmatmul.f32.gmra.mxu0 %v943
      %v945 = vpop.f32.mrf.mxu0
      %v946 = vadd.f32 %v892, %v945
      %v947 = vand.u32 %v633, 4294901760
      %948 = vmatmul.f32.gmra.mxu0 %v947
      %v949 = vpop.f32.mrf.mxu0
      %v950 = vadd.f32 %v898, %v949
      %951 = vdwg.mxu0
      %952 = vmatpush.msra.mxu0 0.0
      %953 = vmatpush.msra.mxu0 0.0
      %954 = vmatpush.msra.mxu0 0.0
      %955 = vmatpush.msra.mxu0 0.0
      %956 = vmatpush.msra.mxu0 0.0
      %957 = vmatpush.msra.mxu0 0.0
      %958 = vmatpush.msra.mxu0 0.0
      %959 = vmatpush.msra.mxu0 0.0
      %960 = vmatpush.msra.mxu0 0.0
      %961 = vmatpush.msra.mxu0 0.0
      %962 = vmatpush.msra.mxu0 0.0
      %963 = vmatpush.msra.mxu0 0.0
      %964 = vmatpush.msra.mxu0 0.0
      %965 = vmatpush.msra.mxu0 0.0
      %966 = vmatpush.msra.mxu0 0.0
      %v967 = vand.u32 %v637, 4294901760
      %968 = vmatpush.msra.mxu0 %v967
      %v969 = vand.u32 %v612, 4294901760
      %970 = vmatmul.f32.gmra.mxu0 %v969
      %v971 = vpop.f32.mrf.mxu0
      %v972 = vadd.f32 %v922, %v971
      %v973 = vand.u32 %v615, 4294901760
      %974 = vmatmul.f32.gmra.mxu0 %v973
      %v975 = vpop.f32.mrf.mxu0
      %v976 = vadd.f32 %v926, %v975
      %v977 = vand.u32 %v618, 4294901760
      %978 = vmatmul.f32.gmra.mxu0 %v977
      %v979 = vpop.f32.mrf.mxu0
      %v980 = vadd.f32 %v930, %v979
      %v981 = vand.u32 %v621, 4294901760
      %982 = vmatmul.f32.gmra.mxu0 %v981
      %v983 = vpop.f32.mrf.mxu0
      %v984 = vadd.f32 %v934, %v983
      %v985 = vand.u32 %v624, 4294901760
      %986 = vmatmul.f32.gmra.mxu0 %v985
      %v987 = vpop.f32.mrf.mxu0
      %v988 = vadd.f32 %v938, %v987
      %v989 = vand.u32 %v627, 4294901760
      %990 = vmatmul.f32.gmra.mxu0 %v989
      %v991 = vpop.f32.mrf.mxu0
      %v992 = vadd.f32 %v942, %v991
      %v993 = vand.u32 %v630, 4294901760
      %994 = vmatmul.f32.gmra.mxu0 %v993
      %v995 = vpop.f32.mrf.mxu0
      %v996 = vadd.f32 %v946, %v995
      %v997 = vand.u32 %v633, 4294901760
      %998 = vmatmul.f32.gmra.mxu0 %v997
      %v999 = vpop.f32.mrf.mxu0
      %v1000 = vadd.f32 %v950, %v999
      %1001 = vdwg.mxu0
      %v1002 = vadd.f32 %v599, %v972
      %v1003 = vadd.f32 %v599, %v976
      %v1004 = vadd.f32 %v599, %v980
      %v1005 = vadd.f32 %v599, %v984
      %v1006 = vadd.f32 %v599, %v988
      %v1007 = vadd.f32 %v599, %v992
      %v1008 = vadd.f32 %v599, %v996
      %v1009 = vadd.f32 %v599, %v1000
      %v1010 = vld [vmem:[%s548] sm:$0xff]
      %v1011 = vld [vmem:[%s548 + $0x8] sm:$0xff]
      %v1012 = vld [vmem:[%s548 + $0x10] sm:$0xff]
      %v1013 = vld [vmem:[%s548 + $0x18] sm:$0xff]
      %v1014 = vld [vmem:[%s548 + $0x20] sm:$0xff]
      %v1015 = vld [vmem:[%s548 + $0x28] sm:$0xff]
      %v1016 = vld [vmem:[%s548 + $0x30] sm:$0xff]
      %v1017 = vld [vmem:[%s548 + $0x38] sm:$0xff]
      %s1018 = scalar_lea.vmem %s6, 4
      %v1019 = vld [vmem:[%s1018] sm:$0xf]
      %v1021 = vsel %vm610, %v1010, 0
      %v1024 = vsel %vm610, %v1011, 0
      %v1027 = vsel %vm610, %v1012, 0
      %v1030 = vsel %vm610, %v1013, 0
      %v1033 = vsel %vm610, %v1014, 0
      %v1036 = vsel %vm610, %v1015, 0
      %v1039 = vsel %vm610, %v1016, 0
      %v1042 = vsel %vm610, %v1017, 0
      %v1045 = vsel %vm635, %v1019, 0
      %1047 = vmatpush.msra.mxu0 0.0
      %1048 = vmatpush.msra.mxu0 0.0
      %1049 = vmatpush.msra.mxu0 0.0
      %1050 = vmatpush.msra.mxu0 0.0
      %1051 = vmatpush.msra.mxu0 0.0
      %1052 = vmatpush.msra.mxu0 0.0
      %1053 = vmatpush.msra.mxu0 0.0
      %1054 = vmatpush.msra.mxu0 0.0
      %1055 = vmatpush.msra.mxu0 0.0
      %1056 = vmatpush.msra.mxu0 0.0
      %1057 = vmatpush.msra.mxu0 0.0
      %1058 = vmatpush.msra.mxu0 0.0
      %1059 = vmatpush.msra.mxu0 0.0
      %1060 = vmatpush.msra.mxu0 0.0
      %1061 = vmatpush.msra.mxu0 0.0
      %v1062 = vand.u32 %v1045, 4294901760
      %1063 = vmatpush.msra.mxu0 %v1062
      %v1064 = vand.u32 %v1021, 4294901760
      %v1065 = vsub.f32 %v1021, %v1064
      %v1066 = vand.u32 %v1065, 4294901760
      %v1067 = vsub.f32 %v1065, %v1066
      %v1068 = vand.u32 %v1067, 4294901760
      %1069 = vmatmul.f32.gmra.mxu0 %v1068
      %v1070 = vpop.f32.mrf.mxu0
      %v1071 = vadd.f32 0.0, %v1070
      %v1072 = vand.u32 %v1024, 4294901760
      %v1073 = vsub.f32 %v1024, %v1072
      %v1074 = vand.u32 %v1073, 4294901760
      %v1075 = vsub.f32 %v1073, %v1074
      %v1076 = vand.u32 %v1075, 4294901760
      %1077 = vmatmul.f32.gmra.mxu0 %v1076
      %v1078 = vpop.f32.mrf.mxu0
      %v1079 = vadd.f32 0.0, %v1078
      %v1080 = vand.u32 %v1027, 4294901760
      %v1081 = vsub.f32 %v1027, %v1080
      %v1082 = vand.u32 %v1081, 4294901760
      %v1083 = vsub.f32 %v1081, %v1082
      %v1084 = vand.u32 %v1083, 4294901760
      %1085 = vmatmul.f32.gmra.mxu0 %v1084
      %v1086 = vpop.f32.mrf.mxu0
      %v1087 = vadd.f32 0.0, %v1086
      %v1088 = vand.u32 %v1030, 4294901760
      %v1089 = vsub.f32 %v1030, %v1088
      %v1090 = vand.u32 %v1089, 4294901760
      %v1091 = vsub.f32 %v1089, %v1090
      %v1092 = vand.u32 %v1091, 4294901760
      %1093 = vmatmul.f32.gmra.mxu0 %v1092
      %v1094 = vpop.f32.mrf.mxu0
      %v1095 = vadd.f32 0.0, %v1094
      %v1096 = vand.u32 %v1033, 4294901760
      %v1097 = vsub.f32 %v1033, %v1096
      %v1098 = vand.u32 %v1097, 4294901760
      %v1099 = vsub.f32 %v1097, %v1098
      %v1100 = vand.u32 %v1099, 4294901760
      %1101 = vmatmul.f32.gmra.mxu0 %v1100
      %v1102 = vpop.f32.mrf.mxu0
      %v1103 = vadd.f32 0.0, %v1102
      %v1104 = vand.u32 %v1036, 4294901760
      %v1105 = vsub.f32 %v1036, %v1104
      %v1106 = vand.u32 %v1105, 4294901760
      %v1107 = vsub.f32 %v1105, %v1106
      %v1108 = vand.u32 %v1107, 4294901760
      %1109 = vmatmul.f32.gmra.mxu0 %v1108
      %v1110 = vpop.f32.mrf.mxu0
      %v1111 = vadd.f32 0.0, %v1110
      %v1112 = vand.u32 %v1039, 4294901760
      %v1113 = vsub.f32 %v1039, %v1112
      %v1114 = vand.u32 %v1113, 4294901760
      %v1115 = vsub.f32 %v1113, %v1114
      %v1116 = vand.u32 %v1115, 4294901760
      %1117 = vmatmul.f32.gmra.mxu0 %v1116
      %v1118 = vpop.f32.mrf.mxu0
      %v1119 = vadd.f32 0.0, %v1118
      %v1120 = vand.u32 %v1042, 4294901760
      %v1121 = vsub.f32 %v1042, %v1120
      %v1122 = vand.u32 %v1121, 4294901760
      %v1123 = vsub.f32 %v1121, %v1122
      %v1124 = vand.u32 %v1123, 4294901760
      %1125 = vmatmul.f32.gmra.mxu0 %v1124
      %v1126 = vpop.f32.mrf.mxu0
      %v1127 = vadd.f32 0.0, %v1126
      %1128 = vdwg.mxu0
      %1129 = vmatpush.msra.mxu0 0.0
      %1130 = vmatpush.msra.mxu0 0.0
      %1131 = vmatpush.msra.mxu0 0.0
      %1132 = vmatpush.msra.mxu0 0.0
      %1133 = vmatpush.msra.mxu0 0.0
      %1134 = vmatpush.msra.mxu0 0.0
      %1135 = vmatpush.msra.mxu0 0.0
      %1136 = vmatpush.msra.mxu0 0.0
      %1137 = vmatpush.msra.mxu0 0.0
      %1138 = vmatpush.msra.mxu0 0.0
      %1139 = vmatpush.msra.mxu0 0.0
      %1140 = vmatpush.msra.mxu0 0.0
      %1141 = vmatpush.msra.mxu0 0.0
      %1142 = vmatpush.msra.mxu0 0.0
      %1143 = vmatpush.msra.mxu0 0.0
      %v1144 = vand.u32 %v1045, 4294901760
      %v1145 = vsub.f32 %v1045, %v1144
      %v1146 = vand.u32 %v1145, 4294901760
      %v1147 = vsub.f32 %v1145, %v1146
      %v1148 = vand.u32 %v1147, 4294901760
      %1149 = vmatpush.msra.mxu0 %v1148
      %v1150 = vand.u32 %v1021, 4294901760
      %1151 = vmatmul.f32.gmra.mxu0 %v1150
      %v1152 = vpop.f32.mrf.mxu0
      %v1153 = vadd.f32 %v1071, %v1152
      %v1154 = vand.u32 %v1024, 4294901760
      %1155 = vmatmul.f32.gmra.mxu0 %v1154
      %v1156 = vpop.f32.mrf.mxu0
      %v1157 = vadd.f32 %v1079, %v1156
      %v1158 = vand.u32 %v1027, 4294901760
      %1159 = vmatmul.f32.gmra.mxu0 %v1158
      %v1160 = vpop.f32.mrf.mxu0
      %v1161 = vadd.f32 %v1087, %v1160
      %v1162 = vand.u32 %v1030, 4294901760
      %1163 = vmatmul.f32.gmra.mxu0 %v1162
      %v1164 = vpop.f32.mrf.mxu0
      %v1165 = vadd.f32 %v1095, %v1164
      %v1166 = vand.u32 %v1033, 4294901760
      %1167 = vmatmul.f32.gmra.mxu0 %v1166
      %v1168 = vpop.f32.mrf.mxu0
      %v1169 = vadd.f32 %v1103, %v1168
      %v1170 = vand.u32 %v1036, 4294901760
      %1171 = vmatmul.f32.gmra.mxu0 %v1170
      %v1172 = vpop.f32.mrf.mxu0
      %v1173 = vadd.f32 %v1111, %v1172
      %v1174 = vand.u32 %v1039, 4294901760
      %1175 = vmatmul.f32.gmra.mxu0 %v1174
      %v1176 = vpop.f32.mrf.mxu0
      %v1177 = vadd.f32 %v1119, %v1176
      %v1178 = vand.u32 %v1042, 4294901760
      %1179 = vmatmul.f32.gmra.mxu0 %v1178
      %v1180 = vpop.f32.mrf.mxu0
      %v1181 = vadd.f32 %v1127, %v1180
      %1182 = vdwg.mxu0
      %1183 = vmatpush.msra.mxu0 0.0
      %1184 = vmatpush.msra.mxu0 0.0
      %1185 = vmatpush.msra.mxu0 0.0
      %1186 = vmatpush.msra.mxu0 0.0
      %1187 = vmatpush.msra.mxu0 0.0
      %1188 = vmatpush.msra.mxu0 0.0
      %1189 = vmatpush.msra.mxu0 0.0
      %1190 = vmatpush.msra.mxu0 0.0
      %1191 = vmatpush.msra.mxu0 0.0
      %1192 = vmatpush.msra.mxu0 0.0
      %1193 = vmatpush.msra.mxu0 0.0
      %1194 = vmatpush.msra.mxu0 0.0
      %1195 = vmatpush.msra.mxu0 0.0
      %1196 = vmatpush.msra.mxu0 0.0
      %1197 = vmatpush.msra.mxu0 0.0
      %v1198 = vand.u32 %v1045, 4294901760
      %v1199 = vsub.f32 %v1045, %v1198
      %1200 = vmatpush.msra.mxu0 %v1199
      %v1201 = vand.u32 %v1021, 4294901760
      %v1202 = vsub.f32 %v1021, %v1201
      %1203 = vmatmul.f32.gmra.mxu0 %v1202
      %v1204 = vpop.f32.mrf.mxu0
      %v1205 = vadd.f32 %v1153, %v1204
      %v1206 = vand.u32 %v1024, 4294901760
      %v1207 = vsub.f32 %v1024, %v1206
      %1208 = vmatmul.f32.gmra.mxu0 %v1207
      %v1209 = vpop.f32.mrf.mxu0
      %v1210 = vadd.f32 %v1157, %v1209
      %v1211 = vand.u32 %v1027, 4294901760
      %v1212 = vsub.f32 %v1027, %v1211
      %1213 = vmatmul.f32.gmra.mxu0 %v1212
      %v1214 = vpop.f32.mrf.mxu0
      %v1215 = vadd.f32 %v1161, %v1214
      %v1216 = vand.u32 %v1030, 4294901760
      %v1217 = vsub.f32 %v1030, %v1216
      %1218 = vmatmul.f32.gmra.mxu0 %v1217
      %v1219 = vpop.f32.mrf.mxu0
      %v1220 = vadd.f32 %v1165, %v1219
      %v1221 = vand.u32 %v1033, 4294901760
      %v1222 = vsub.f32 %v1033, %v1221
      %1223 = vmatmul.f32.gmra.mxu0 %v1222
      %v1224 = vpop.f32.mrf.mxu0
      %v1225 = vadd.f32 %v1169, %v1224
      %v1226 = vand.u32 %v1036, 4294901760
      %v1227 = vsub.f32 %v1036, %v1226
      %1228 = vmatmul.f32.gmra.mxu0 %v1227
      %v1229 = vpop.f32.mrf.mxu0
      %v1230 = vadd.f32 %v1173, %v1229
      %v1231 = vand.u32 %v1039, 4294901760
      %v1232 = vsub.f32 %v1039, %v1231
      %1233 = vmatmul.f32.gmra.mxu0 %v1232
      %v1234 = vpop.f32.mrf.mxu0
      %v1235 = vadd.f32 %v1177, %v1234
      %v1236 = vand.u32 %v1042, 4294901760
      %v1237 = vsub.f32 %v1042, %v1236
      %1238 = vmatmul.f32.gmra.mxu0 %v1237
      %v1239 = vpop.f32.mrf.mxu0
      %v1240 = vadd.f32 %v1181, %v1239
      %1241 = vdwg.mxu0
      %1242 = vmatpush.msra.mxu0 0.0
      %1243 = vmatpush.msra.mxu0 0.0
      %1244 = vmatpush.msra.mxu0 0.0
      %1245 = vmatpush.msra.mxu0 0.0
      %1246 = vmatpush.msra.mxu0 0.0
      %1247 = vmatpush.msra.mxu0 0.0
      %1248 = vmatpush.msra.mxu0 0.0
      %1249 = vmatpush.msra.mxu0 0.0
      %1250 = vmatpush.msra.mxu0 0.0
      %1251 = vmatpush.msra.mxu0 0.0
      %1252 = vmatpush.msra.mxu0 0.0
      %1253 = vmatpush.msra.mxu0 0.0
      %1254 = vmatpush.msra.mxu0 0.0
      %1255 = vmatpush.msra.mxu0 0.0
      %1256 = vmatpush.msra.mxu0 0.0
      %v1257 = vand.u32 %v1045, 4294901760
      %1258 = vmatpush.msra.mxu0 %v1257
      %v1259 = vand.u32 %v1021, 4294901760
      %v1260 = vsub.f32 %v1021, %v1259
      %v1261 = vand.u32 %v1260, 4294901760
      %1262 = vmatmul.f32.gmra.mxu0 %v1261
      %v1263 = vpop.f32.mrf.mxu0
      %v1264 = vadd.f32 %v1205, %v1263
      %v1265 = vand.u32 %v1024, 4294901760
      %v1266 = vsub.f32 %v1024, %v1265
      %v1267 = vand.u32 %v1266, 4294901760
      %1268 = vmatmul.f32.gmra.mxu0 %v1267
      %v1269 = vpop.f32.mrf.mxu0
      %v1270 = vadd.f32 %v1210, %v1269
      %v1271 = vand.u32 %v1027, 4294901760
      %v1272 = vsub.f32 %v1027, %v1271
      %v1273 = vand.u32 %v1272, 4294901760
      %1274 = vmatmul.f32.gmra.mxu0 %v1273
      %v1275 = vpop.f32.mrf.mxu0
      %v1276 = vadd.f32 %v1215, %v1275
      %v1277 = vand.u32 %v1030, 4294901760
      %v1278 = vsub.f32 %v1030, %v1277
      %v1279 = vand.u32 %v1278, 4294901760
      %1280 = vmatmul.f32.gmra.mxu0 %v1279
      %v1281 = vpop.f32.mrf.mxu0
      %v1282 = vadd.f32 %v1220, %v1281
      %v1283 = vand.u32 %v1033, 4294901760
      %v1284 = vsub.f32 %v1033, %v1283
      %v1285 = vand.u32 %v1284, 4294901760
      %1286 = vmatmul.f32.gmra.mxu0 %v1285
      %v1287 = vpop.f32.mrf.mxu0
      %v1288 = vadd.f32 %v1225, %v1287
      %v1289 = vand.u32 %v1036, 4294901760
      %v1290 = vsub.f32 %v1036, %v1289
      %v1291 = vand.u32 %v1290, 4294901760
      %1292 = vmatmul.f32.gmra.mxu0 %v1291
      %v1293 = vpop.f32.mrf.mxu0
      %v1294 = vadd.f32 %v1230, %v1293
      %v1295 = vand.u32 %v1039, 4294901760
      %v1296 = vsub.f32 %v1039, %v1295
      %v1297 = vand.u32 %v1296, 4294901760
      %1298 = vmatmul.f32.gmra.mxu0 %v1297
      %v1299 = vpop.f32.mrf.mxu0
      %v1300 = vadd.f32 %v1235, %v1299
      %v1301 = vand.u32 %v1042, 4294901760
      %v1302 = vsub.f32 %v1042, %v1301
      %v1303 = vand.u32 %v1302, 4294901760
      %1304 = vmatmul.f32.gmra.mxu0 %v1303
      %v1305 = vpop.f32.mrf.mxu0
      %v1306 = vadd.f32 %v1240, %v1305
      %1307 = vdwg.mxu0
      %1308 = vmatpush.msra.mxu0 0.0
      %1309 = vmatpush.msra.mxu0 0.0
      %1310 = vmatpush.msra.mxu0 0.0
      %1311 = vmatpush.msra.mxu0 0.0
      %1312 = vmatpush.msra.mxu0 0.0
      %1313 = vmatpush.msra.mxu0 0.0
      %1314 = vmatpush.msra.mxu0 0.0
      %1315 = vmatpush.msra.mxu0 0.0
      %1316 = vmatpush.msra.mxu0 0.0
      %1317 = vmatpush.msra.mxu0 0.0
      %1318 = vmatpush.msra.mxu0 0.0
      %1319 = vmatpush.msra.mxu0 0.0
      %1320 = vmatpush.msra.mxu0 0.0
      %1321 = vmatpush.msra.mxu0 0.0
      %1322 = vmatpush.msra.mxu0 0.0
      %v1323 = vand.u32 %v1045, 4294901760
      %v1324 = vsub.f32 %v1045, %v1323
      %v1325 = vand.u32 %v1324, 4294901760
      %1326 = vmatpush.msra.mxu0 %v1325
      %v1327 = vand.u32 %v1021, 4294901760
      %1328 = vmatmul.f32.gmra.mxu0 %v1327
      %v1329 = vpop.f32.mrf.mxu0
      %v1330 = vadd.f32 %v1264, %v1329
      %v1331 = vand.u32 %v1024, 4294901760
      %1332 = vmatmul.f32.gmra.mxu0 %v1331
      %v1333 = vpop.f32.mrf.mxu0
      %v1334 = vadd.f32 %v1270, %v1333
      %v1335 = vand.u32 %v1027, 4294901760
      %1336 = vmatmul.f32.gmra.mxu0 %v1335
      %v1337 = vpop.f32.mrf.mxu0
      %v1338 = vadd.f32 %v1276, %v1337
      %v1339 = vand.u32 %v1030, 4294901760
      %1340 = vmatmul.f32.gmra.mxu0 %v1339
      %v1341 = vpop.f32.mrf.mxu0
      %v1342 = vadd.f32 %v1282, %v1341
      %v1343 = vand.u32 %v1033, 4294901760
      %1344 = vmatmul.f32.gmra.mxu0 %v1343
      %v1345 = vpop.f32.mrf.mxu0
      %v1346 = vadd.f32 %v1288, %v1345
      %v1347 = vand.u32 %v1036, 4294901760
      %1348 = vmatmul.f32.gmra.mxu0 %v1347
      %v1349 = vpop.f32.mrf.mxu0
      %v1350 = vadd.f32 %v1294, %v1349
      %v1351 = vand.u32 %v1039, 4294901760
      %1352 = vmatmul.f32.gmra.mxu0 %v1351
      %v1353 = vpop.f32.mrf.mxu0
      %v1354 = vadd.f32 %v1300, %v1353
      %v1355 = vand.u32 %v1042, 4294901760
      %1356 = vmatmul.f32.gmra.mxu0 %v1355
      %v1357 = vpop.f32.mrf.mxu0
      %v1358 = vadd.f32 %v1306, %v1357
      %1359 = vdwg.mxu0
      %1360 = vmatpush.msra.mxu0 0.0
      %1361 = vmatpush.msra.mxu0 0.0
      %1362 = vmatpush.msra.mxu0 0.0
      %1363 = vmatpush.msra.mxu0 0.0
      %1364 = vmatpush.msra.mxu0 0.0
      %1365 = vmatpush.msra.mxu0 0.0
      %1366 = vmatpush.msra.mxu0 0.0
      %1367 = vmatpush.msra.mxu0 0.0
      %1368 = vmatpush.msra.mxu0 0.0
      %1369 = vmatpush.msra.mxu0 0.0
      %1370 = vmatpush.msra.mxu0 0.0
      %1371 = vmatpush.msra.mxu0 0.0
      %1372 = vmatpush.msra.mxu0 0.0
      %1373 = vmatpush.msra.mxu0 0.0
      %1374 = vmatpush.msra.mxu0 0.0
      %v1375 = vand.u32 %v1045, 4294901760
      %1376 = vmatpush.msra.mxu0 %v1375
      %v1377 = vand.u32 %v1021, 4294901760
      %1378 = vmatmul.f32.gmra.mxu0 %v1377
      %v1379 = vpop.f32.mrf.mxu0
      %v1380 = vadd.f32 %v1330, %v1379
      %v1381 = vand.u32 %v1024, 4294901760
      %1382 = vmatmul.f32.gmra.mxu0 %v1381
      %v1383 = vpop.f32.mrf.mxu0
      %v1384 = vadd.f32 %v1334, %v1383
      %v1385 = vand.u32 %v1027, 4294901760
      %1386 = vmatmul.f32.gmra.mxu0 %v1385
      %v1387 = vpop.f32.mrf.mxu0
      %v1388 = vadd.f32 %v1338, %v1387
      %v1389 = vand.u32 %v1030, 4294901760
      %1390 = vmatmul.f32.gmra.mxu0 %v1389
      %v1391 = vpop.f32.mrf.mxu0
      %v1392 = vadd.f32 %v1342, %v1391
      %v1393 = vand.u32 %v1033, 4294901760
      %1394 = vmatmul.f32.gmra.mxu0 %v1393
      %v1395 = vpop.f32.mrf.mxu0
      %v1396 = vadd.f32 %v1346, %v1395
      %v1397 = vand.u32 %v1036, 4294901760
      %1398 = vmatmul.f32.gmra.mxu0 %v1397
      %v1399 = vpop.f32.mrf.mxu0
      %v1400 = vadd.f32 %v1350, %v1399
      %v1401 = vand.u32 %v1039, 4294901760
      %1402 = vmatmul.f32.gmra.mxu0 %v1401
      %v1403 = vpop.f32.mrf.mxu0
      %v1404 = vadd.f32 %v1354, %v1403
      %v1405 = vand.u32 %v1042, 4294901760
      %1406 = vmatmul.f32.gmra.mxu0 %v1405
      %v1407 = vpop.f32.mrf.mxu0
      %v1408 = vadd.f32 %v1358, %v1407
      %1409 = vdwg.mxu0
      %v1410 = vadd.f32 %v1002, %v1380
      %v1411 = vadd.f32 %v1003, %v1384
      %v1412 = vadd.f32 %v1004, %v1388
      %v1413 = vadd.f32 %v1005, %v1392
      %v1414 = vadd.f32 %v1006, %v1396
      %v1415 = vadd.f32 %v1007, %v1400
      %v1416 = vadd.f32 %v1008, %v1404
      %v1417 = vadd.f32 %v1009, %v1408
      %v1418 = vld [vmem:[%s516 + $0x1] sm:$0xff]
      %v1419 = vld [vmem:[%s516 + $0x11] sm:$0xff]
      %v1420 = vld [vmem:[%s516 + $0x21] sm:$0xff]
      %v1421 = vld [vmem:[%s516 + $0x31] sm:$0xff]
      %v1422 = vld [vmem:[%s516 + $0x41] sm:$0xff]
      %v1423 = vld [vmem:[%s516 + $0x51] sm:$0xff]
      %v1424 = vld [vmem:[%s516 + $0x61] sm:$0xff]
      %v1425 = vld [vmem:[%s516 + $0x71] sm:$0xff]
      %s1426 = scalar_lea.vmem %s6, 8
      %v1427 = vld [vmem:[%s1426] sm:$0xf]
      %v1429 = vsel %vm610, %v1418, 0
      %v1432 = vsel %vm610, %v1419, 0
      %v1435 = vsel %vm610, %v1420, 0
      %v1438 = vsel %vm610, %v1421, 0
      %v1441 = vsel %vm610, %v1422, 0
      %v1444 = vsel %vm610, %v1423, 0
      %v1447 = vsel %vm610, %v1424, 0
      %v1450 = vsel %vm610, %v1425, 0
      %v1453 = vsel %vm635, %v1427, 0
      %1455 = vmatpush.msra.mxu0 0.0
      %1456 = vmatpush.msra.mxu0 0.0
      %1457 = vmatpush.msra.mxu0 0.0
      %1458 = vmatpush.msra.mxu0 0.0
      %1459 = vmatpush.msra.mxu0 0.0
      %1460 = vmatpush.msra.mxu0 0.0
      %1461 = vmatpush.msra.mxu0 0.0
      %1462 = vmatpush.msra.mxu0 0.0
      %1463 = vmatpush.msra.mxu0 0.0
      %1464 = vmatpush.msra.mxu0 0.0
      %1465 = vmatpush.msra.mxu0 0.0
      %1466 = vmatpush.msra.mxu0 0.0
      %1467 = vmatpush.msra.mxu0 0.0
      %1468 = vmatpush.msra.mxu0 0.0
      %1469 = vmatpush.msra.mxu0 0.0
      %v1470 = vand.u32 %v1453, 4294901760
      %1471 = vmatpush.msra.mxu0 %v1470
      %v1472 = vand.u32 %v1429, 4294901760
      %v1473 = vsub.f32 %v1429, %v1472
      %v1474 = vand.u32 %v1473, 4294901760
      %v1475 = vsub.f32 %v1473, %v1474
      %v1476 = vand.u32 %v1475, 4294901760
      %1477 = vmatmul.f32.gmra.mxu0 %v1476
      %v1478 = vpop.f32.mrf.mxu0
      %v1479 = vadd.f32 0.0, %v1478
      %v1480 = vand.u32 %v1432, 4294901760
      %v1481 = vsub.f32 %v1432, %v1480
      %v1482 = vand.u32 %v1481, 4294901760
      %v1483 = vsub.f32 %v1481, %v1482
      %v1484 = vand.u32 %v1483, 4294901760
      %1485 = vmatmul.f32.gmra.mxu0 %v1484
      %v1486 = vpop.f32.mrf.mxu0
      %v1487 = vadd.f32 0.0, %v1486
      %v1488 = vand.u32 %v1435, 4294901760
      %v1489 = vsub.f32 %v1435, %v1488
      %v1490 = vand.u32 %v1489, 4294901760
      %v1491 = vsub.f32 %v1489, %v1490
      %v1492 = vand.u32 %v1491, 4294901760
      %1493 = vmatmul.f32.gmra.mxu0 %v1492
      %v1494 = vpop.f32.mrf.mxu0
      %v1495 = vadd.f32 0.0, %v1494
      %v1496 = vand.u32 %v1438, 4294901760
      %v1497 = vsub.f32 %v1438, %v1496
      %v1498 = vand.u32 %v1497, 4294901760
      %v1499 = vsub.f32 %v1497, %v1498
      %v1500 = vand.u32 %v1499, 4294901760
      %1501 = vmatmul.f32.gmra.mxu0 %v1500
      %v1502 = vpop.f32.mrf.mxu0
      %v1503 = vadd.f32 0.0, %v1502
      %v1504 = vand.u32 %v1441, 4294901760
      %v1505 = vsub.f32 %v1441, %v1504
      %v1506 = vand.u32 %v1505, 4294901760
      %v1507 = vsub.f32 %v1505, %v1506
      %v1508 = vand.u32 %v1507, 4294901760
      %1509 = vmatmul.f32.gmra.mxu0 %v1508
      %v1510 = vpop.f32.mrf.mxu0
      %v1511 = vadd.f32 0.0, %v1510
      %v1512 = vand.u32 %v1444, 4294901760
      %v1513 = vsub.f32 %v1444, %v1512
      %v1514 = vand.u32 %v1513, 4294901760
      %v1515 = vsub.f32 %v1513, %v1514
      %v1516 = vand.u32 %v1515, 4294901760
      %1517 = vmatmul.f32.gmra.mxu0 %v1516
      %v1518 = vpop.f32.mrf.mxu0
      %v1519 = vadd.f32 0.0, %v1518
      %v1520 = vand.u32 %v1447, 4294901760
      %v1521 = vsub.f32 %v1447, %v1520
      %v1522 = vand.u32 %v1521, 4294901760
      %v1523 = vsub.f32 %v1521, %v1522
      %v1524 = vand.u32 %v1523, 4294901760
      %1525 = vmatmul.f32.gmra.mxu0 %v1524
      %v1526 = vpop.f32.mrf.mxu0
      %v1527 = vadd.f32 0.0, %v1526
      %v1528 = vand.u32 %v1450, 4294901760
      %v1529 = vsub.f32 %v1450, %v1528
      %v1530 = vand.u32 %v1529, 4294901760
      %v1531 = vsub.f32 %v1529, %v1530
      %v1532 = vand.u32 %v1531, 4294901760
      %1533 = vmatmul.f32.gmra.mxu0 %v1532
      %v1534 = vpop.f32.mrf.mxu0
      %v1535 = vadd.f32 0.0, %v1534
      %1536 = vdwg.mxu0
      %1537 = vmatpush.msra.mxu0 0.0
      %1538 = vmatpush.msra.mxu0 0.0
      %1539 = vmatpush.msra.mxu0 0.0
      %1540 = vmatpush.msra.mxu0 0.0
      %1541 = vmatpush.msra.mxu0 0.0
      %1542 = vmatpush.msra.mxu0 0.0
      %1543 = vmatpush.msra.mxu0 0.0
      %1544 = vmatpush.msra.mxu0 0.0
      %1545 = vmatpush.msra.mxu0 0.0
      %1546 = vmatpush.msra.mxu0 0.0
      %1547 = vmatpush.msra.mxu0 0.0
      %1548 = vmatpush.msra.mxu0 0.0
      %1549 = vmatpush.msra.mxu0 0.0
      %1550 = vmatpush.msra.mxu0 0.0
      %1551 = vmatpush.msra.mxu0 0.0
      %v1552 = vand.u32 %v1453, 4294901760
      %v1553 = vsub.f32 %v1453, %v1552
      %v1554 = vand.u32 %v1553, 4294901760
      %v1555 = vsub.f32 %v1553, %v1554
      %v1556 = vand.u32 %v1555, 4294901760
      %1557 = vmatpush.msra.mxu0 %v1556
      %v1558 = vand.u32 %v1429, 4294901760
      %1559 = vmatmul.f32.gmra.mxu0 %v1558
      %v1560 = vpop.f32.mrf.mxu0
      %v1561 = vadd.f32 %v1479, %v1560
      %v1562 = vand.u32 %v1432, 4294901760
      %1563 = vmatmul.f32.gmra.mxu0 %v1562
      %v1564 = vpop.f32.mrf.mxu0
      %v1565 = vadd.f32 %v1487, %v1564
      %v1566 = vand.u32 %v1435, 4294901760
      %1567 = vmatmul.f32.gmra.mxu0 %v1566
      %v1568 = vpop.f32.mrf.mxu0
      %v1569 = vadd.f32 %v1495, %v1568
      %v1570 = vand.u32 %v1438, 4294901760
      %1571 = vmatmul.f32.gmra.mxu0 %v1570
      %v1572 = vpop.f32.mrf.mxu0
      %v1573 = vadd.f32 %v1503, %v1572
      %v1574 = vand.u32 %v1441, 4294901760
      %1575 = vmatmul.f32.gmra.mxu0 %v1574
      %v1576 = vpop.f32.mrf.mxu0
      %v1577 = vadd.f32 %v1511, %v1576
      %v1578 = vand.u32 %v1444, 4294901760
      %1579 = vmatmul.f32.gmra.mxu0 %v1578
      %v1580 = vpop.f32.mrf.mxu0
      %v1581 = vadd.f32 %v1519, %v1580
      %v1582 = vand.u32 %v1447, 4294901760
      %1583 = vmatmul.f32.gmra.mxu0 %v1582
      %v1584 = vpop.f32.mrf.mxu0
      %v1585 = vadd.f32 %v1527, %v1584
      %v1586 = vand.u32 %v1450, 4294901760
      %1587 = vmatmul.f32.gmra.mxu0 %v1586
      %v1588 = vpop.f32.mrf.mxu0
      %v1589 = vadd.f32 %v1535, %v1588
      %1590 = vdwg.mxu0
      %1591 = vmatpush.msra.mxu0 0.0
      %1592 = vmatpush.msra.mxu0 0.0
      %1593 = vmatpush.msra.mxu0 0.0
      %1594 = vmatpush.msra.mxu0 0.0
      %1595 = vmatpush.msra.mxu0 0.0
      %1596 = vmatpush.msra.mxu0 0.0
      %1597 = vmatpush.msra.mxu0 0.0
      %1598 = vmatpush.msra.mxu0 0.0
      %1599 = vmatpush.msra.mxu0 0.0
      %1600 = vmatpush.msra.mxu0 0.0
      %1601 = vmatpush.msra.mxu0 0.0
      %1602 = vmatpush.msra.mxu0 0.0
      %1603 = vmatpush.msra.mxu0 0.0
      %1604 = vmatpush.msra.mxu0 0.0
      %1605 = vmatpush.msra.mxu0 0.0
      %v1606 = vand.u32 %v1453, 4294901760
      %v1607 = vsub.f32 %v1453, %v1606
      %1608 = vmatpush.msra.mxu0 %v1607
      %v1609 = vand.u32 %v1429, 4294901760
      %v1610 = vsub.f32 %v1429, %v1609
      %1611 = vmatmul.f32.gmra.mxu0 %v1610
      %v1612 = vpop.f32.mrf.mxu0
      %v1613 = vadd.f32 %v1561, %v1612
      %v1614 = vand.u32 %v1432, 4294901760
      %v1615 = vsub.f32 %v1432, %v1614
      %1616 = vmatmul.f32.gmra.mxu0 %v1615
      %v1617 = vpop.f32.mrf.mxu0
      %v1618 = vadd.f32 %v1565, %v1617
      %v1619 = vand.u32 %v1435, 4294901760
      %v1620 = vsub.f32 %v1435, %v1619
      %1621 = vmatmul.f32.gmra.mxu0 %v1620
      %v1622 = vpop.f32.mrf.mxu0
      %v1623 = vadd.f32 %v1569, %v1622
      %v1624 = vand.u32 %v1438, 4294901760
      %v1625 = vsub.f32 %v1438, %v1624
      %1626 = vmatmul.f32.gmra.mxu0 %v1625
      %v1627 = vpop.f32.mrf.mxu0
      %v1628 = vadd.f32 %v1573, %v1627
      %v1629 = vand.u32 %v1441, 4294901760
      %v1630 = vsub.f32 %v1441, %v1629
      %1631 = vmatmul.f32.gmra.mxu0 %v1630
      %v1632 = vpop.f32.mrf.mxu0
      %v1633 = vadd.f32 %v1577, %v1632
      %v1634 = vand.u32 %v1444, 4294901760
      %v1635 = vsub.f32 %v1444, %v1634
      %1636 = vmatmul.f32.gmra.mxu0 %v1635
      %v1637 = vpop.f32.mrf.mxu0
      %v1638 = vadd.f32 %v1581, %v1637
      %v1639 = vand.u32 %v1447, 4294901760
      %v1640 = vsub.f32 %v1447, %v1639
      %1641 = vmatmul.f32.gmra.mxu0 %v1640
      %v1642 = vpop.f32.mrf.mxu0
      %v1643 = vadd.f32 %v1585, %v1642
      %v1644 = vand.u32 %v1450, 4294901760
      %v1645 = vsub.f32 %v1450, %v1644
      %1646 = vmatmul.f32.gmra.mxu0 %v1645
      %v1647 = vpop.f32.mrf.mxu0
      %v1648 = vadd.f32 %v1589, %v1647
      %1649 = vdwg.mxu0
      %1650 = vmatpush.msra.mxu0 0.0
      %1651 = vmatpush.msra.mxu0 0.0
      %1652 = vmatpush.msra.mxu0 0.0
      %1653 = vmatpush.msra.mxu0 0.0
      %1654 = vmatpush.msra.mxu0 0.0
      %1655 = vmatpush.msra.mxu0 0.0
      %1656 = vmatpush.msra.mxu0 0.0
      %1657 = vmatpush.msra.mxu0 0.0
      %1658 = vmatpush.msra.mxu0 0.0
      %1659 = vmatpush.msra.mxu0 0.0
      %1660 = vmatpush.msra.mxu0 0.0
      %1661 = vmatpush.msra.mxu0 0.0
      %1662 = vmatpush.msra.mxu0 0.0
      %1663 = vmatpush.msra.mxu0 0.0
      %1664 = vmatpush.msra.mxu0 0.0
      %v1665 = vand.u32 %v1453, 4294901760
      %1666 = vmatpush.msra.mxu0 %v1665
      %v1667 = vand.u32 %v1429, 4294901760
      %v1668 = vsub.f32 %v1429, %v1667
      %v1669 = vand.u32 %v1668, 4294901760
      %1670 = vmatmul.f32.gmra.mxu0 %v1669
      %v1671 = vpop.f32.mrf.mxu0
      %v1672 = vadd.f32 %v1613, %v1671
      %v1673 = vand.u32 %v1432, 4294901760
      %v1674 = vsub.f32 %v1432, %v1673
      %v1675 = vand.u32 %v1674, 4294901760
      %1676 = vmatmul.f32.gmra.mxu0 %v1675
      %v1677 = vpop.f32.mrf.mxu0
      %v1678 = vadd.f32 %v1618, %v1677
      %v1679 = vand.u32 %v1435, 4294901760
      %v1680 = vsub.f32 %v1435, %v1679
      %v1681 = vand.u32 %v1680, 4294901760
      %1682 = vmatmul.f32.gmra.mxu0 %v1681
      %v1683 = vpop.f32.mrf.mxu0
      %v1684 = vadd.f32 %v1623, %v1683
      %v1685 = vand.u32 %v1438, 4294901760
      %v1686 = vsub.f32 %v1438, %v1685
      %v1687 = vand.u32 %v1686, 4294901760
      %1688 = vmatmul.f32.gmra.mxu0 %v1687
      %v1689 = vpop.f32.mrf.mxu0
      %v1690 = vadd.f32 %v1628, %v1689
      %v1691 = vand.u32 %v1441, 4294901760
      %v1692 = vsub.f32 %v1441, %v1691
      %v1693 = vand.u32 %v1692, 4294901760
      %1694 = vmatmul.f32.gmra.mxu0 %v1693
      %v1695 = vpop.f32.mrf.mxu0
      %v1696 = vadd.f32 %v1633, %v1695
      %v1697 = vand.u32 %v1444, 4294901760
      %v1698 = vsub.f32 %v1444, %v1697
      %v1699 = vand.u32 %v1698, 4294901760
      %1700 = vmatmul.f32.gmra.mxu0 %v1699
      %v1701 = vpop.f32.mrf.mxu0
      %v1702 = vadd.f32 %v1638, %v1701
      %v1703 = vand.u32 %v1447, 4294901760
      %v1704 = vsub.f32 %v1447, %v1703
      %v1705 = vand.u32 %v1704, 4294901760
      %1706 = vmatmul.f32.gmra.mxu0 %v1705
      %v1707 = vpop.f32.mrf.mxu0
      %v1708 = vadd.f32 %v1643, %v1707
      %v1709 = vand.u32 %v1450, 4294901760
      %v1710 = vsub.f32 %v1450, %v1709
      %v1711 = vand.u32 %v1710, 4294901760
      %1712 = vmatmul.f32.gmra.mxu0 %v1711
      %v1713 = vpop.f32.mrf.mxu0
      %v1714 = vadd.f32 %v1648, %v1713
      %1715 = vdwg.mxu0
      %1716 = vmatpush.msra.mxu0 0.0
      %1717 = vmatpush.msra.mxu0 0.0
      %1718 = vmatpush.msra.mxu0 0.0
      %1719 = vmatpush.msra.mxu0 0.0
      %1720 = vmatpush.msra.mxu0 0.0
      %1721 = vmatpush.msra.mxu0 0.0
      %1722 = vmatpush.msra.mxu0 0.0
      %1723 = vmatpush.msra.mxu0 0.0
      %1724 = vmatpush.msra.mxu0 0.0
      %1725 = vmatpush.msra.mxu0 0.0
      %1726 = vmatpush.msra.mxu0 0.0
      %1727 = vmatpush.msra.mxu0 0.0
      %1728 = vmatpush.msra.mxu0 0.0
      %1729 = vmatpush.msra.mxu0 0.0
      %1730 = vmatpush.msra.mxu0 0.0
      %v1731 = vand.u32 %v1453, 4294901760
      %v1732 = vsub.f32 %v1453, %v1731
      %v1733 = vand.u32 %v1732, 4294901760
      %1734 = vmatpush.msra.mxu0 %v1733
      %v1735 = vand.u32 %v1429, 4294901760
      %1736 = vmatmul.f32.gmra.mxu0 %v1735
      %v1737 = vpop.f32.mrf.mxu0
      %v1738 = vadd.f32 %v1672, %v1737
      %v1739 = vand.u32 %v1432, 4294901760
      %1740 = vmatmul.f32.gmra.mxu0 %v1739
      %v1741 = vpop.f32.mrf.mxu0
      %v1742 = vadd.f32 %v1678, %v1741
      %v1743 = vand.u32 %v1435, 4294901760
      %1744 = vmatmul.f32.gmra.mxu0 %v1743
      %v1745 = vpop.f32.mrf.mxu0
      %v1746 = vadd.f32 %v1684, %v1745
      %v1747 = vand.u32 %v1438, 4294901760
      %1748 = vmatmul.f32.gmra.mxu0 %v1747
      %v1749 = vpop.f32.mrf.mxu0
      %v1750 = vadd.f32 %v1690, %v1749
      %v1751 = vand.u32 %v1441, 4294901760
      %1752 = vmatmul.f32.gmra.mxu0 %v1751
      %v1753 = vpop.f32.mrf.mxu0
      %v1754 = vadd.f32 %v1696, %v1753
      %v1755 = vand.u32 %v1444, 4294901760
      %1756 = vmatmul.f32.gmra.mxu0 %v1755
      %v1757 = vpop.f32.mrf.mxu0
      %v1758 = vadd.f32 %v1702, %v1757
      %v1759 = vand.u32 %v1447, 4294901760
      %1760 = vmatmul.f32.gmra.mxu0 %v1759
      %v1761 = vpop.f32.mrf.mxu0
      %v1762 = vadd.f32 %v1708, %v1761
      %v1763 = vand.u32 %v1450, 4294901760
      %1764 = vmatmul.f32.gmra.mxu0 %v1763
      %v1765 = vpop.f32.mrf.mxu0
      %v1766 = vadd.f32 %v1714, %v1765
      %1767 = vdwg.mxu0
      %1768 = vmatpush.msra.mxu0 0.0
      %1769 = vmatpush.msra.mxu0 0.0
      %1770 = vmatpush.msra.mxu0 0.0
      %1771 = vmatpush.msra.mxu0 0.0
      %1772 = vmatpush.msra.mxu0 0.0
      %1773 = vmatpush.msra.mxu0 0.0
      %1774 = vmatpush.msra.mxu0 0.0
      %1775 = vmatpush.msra.mxu0 0.0
      %1776 = vmatpush.msra.mxu0 0.0
      %1777 = vmatpush.msra.mxu0 0.0
      %1778 = vmatpush.msra.mxu0 0.0
      %1779 = vmatpush.msra.mxu0 0.0
      %1780 = vmatpush.msra.mxu0 0.0
      %1781 = vmatpush.msra.mxu0 0.0
      %1782 = vmatpush.msra.mxu0 0.0
      %v1783 = vand.u32 %v1453, 4294901760
      %1784 = vmatpush.msra.mxu0 %v1783
      %v1785 = vand.u32 %v1429, 4294901760
      %1786 = vmatmul.f32.gmra.mxu0 %v1785
      %v1787 = vpop.f32.mrf.mxu0
      %v1788 = vadd.f32 %v1738, %v1787
      %v1789 = vand.u32 %v1432, 4294901760
      %1790 = vmatmul.f32.gmra.mxu0 %v1789
      %v1791 = vpop.f32.mrf.mxu0
      %v1792 = vadd.f32 %v1742, %v1791
      %v1793 = vand.u32 %v1435, 4294901760
      %1794 = vmatmul.f32.gmra.mxu0 %v1793
      %v1795 = vpop.f32.mrf.mxu0
      %v1796 = vadd.f32 %v1746, %v1795
      %v1797 = vand.u32 %v1438, 4294901760
      %1798 = vmatmul.f32.gmra.mxu0 %v1797
      %v1799 = vpop.f32.mrf.mxu0
      %v1800 = vadd.f32 %v1750, %v1799
      %v1801 = vand.u32 %v1441, 4294901760
      %1802 = vmatmul.f32.gmra.mxu0 %v1801
      %v1803 = vpop.f32.mrf.mxu0
      %v1804 = vadd.f32 %v1754, %v1803
      %v1805 = vand.u32 %v1444, 4294901760
      %1806 = vmatmul.f32.gmra.mxu0 %v1805
      %v1807 = vpop.f32.mrf.mxu0
      %v1808 = vadd.f32 %v1758, %v1807
      %v1809 = vand.u32 %v1447, 4294901760
      %1810 = vmatmul.f32.gmra.mxu0 %v1809
      %v1811 = vpop.f32.mrf.mxu0
      %v1812 = vadd.f32 %v1762, %v1811
      %v1813 = vand.u32 %v1450, 4294901760
      %1814 = vmatmul.f32.gmra.mxu0 %v1813
      %v1815 = vpop.f32.mrf.mxu0
      %v1816 = vadd.f32 %v1766, %v1815
      %1817 = vdwg.mxu0
      %v1818 = vadd.f32 %v1410, %v1788
      %v1819 = vadd.f32 %v1411, %v1792
      %v1820 = vadd.f32 %v1412, %v1796
      %v1821 = vadd.f32 %v1413, %v1800
      %v1822 = vadd.f32 %v1414, %v1804
      %v1823 = vadd.f32 %v1415, %v1808
      %v1824 = vadd.f32 %v1416, %v1812
      %v1825 = vadd.f32 %v1417, %v1816
      %v1826 = vld [vmem:[%s575] sm:$0xff]
      %v1827 = vld [vmem:[%s575 + $0x10] sm:$0xff]
      %v1828 = vld [vmem:[%s575 + $0x20] sm:$0xff]
      %v1829 = vld [vmem:[%s575 + $0x30] sm:$0xff]
      %v1830 = vld [vmem:[%s575 + $0x40] sm:$0xff]
      %v1831 = vld [vmem:[%s575 + $0x50] sm:$0xff]
      %v1832 = vld [vmem:[%s575 + $0x60] sm:$0xff]
      %v1833 = vld [vmem:[%s575 + $0x70] sm:$0xff]
      %s1834 = scalar_lea.vmem %s6, 12
      %v1835 = vld [vmem:[%s1834] sm:$0xf]
      %v1837 = vsel %vm610, %v1826, 0
      %v1840 = vsel %vm610, %v1827, 0
      %v1843 = vsel %vm610, %v1828, 0
      %v1846 = vsel %vm610, %v1829, 0
      %v1849 = vsel %vm610, %v1830, 0
      %v1852 = vsel %vm610, %v1831, 0
      %v1855 = vsel %vm610, %v1832, 0
      %v1858 = vsel %vm610, %v1833, 0
      %v1861 = vsel %vm635, %v1835, 0
      %1863 = vmatpush.msra.mxu0 0.0
      %1864 = vmatpush.msra.mxu0 0.0
      %1865 = vmatpush.msra.mxu0 0.0
      %1866 = vmatpush.msra.mxu0 0.0
      %1867 = vmatpush.msra.mxu0 0.0
      %1868 = vmatpush.msra.mxu0 0.0
      %1869 = vmatpush.msra.mxu0 0.0
      %1870 = vmatpush.msra.mxu0 0.0
      %1871 = vmatpush.msra.mxu0 0.0
      %1872 = vmatpush.msra.mxu0 0.0
      %1873 = vmatpush.msra.mxu0 0.0
      %1874 = vmatpush.msra.mxu0 0.0
      %1875 = vmatpush.msra.mxu0 0.0
      %1876 = vmatpush.msra.mxu0 0.0
      %1877 = vmatpush.msra.mxu0 0.0
      %v1878 = vand.u32 %v1861, 4294901760
      %1879 = vmatpush.msra.mxu0 %v1878
      %v1880 = vand.u32 %v1837, 4294901760
      %v1881 = vsub.f32 %v1837, %v1880
      %v1882 = vand.u32 %v1881, 4294901760
      %v1883 = vsub.f32 %v1881, %v1882
      %v1884 = vand.u32 %v1883, 4294901760
      %1885 = vmatmul.f32.gmra.mxu0 %v1884
      %v1886 = vpop.f32.mrf.mxu0
      %v1887 = vadd.f32 0.0, %v1886
      %v1888 = vand.u32 %v1840, 4294901760
      %v1889 = vsub.f32 %v1840, %v1888
      %v1890 = vand.u32 %v1889, 4294901760
      %v1891 = vsub.f32 %v1889, %v1890
      %v1892 = vand.u32 %v1891, 4294901760
      %1893 = vmatmul.f32.gmra.mxu0 %v1892
      %v1894 = vpop.f32.mrf.mxu0
      %v1895 = vadd.f32 0.0, %v1894
      %v1896 = vand.u32 %v1843, 4294901760
      %v1897 = vsub.f32 %v1843, %v1896
      %v1898 = vand.u32 %v1897, 4294901760
      %v1899 = vsub.f32 %v1897, %v1898
      %v1900 = vand.u32 %v1899, 4294901760
      %1901 = vmatmul.f32.gmra.mxu0 %v1900
      %v1902 = vpop.f32.mrf.mxu0
      %v1903 = vadd.f32 0.0, %v1902
      %v1904 = vand.u32 %v1846, 4294901760
      %v1905 = vsub.f32 %v1846, %v1904
      %v1906 = vand.u32 %v1905, 4294901760
      %v1907 = vsub.f32 %v1905, %v1906
      %v1908 = vand.u32 %v1907, 4294901760
      %1909 = vmatmul.f32.gmra.mxu0 %v1908
      %v1910 = vpop.f32.mrf.mxu0
      %v1911 = vadd.f32 0.0, %v1910
      %v1912 = vand.u32 %v1849, 4294901760
      %v1913 = vsub.f32 %v1849, %v1912
      %v1914 = vand.u32 %v1913, 4294901760
      %v1915 = vsub.f32 %v1913, %v1914
      %v1916 = vand.u32 %v1915, 4294901760
      %1917 = vmatmul.f32.gmra.mxu0 %v1916
      %v1918 = vpop.f32.mrf.mxu0
      %v1919 = vadd.f32 0.0, %v1918
      %v1920 = vand.u32 %v1852, 4294901760
      %v1921 = vsub.f32 %v1852, %v1920
      %v1922 = vand.u32 %v1921, 4294901760
      %v1923 = vsub.f32 %v1921, %v1922
      %v1924 = vand.u32 %v1923, 4294901760
      %1925 = vmatmul.f32.gmra.mxu0 %v1924
      %v1926 = vpop.f32.mrf.mxu0
      %v1927 = vadd.f32 0.0, %v1926
      %v1928 = vand.u32 %v1855, 4294901760
      %v1929 = vsub.f32 %v1855, %v1928
      %v1930 = vand.u32 %v1929, 4294901760
      %v1931 = vsub.f32 %v1929, %v1930
      %v1932 = vand.u32 %v1931, 4294901760
      %1933 = vmatmul.f32.gmra.mxu0 %v1932
      %v1934 = vpop.f32.mrf.mxu0
      %v1935 = vadd.f32 0.0, %v1934
      %v1936 = vand.u32 %v1858, 4294901760
      %v1937 = vsub.f32 %v1858, %v1936
      %v1938 = vand.u32 %v1937, 4294901760
      %v1939 = vsub.f32 %v1937, %v1938
      %v1940 = vand.u32 %v1939, 4294901760
      %1941 = vmatmul.f32.gmra.mxu0 %v1940
      %v1942 = vpop.f32.mrf.mxu0
      %v1943 = vadd.f32 0.0, %v1942
      %1944 = vdwg.mxu0
      %1945 = vmatpush.msra.mxu0 0.0
      %1946 = vmatpush.msra.mxu0 0.0
      %1947 = vmatpush.msra.mxu0 0.0
      %1948 = vmatpush.msra.mxu0 0.0
      %1949 = vmatpush.msra.mxu0 0.0
      %1950 = vmatpush.msra.mxu0 0.0
      %1951 = vmatpush.msra.mxu0 0.0
      %1952 = vmatpush.msra.mxu0 0.0
      %1953 = vmatpush.msra.mxu0 0.0
      %1954 = vmatpush.msra.mxu0 0.0
      %1955 = vmatpush.msra.mxu0 0.0
      %1956 = vmatpush.msra.mxu0 0.0
      %1957 = vmatpush.msra.mxu0 0.0
      %1958 = vmatpush.msra.mxu0 0.0
      %1959 = vmatpush.msra.mxu0 0.0
      %v1960 = vand.u32 %v1861, 4294901760
      %v1961 = vsub.f32 %v1861, %v1960
      %v1962 = vand.u32 %v1961, 4294901760
      %v1963 = vsub.f32 %v1961, %v1962
      %v1964 = vand.u32 %v1963, 4294901760
      %1965 = vmatpush.msra.mxu0 %v1964
      %v1966 = vand.u32 %v1837, 4294901760
      %1967 = vmatmul.f32.gmra.mxu0 %v1966
      %v1968 = vpop.f32.mrf.mxu0
      %v1969 = vadd.f32 %v1887, %v1968
      %v1970 = vand.u32 %v1840, 4294901760
      %1971 = vmatmul.f32.gmra.mxu0 %v1970
      %v1972 = vpop.f32.mrf.mxu0
      %v1973 = vadd.f32 %v1895, %v1972
      %v1974 = vand.u32 %v1843, 4294901760
      %1975 = vmatmul.f32.gmra.mxu0 %v1974
      %v1976 = vpop.f32.mrf.mxu0
      %v1977 = vadd.f32 %v1903, %v1976
      %v1978 = vand.u32 %v1846, 4294901760
      %1979 = vmatmul.f32.gmra.mxu0 %v1978
      %v1980 = vpop.f32.mrf.mxu0
      %v1981 = vadd.f32 %v1911, %v1980
      %v1982 = vand.u32 %v1849, 4294901760
      %1983 = vmatmul.f32.gmra.mxu0 %v1982
      %v1984 = vpop.f32.mrf.mxu0
      %v1985 = vadd.f32 %v1919, %v1984
      %v1986 = vand.u32 %v1852, 4294901760
      %1987 = vmatmul.f32.gmra.mxu0 %v1986
      %v1988 = vpop.f32.mrf.mxu0
      %v1989 = vadd.f32 %v1927, %v1988
      %v1990 = vand.u32 %v1855, 4294901760
      %1991 = vmatmul.f32.gmra.mxu0 %v1990
      %v1992 = vpop.f32.mrf.mxu0
      %v1993 = vadd.f32 %v1935, %v1992
      %v1994 = vand.u32 %v1858, 4294901760
      %1995 = vmatmul.f32.gmra.mxu0 %v1994
      %v1996 = vpop.f32.mrf.mxu0
      %v1997 = vadd.f32 %v1943, %v1996
      %1998 = vdwg.mxu0
      %1999 = vmatpush.msra.mxu0 0.0
      %2000 = vmatpush.msra.mxu0 0.0
      %2001 = vmatpush.msra.mxu0 0.0
      %2002 = vmatpush.msra.mxu0 0.0
      %2003 = vmatpush.msra.mxu0 0.0
      %2004 = vmatpush.msra.mxu0 0.0
      %2005 = vmatpush.msra.mxu0 0.0
      %2006 = vmatpush.msra.mxu0 0.0
      %2007 = vmatpush.msra.mxu0 0.0
      %2008 = vmatpush.msra.mxu0 0.0
      %2009 = vmatpush.msra.mxu0 0.0
      %2010 = vmatpush.msra.mxu0 0.0
      %2011 = vmatpush.msra.mxu0 0.0
      %2012 = vmatpush.msra.mxu0 0.0
      %2013 = vmatpush.msra.mxu0 0.0
      %v2014 = vand.u32 %v1861, 4294901760
      %v2015 = vsub.f32 %v1861, %v2014
      %2016 = vmatpush.msra.mxu0 %v2015
      %v2017 = vand.u32 %v1837, 4294901760
      %v2018 = vsub.f32 %v1837, %v2017
      %2019 = vmatmul.f32.gmra.mxu0 %v2018
      %v2020 = vpop.f32.mrf.mxu0
      %v2021 = vadd.f32 %v1969, %v2020
      %v2022 = vand.u32 %v1840, 4294901760
      %v2023 = vsub.f32 %v1840, %v2022
      %2024 = vmatmul.f32.gmra.mxu0 %v2023
      %v2025 = vpop.f32.mrf.mxu0
      %v2026 = vadd.f32 %v1973, %v2025
      %v2027 = vand.u32 %v1843, 4294901760
      %v2028 = vsub.f32 %v1843, %v2027
      %2029 = vmatmul.f32.gmra.mxu0 %v2028
      %v2030 = vpop.f32.mrf.mxu0
      %v2031 = vadd.f32 %v1977, %v2030
      %v2032 = vand.u32 %v1846, 4294901760
      %v2033 = vsub.f32 %v1846, %v2032
      %2034 = vmatmul.f32.gmra.mxu0 %v2033
      %v2035 = vpop.f32.mrf.mxu0
      %v2036 = vadd.f32 %v1981, %v2035
      %v2037 = vand.u32 %v1849, 4294901760
      %v2038 = vsub.f32 %v1849, %v2037
      %2039 = vmatmul.f32.gmra.mxu0 %v2038
      %v2040 = vpop.f32.mrf.mxu0
      %v2041 = vadd.f32 %v1985, %v2040
      %v2042 = vand.u32 %v1852, 4294901760
      %v2043 = vsub.f32 %v1852, %v2042
      %2044 = vmatmul.f32.gmra.mxu0 %v2043
      %v2045 = vpop.f32.mrf.mxu0
      %v2046 = vadd.f32 %v1989, %v2045
      %v2047 = vand.u32 %v1855, 4294901760
      %v2048 = vsub.f32 %v1855, %v2047
      %2049 = vmatmul.f32.gmra.mxu0 %v2048
      %v2050 = vpop.f32.mrf.mxu0
      %v2051 = vadd.f32 %v1993, %v2050
      %v2052 = vand.u32 %v1858, 4294901760
      %v2053 = vsub.f32 %v1858, %v2052
      %2054 = vmatmul.f32.gmra.mxu0 %v2053
      %v2055 = vpop.f32.mrf.mxu0
      %v2056 = vadd.f32 %v1997, %v2055
      %2057 = vdwg.mxu0
      %2058 = vmatpush.msra.mxu0 0.0
      %2059 = vmatpush.msra.mxu0 0.0
      %2060 = vmatpush.msra.mxu0 0.0
      %2061 = vmatpush.msra.mxu0 0.0
      %2062 = vmatpush.msra.mxu0 0.0
      %2063 = vmatpush.msra.mxu0 0.0
      %2064 = vmatpush.msra.mxu0 0.0
      %2065 = vmatpush.msra.mxu0 0.0
      %2066 = vmatpush.msra.mxu0 0.0
      %2067 = vmatpush.msra.mxu0 0.0
      %2068 = vmatpush.msra.mxu0 0.0
      %2069 = vmatpush.msra.mxu0 0.0
      %2070 = vmatpush.msra.mxu0 0.0
      %2071 = vmatpush.msra.mxu0 0.0
      %2072 = vmatpush.msra.mxu0 0.0
      %v2073 = vand.u32 %v1861, 4294901760
      %2074 = vmatpush.msra.mxu0 %v2073
      %v2075 = vand.u32 %v1837, 4294901760
      %v2076 = vsub.f32 %v1837, %v2075
      %v2077 = vand.u32 %v2076, 4294901760
      %2078 = vmatmul.f32.gmra.mxu0 %v2077
      %v2079 = vpop.f32.mrf.mxu0
      %v2080 = vadd.f32 %v2021, %v2079
      %v2081 = vand.u32 %v1840, 4294901760
      %v2082 = vsub.f32 %v1840, %v2081
      %v2083 = vand.u32 %v2082, 4294901760
      %2084 = vmatmul.f32.gmra.mxu0 %v2083
      %v2085 = vpop.f32.mrf.mxu0
      %v2086 = vadd.f32 %v2026, %v2085
      %v2087 = vand.u32 %v1843, 4294901760
      %v2088 = vsub.f32 %v1843, %v2087
      %v2089 = vand.u32 %v2088, 4294901760
      %2090 = vmatmul.f32.gmra.mxu0 %v2089
      %v2091 = vpop.f32.mrf.mxu0
      %v2092 = vadd.f32 %v2031, %v2091
      %v2093 = vand.u32 %v1846, 4294901760
      %v2094 = vsub.f32 %v1846, %v2093
      %v2095 = vand.u32 %v2094, 4294901760
      %2096 = vmatmul.f32.gmra.mxu0 %v2095
      %v2097 = vpop.f32.mrf.mxu0
      %v2098 = vadd.f32 %v2036, %v2097
      %v2099 = vand.u32 %v1849, 4294901760
      %v2100 = vsub.f32 %v1849, %v2099
      %v2101 = vand.u32 %v2100, 4294901760
      %2102 = vmatmul.f32.gmra.mxu0 %v2101
      %v2103 = vpop.f32.mrf.mxu0
      %v2104 = vadd.f32 %v2041, %v2103
      %v2105 = vand.u32 %v1852, 4294901760
      %v2106 = vsub.f32 %v1852, %v2105
      %v2107 = vand.u32 %v2106, 4294901760
      %2108 = vmatmul.f32.gmra.mxu0 %v2107
      %v2109 = vpop.f32.mrf.mxu0
      %v2110 = vadd.f32 %v2046, %v2109
      %v2111 = vand.u32 %v1855, 4294901760
      %v2112 = vsub.f32 %v1855, %v2111
      %v2113 = vand.u32 %v2112, 4294901760
      %2114 = vmatmul.f32.gmra.mxu0 %v2113
      %v2115 = vpop.f32.mrf.mxu0
      %v2116 = vadd.f32 %v2051, %v2115
      %v2117 = vand.u32 %v1858, 4294901760
      %v2118 = vsub.f32 %v1858, %v2117
      %v2119 = vand.u32 %v2118, 4294901760
      %2120 = vmatmul.f32.gmra.mxu0 %v2119
      %v2121 = vpop.f32.mrf.mxu0
      %v2122 = vadd.f32 %v2056, %v2121
      %2123 = vdwg.mxu0
      %2124 = vmatpush.msra.mxu0 0.0
      %2125 = vmatpush.msra.mxu0 0.0
      %2126 = vmatpush.msra.mxu0 0.0
      %2127 = vmatpush.msra.mxu0 0.0
      %2128 = vmatpush.msra.mxu0 0.0
      %2129 = vmatpush.msra.mxu0 0.0
      %2130 = vmatpush.msra.mxu0 0.0
      %2131 = vmatpush.msra.mxu0 0.0
      %2132 = vmatpush.msra.mxu0 0.0
      %2133 = vmatpush.msra.mxu0 0.0
      %2134 = vmatpush.msra.mxu0 0.0
      %2135 = vmatpush.msra.mxu0 0.0
      %2136 = vmatpush.msra.mxu0 0.0
      %2137 = vmatpush.msra.mxu0 0.0
      %2138 = vmatpush.msra.mxu0 0.0
      %v2139 = vand.u32 %v1861, 4294901760
      %v2140 = vsub.f32 %v1861, %v2139
      %v2141 = vand.u32 %v2140, 4294901760
      %2142 = vmatpush.msra.mxu0 %v2141
      %v2143 = vand.u32 %v1837, 4294901760
      %2144 = vmatmul.f32.gmra.mxu0 %v2143
      %v2145 = vpop.f32.mrf.mxu0
      %v2146 = vadd.f32 %v2080, %v2145
      %v2147 = vand.u32 %v1840, 4294901760
      %2148 = vmatmul.f32.gmra.mxu0 %v2147
      %v2149 = vpop.f32.mrf.mxu0
      %v2150 = vadd.f32 %v2086, %v2149
      %v2151 = vand.u32 %v1843, 4294901760
      %2152 = vmatmul.f32.gmra.mxu0 %v2151
      %v2153 = vpop.f32.mrf.mxu0
      %v2154 = vadd.f32 %v2092, %v2153
      %v2155 = vand.u32 %v1846, 4294901760
      %2156 = vmatmul.f32.gmra.mxu0 %v2155
      %v2157 = vpop.f32.mrf.mxu0
      %v2158 = vadd.f32 %v2098, %v2157
      %v2159 = vand.u32 %v1849, 4294901760
      %2160 = vmatmul.f32.gmra.mxu0 %v2159
      %v2161 = vpop.f32.mrf.mxu0
      %v2162 = vadd.f32 %v2104, %v2161
      %v2163 = vand.u32 %v1852, 4294901760
      %2164 = vmatmul.f32.gmra.mxu0 %v2163
      %v2165 = vpop.f32.mrf.mxu0
      %v2166 = vadd.f32 %v2110, %v2165
      %v2167 = vand.u32 %v1855, 4294901760
      %2168 = vmatmul.f32.gmra.mxu0 %v2167
      %v2169 = vpop.f32.mrf.mxu0
      %v2170 = vadd.f32 %v2116, %v2169
      %v2171 = vand.u32 %v1858, 4294901760
      %2172 = vmatmul.f32.gmra.mxu0 %v2171
      %v2173 = vpop.f32.mrf.mxu0
      %v2174 = vadd.f32 %v2122, %v2173
      %2175 = vdwg.mxu0
      %2176 = vmatpush.msra.mxu0 0.0
      %2177 = vmatpush.msra.mxu0 0.0
      %2178 = vmatpush.msra.mxu0 0.0
      %2179 = vmatpush.msra.mxu0 0.0
      %2180 = vmatpush.msra.mxu0 0.0
      %2181 = vmatpush.msra.mxu0 0.0
      %2182 = vmatpush.msra.mxu0 0.0
      %2183 = vmatpush.msra.mxu0 0.0
      %2184 = vmatpush.msra.mxu0 0.0
      %2185 = vmatpush.msra.mxu0 0.0
      %2186 = vmatpush.msra.mxu0 0.0
      %2187 = vmatpush.msra.mxu0 0.0
      %2188 = vmatpush.msra.mxu0 0.0
      %2189 = vmatpush.msra.mxu0 0.0
      %2190 = vmatpush.msra.mxu0 0.0
      %v2191 = vand.u32 %v1861, 4294901760
      %2192 = vmatpush.msra.mxu0 %v2191
      %v2193 = vand.u32 %v1837, 4294901760
      %2194 = vmatmul.f32.gmra.mxu0 %v2193
      %v2195 = vpop.f32.mrf.mxu0
      %v2196 = vadd.f32 %v2146, %v2195
      %v2197 = vand.u32 %v1840, 4294901760
      %2198 = vmatmul.f32.gmra.mxu0 %v2197
      %v2199 = vpop.f32.mrf.mxu0
      %v2200 = vadd.f32 %v2150, %v2199
      %v2201 = vand.u32 %v1843, 4294901760
      %2202 = vmatmul.f32.gmra.mxu0 %v2201
      %v2203 = vpop.f32.mrf.mxu0
      %v2204 = vadd.f32 %v2154, %v2203
      %v2205 = vand.u32 %v1846, 4294901760
      %2206 = vmatmul.f32.gmra.mxu0 %v2205
      %v2207 = vpop.f32.mrf.mxu0
      %v2208 = vadd.f32 %v2158, %v2207
      %v2209 = vand.u32 %v1849, 4294901760
      %2210 = vmatmul.f32.gmra.mxu0 %v2209
      %v2211 = vpop.f32.mrf.mxu0
      %v2212 = vadd.f32 %v2162, %v2211
      %v2213 = vand.u32 %v1852, 4294901760
      %2214 = vmatmul.f32.gmra.mxu0 %v2213
      %v2215 = vpop.f32.mrf.mxu0
      %v2216 = vadd.f32 %v2166, %v2215
      %v2217 = vand.u32 %v1855, 4294901760
      %2218 = vmatmul.f32.gmra.mxu0 %v2217
      %v2219 = vpop.f32.mrf.mxu0
      %v2220 = vadd.f32 %v2170, %v2219
      %v2221 = vand.u32 %v1858, 4294901760
      %2222 = vmatmul.f32.gmra.mxu0 %v2221
      %v2223 = vpop.f32.mrf.mxu0
      %v2224 = vadd.f32 %v2174, %v2223
      %2225 = vdwg.mxu0
      %v2226 = vadd.f32 %v1818, %v2196
      %v2227 = vadd.f32 %v1819, %v2200
      %v2228 = vadd.f32 %v1820, %v2204
      %v2229 = vadd.f32 %v1821, %v2208
      %v2230 = vadd.f32 %v1822, %v2212
      %v2231 = vadd.f32 %v1823, %v2216
      %v2232 = vadd.f32 %v1824, %v2220
      %v2233 = vadd.f32 %v1825, %v2224
      %v2234 = vld [vmem:[%s585] sm:$0xff]
      %v2235 = vld [vmem:[%s585 + $0x8] sm:$0xff]
      %v2236 = vld [vmem:[%s585 + $0x10] sm:$0xff]
      %v2237 = vld [vmem:[%s585 + $0x18] sm:$0xff]
      %v2238 = vld [vmem:[%s585 + $0x20] sm:$0xff]
      %v2239 = vld [vmem:[%s585 + $0x28] sm:$0xff]
      %v2240 = vld [vmem:[%s585 + $0x30] sm:$0xff]
      %v2241 = vld [vmem:[%s585 + $0x38] sm:$0xff]
      %s2242 = scalar_lea.vmem %s6, 16
      %v2243 = vld [vmem:[%s2242] sm:$0xf]
      %v2245 = vsel %vm610, %v2234, 0
      %v2248 = vsel %vm610, %v2235, 0
      %v2251 = vsel %vm610, %v2236, 0
      %v2254 = vsel %vm610, %v2237, 0
      %v2257 = vsel %vm610, %v2238, 0
      %v2260 = vsel %vm610, %v2239, 0
      %v2263 = vsel %vm610, %v2240, 0
      %v2266 = vsel %vm610, %v2241, 0
      %v2269 = vsel %vm635, %v2243, 0
      %2271 = vmatpush.msra.mxu0 0.0
      %2272 = vmatpush.msra.mxu0 0.0
      %2273 = vmatpush.msra.mxu0 0.0
      %2274 = vmatpush.msra.mxu0 0.0
      %2275 = vmatpush.msra.mxu0 0.0
      %2276 = vmatpush.msra.mxu0 0.0
      %2277 = vmatpush.msra.mxu0 0.0
      %2278 = vmatpush.msra.mxu0 0.0
      %2279 = vmatpush.msra.mxu0 0.0
      %2280 = vmatpush.msra.mxu0 0.0
      %2281 = vmatpush.msra.mxu0 0.0
      %2282 = vmatpush.msra.mxu0 0.0
      %2283 = vmatpush.msra.mxu0 0.0
      %2284 = vmatpush.msra.mxu0 0.0
      %2285 = vmatpush.msra.mxu0 0.0
      %v2286 = vand.u32 %v2269, 4294901760
      %2287 = vmatpush.msra.mxu0 %v2286
      %v2288 = vand.u32 %v2245, 4294901760
      %v2289 = vsub.f32 %v2245, %v2288
      %v2290 = vand.u32 %v2289, 4294901760
      %v2291 = vsub.f32 %v2289, %v2290
      %v2292 = vand.u32 %v2291, 4294901760
      %2293 = vmatmul.f32.gmra.mxu0 %v2292
      %v2294 = vpop.f32.mrf.mxu0
      %v2295 = vadd.f32 0.0, %v2294
      %v2296 = vand.u32 %v2248, 4294901760
      %v2297 = vsub.f32 %v2248, %v2296
      %v2298 = vand.u32 %v2297, 4294901760
      %v2299 = vsub.f32 %v2297, %v2298
      %v2300 = vand.u32 %v2299, 4294901760
      %2301 = vmatmul.f32.gmra.mxu0 %v2300
      %v2302 = vpop.f32.mrf.mxu0
      %v2303 = vadd.f32 0.0, %v2302
      %v2304 = vand.u32 %v2251, 4294901760
      %v2305 = vsub.f32 %v2251, %v2304
      %v2306 = vand.u32 %v2305, 4294901760
      %v2307 = vsub.f32 %v2305, %v2306
      %v2308 = vand.u32 %v2307, 4294901760
      %2309 = vmatmul.f32.gmra.mxu0 %v2308
      %v2310 = vpop.f32.mrf.mxu0
      %v2311 = vadd.f32 0.0, %v2310
      %v2312 = vand.u32 %v2254, 4294901760
      %v2313 = vsub.f32 %v2254, %v2312
      %v2314 = vand.u32 %v2313, 4294901760
      %v2315 = vsub.f32 %v2313, %v2314
      %v2316 = vand.u32 %v2315, 4294901760
      %2317 = vmatmul.f32.gmra.mxu0 %v2316
      %v2318 = vpop.f32.mrf.mxu0
      %v2319 = vadd.f32 0.0, %v2318
      %v2320 = vand.u32 %v2257, 4294901760
      %v2321 = vsub.f32 %v2257, %v2320
      %v2322 = vand.u32 %v2321, 4294901760
      %v2323 = vsub.f32 %v2321, %v2322
      %v2324 = vand.u32 %v2323, 4294901760
      %2325 = vmatmul.f32.gmra.mxu0 %v2324
      %v2326 = vpop.f32.mrf.mxu0
      %v2327 = vadd.f32 0.0, %v2326
      %v2328 = vand.u32 %v2260, 4294901760
      %v2329 = vsub.f32 %v2260, %v2328
      %v2330 = vand.u32 %v2329, 4294901760
      %v2331 = vsub.f32 %v2329, %v2330
      %v2332 = vand.u32 %v2331, 4294901760
      %2333 = vmatmul.f32.gmra.mxu0 %v2332
      %v2334 = vpop.f32.mrf.mxu0
      %v2335 = vadd.f32 0.0, %v2334
      %v2336 = vand.u32 %v2263, 4294901760
      %v2337 = vsub.f32 %v2263, %v2336
      %v2338 = vand.u32 %v2337, 4294901760
      %v2339 = vsub.f32 %v2337, %v2338
      %v2340 = vand.u32 %v2339, 4294901760
      %2341 = vmatmul.f32.gmra.mxu0 %v2340
      %v2342 = vpop.f32.mrf.mxu0
      %v2343 = vadd.f32 0.0, %v2342
      %v2344 = vand.u32 %v2266, 4294901760
      %v2345 = vsub.f32 %v2266, %v2344
      %v2346 = vand.u32 %v2345, 4294901760
      %v2347 = vsub.f32 %v2345, %v2346
      %v2348 = vand.u32 %v2347, 4294901760
      %2349 = vmatmul.f32.gmra.mxu0 %v2348
      %v2350 = vpop.f32.mrf.mxu0
      %v2351 = vadd.f32 0.0, %v2350
      %2352 = vdwg.mxu0
      %2353 = vmatpush.msra.mxu0 0.0
      %2354 = vmatpush.msra.mxu0 0.0
      %2355 = vmatpush.msra.mxu0 0.0
      %2356 = vmatpush.msra.mxu0 0.0
      %2357 = vmatpush.msra.mxu0 0.0
      %2358 = vmatpush.msra.mxu0 0.0
      %2359 = vmatpush.msra.mxu0 0.0
      %2360 = vmatpush.msra.mxu0 0.0
      %2361 = vmatpush.msra.mxu0 0.0
      %2362 = vmatpush.msra.mxu0 0.0
      %2363 = vmatpush.msra.mxu0 0.0
      %2364 = vmatpush.msra.mxu0 0.0
      %2365 = vmatpush.msra.mxu0 0.0
      %2366 = vmatpush.msra.mxu0 0.0
      %2367 = vmatpush.msra.mxu0 0.0
      %v2368 = vand.u32 %v2269, 4294901760
      %v2369 = vsub.f32 %v2269, %v2368
      %v2370 = vand.u32 %v2369, 4294901760
      %v2371 = vsub.f32 %v2369, %v2370
      %v2372 = vand.u32 %v2371, 4294901760
      %2373 = vmatpush.msra.mxu0 %v2372
      %v2374 = vand.u32 %v2245, 4294901760
      %2375 = vmatmul.f32.gmra.mxu0 %v2374
      %v2376 = vpop.f32.mrf.mxu0
      %v2377 = vadd.f32 %v2295, %v2376
      %v2378 = vand.u32 %v2248, 4294901760
      %2379 = vmatmul.f32.gmra.mxu0 %v2378
      %v2380 = vpop.f32.mrf.mxu0
      %v2381 = vadd.f32 %v2303, %v2380
      %v2382 = vand.u32 %v2251, 4294901760
      %2383 = vmatmul.f32.gmra.mxu0 %v2382
      %v2384 = vpop.f32.mrf.mxu0
      %v2385 = vadd.f32 %v2311, %v2384
      %v2386 = vand.u32 %v2254, 4294901760
      %2387 = vmatmul.f32.gmra.mxu0 %v2386
      %v2388 = vpop.f32.mrf.mxu0
      %v2389 = vadd.f32 %v2319, %v2388
      %v2390 = vand.u32 %v2257, 4294901760
      %2391 = vmatmul.f32.gmra.mxu0 %v2390
      %v2392 = vpop.f32.mrf.mxu0
      %v2393 = vadd.f32 %v2327, %v2392
      %v2394 = vand.u32 %v2260, 4294901760
      %2395 = vmatmul.f32.gmra.mxu0 %v2394
      %v2396 = vpop.f32.mrf.mxu0
      %v2397 = vadd.f32 %v2335, %v2396
      %v2398 = vand.u32 %v2263, 4294901760
      %2399 = vmatmul.f32.gmra.mxu0 %v2398
      %v2400 = vpop.f32.mrf.mxu0
      %v2401 = vadd.f32 %v2343, %v2400
      %v2402 = vand.u32 %v2266, 4294901760
      %2403 = vmatmul.f32.gmra.mxu0 %v2402
      %v2404 = vpop.f32.mrf.mxu0
      %v2405 = vadd.f32 %v2351, %v2404
      %2406 = vdwg.mxu0
      %2407 = vmatpush.msra.mxu0 0.0
      %2408 = vmatpush.msra.mxu0 0.0
      %2409 = vmatpush.msra.mxu0 0.0
      %2410 = vmatpush.msra.mxu0 0.0
      %2411 = vmatpush.msra.mxu0 0.0
      %2412 = vmatpush.msra.mxu0 0.0
      %2413 = vmatpush.msra.mxu0 0.0
      %2414 = vmatpush.msra.mxu0 0.0
      %2415 = vmatpush.msra.mxu0 0.0
      %2416 = vmatpush.msra.mxu0 0.0
      %2417 = vmatpush.msra.mxu0 0.0
      %2418 = vmatpush.msra.mxu0 0.0
      %2419 = vmatpush.msra.mxu0 0.0
      %2420 = vmatpush.msra.mxu0 0.0
      %2421 = vmatpush.msra.mxu0 0.0
      %v2422 = vand.u32 %v2269, 4294901760
      %v2423 = vsub.f32 %v2269, %v2422
      %2424 = vmatpush.msra.mxu0 %v2423
      %v2425 = vand.u32 %v2245, 4294901760
      %v2426 = vsub.f32 %v2245, %v2425
      %2427 = vmatmul.f32.gmra.mxu0 %v2426
      %v2428 = vpop.f32.mrf.mxu0
      %v2429 = vadd.f32 %v2377, %v2428
      %v2430 = vand.u32 %v2248, 4294901760
      %v2431 = vsub.f32 %v2248, %v2430
      %2432 = vmatmul.f32.gmra.mxu0 %v2431
      %v2433 = vpop.f32.mrf.mxu0
      %v2434 = vadd.f32 %v2381, %v2433
      %v2435 = vand.u32 %v2251, 4294901760
      %v2436 = vsub.f32 %v2251, %v2435
      %2437 = vmatmul.f32.gmra.mxu0 %v2436
      %v2438 = vpop.f32.mrf.mxu0
      %v2439 = vadd.f32 %v2385, %v2438
      %v2440 = vand.u32 %v2254, 4294901760
      %v2441 = vsub.f32 %v2254, %v2440
      %2442 = vmatmul.f32.gmra.mxu0 %v2441
      %v2443 = vpop.f32.mrf.mxu0
      %v2444 = vadd.f32 %v2389, %v2443
      %v2445 = vand.u32 %v2257, 4294901760
      %v2446 = vsub.f32 %v2257, %v2445
      %2447 = vmatmul.f32.gmra.mxu0 %v2446
      %v2448 = vpop.f32.mrf.mxu0
      %v2449 = vadd.f32 %v2393, %v2448
      %v2450 = vand.u32 %v2260, 4294901760
      %v2451 = vsub.f32 %v2260, %v2450
      %2452 = vmatmul.f32.gmra.mxu0 %v2451
      %v2453 = vpop.f32.mrf.mxu0
      %v2454 = vadd.f32 %v2397, %v2453
      %v2455 = vand.u32 %v2263, 4294901760
      %v2456 = vsub.f32 %v2263, %v2455
      %2457 = vmatmul.f32.gmra.mxu0 %v2456
      %v2458 = vpop.f32.mrf.mxu0
      %v2459 = vadd.f32 %v2401, %v2458
      %v2460 = vand.u32 %v2266, 4294901760
      %v2461 = vsub.f32 %v2266, %v2460
      %2462 = vmatmul.f32.gmra.mxu0 %v2461
      %v2463 = vpop.f32.mrf.mxu0
      %v2464 = vadd.f32 %v2405, %v2463
      %2465 = vdwg.mxu0
      %2466 = vmatpush.msra.mxu0 0.0
      %2467 = vmatpush.msra.mxu0 0.0
      %2468 = vmatpush.msra.mxu0 0.0
      %2469 = vmatpush.msra.mxu0 0.0
      %2470 = vmatpush.msra.mxu0 0.0
      %2471 = vmatpush.msra.mxu0 0.0
      %2472 = vmatpush.msra.mxu0 0.0
      %2473 = vmatpush.msra.mxu0 0.0
      %2474 = vmatpush.msra.mxu0 0.0
      %2475 = vmatpush.msra.mxu0 0.0
      %2476 = vmatpush.msra.mxu0 0.0
      %2477 = vmatpush.msra.mxu0 0.0
      %2478 = vmatpush.msra.mxu0 0.0
      %2479 = vmatpush.msra.mxu0 0.0
      %2480 = vmatpush.msra.mxu0 0.0
      %v2481 = vand.u32 %v2269, 4294901760
      %2482 = vmatpush.msra.mxu0 %v2481
      %v2483 = vand.u32 %v2245, 4294901760
      %v2484 = vsub.f32 %v2245, %v2483
      %v2485 = vand.u32 %v2484, 4294901760
      %2486 = vmatmul.f32.gmra.mxu0 %v2485
      %v2487 = vpop.f32.mrf.mxu0
      %v2488 = vadd.f32 %v2429, %v2487
      %v2489 = vand.u32 %v2248, 4294901760
      %v2490 = vsub.f32 %v2248, %v2489
      %v2491 = vand.u32 %v2490, 4294901760
      %2492 = vmatmul.f32.gmra.mxu0 %v2491
      %v2493 = vpop.f32.mrf.mxu0
      %v2494 = vadd.f32 %v2434, %v2493
      %v2495 = vand.u32 %v2251, 4294901760
      %v2496 = vsub.f32 %v2251, %v2495
      %v2497 = vand.u32 %v2496, 4294901760
      %2498 = vmatmul.f32.gmra.mxu0 %v2497
      %v2499 = vpop.f32.mrf.mxu0
      %v2500 = vadd.f32 %v2439, %v2499
      %v2501 = vand.u32 %v2254, 4294901760
      %v2502 = vsub.f32 %v2254, %v2501
      %v2503 = vand.u32 %v2502, 4294901760
      %2504 = vmatmul.f32.gmra.mxu0 %v2503
      %v2505 = vpop.f32.mrf.mxu0
      %v2506 = vadd.f32 %v2444, %v2505
      %v2507 = vand.u32 %v2257, 4294901760
      %v2508 = vsub.f32 %v2257, %v2507
      %v2509 = vand.u32 %v2508, 4294901760
      %2510 = vmatmul.f32.gmra.mxu0 %v2509
      %v2511 = vpop.f32.mrf.mxu0
      %v2512 = vadd.f32 %v2449, %v2511
      %v2513 = vand.u32 %v2260, 4294901760
      %v2514 = vsub.f32 %v2260, %v2513
      %v2515 = vand.u32 %v2514, 4294901760
      %2516 = vmatmul.f32.gmra.mxu0 %v2515
      %v2517 = vpop.f32.mrf.mxu0
      %v2518 = vadd.f32 %v2454, %v2517
      %v2519 = vand.u32 %v2263, 4294901760
      %v2520 = vsub.f32 %v2263, %v2519
      %v2521 = vand.u32 %v2520, 4294901760
      %2522 = vmatmul.f32.gmra.mxu0 %v2521
      %v2523 = vpop.f32.mrf.mxu0
      %v2524 = vadd.f32 %v2459, %v2523
      %v2525 = vand.u32 %v2266, 4294901760
      %v2526 = vsub.f32 %v2266, %v2525
      %v2527 = vand.u32 %v2526, 4294901760
      %2528 = vmatmul.f32.gmra.mxu0 %v2527
      %v2529 = vpop.f32.mrf.mxu0
      %v2530 = vadd.f32 %v2464, %v2529
      %2531 = vdwg.mxu0
      %2532 = vmatpush.msra.mxu0 0.0
      %2533 = vmatpush.msra.mxu0 0.0
      %2534 = vmatpush.msra.mxu0 0.0
      %2535 = vmatpush.msra.mxu0 0.0
      %2536 = vmatpush.msra.mxu0 0.0
      %2537 = vmatpush.msra.mxu0 0.0
      %2538 = vmatpush.msra.mxu0 0.0
      %2539 = vmatpush.msra.mxu0 0.0
      %2540 = vmatpush.msra.mxu0 0.0
      %2541 = vmatpush.msra.mxu0 0.0
      %2542 = vmatpush.msra.mxu0 0.0
      %2543 = vmatpush.msra.mxu0 0.0
      %2544 = vmatpush.msra.mxu0 0.0
      %2545 = vmatpush.msra.mxu0 0.0
      %2546 = vmatpush.msra.mxu0 0.0
      %v2547 = vand.u32 %v2269, 4294901760
      %v2548 = vsub.f32 %v2269, %v2547
      %v2549 = vand.u32 %v2548, 4294901760
      %2550 = vmatpush.msra.mxu0 %v2549
      %v2551 = vand.u32 %v2245, 4294901760
      %2552 = vmatmul.f32.gmra.mxu0 %v2551
      %v2553 = vpop.f32.mrf.mxu0
      %v2554 = vadd.f32 %v2488, %v2553
      %v2555 = vand.u32 %v2248, 4294901760
      %2556 = vmatmul.f32.gmra.mxu0 %v2555
      %v2557 = vpop.f32.mrf.mxu0
      %v2558 = vadd.f32 %v2494, %v2557
      %v2559 = vand.u32 %v2251, 4294901760
      %2560 = vmatmul.f32.gmra.mxu0 %v2559
      %v2561 = vpop.f32.mrf.mxu0
      %v2562 = vadd.f32 %v2500, %v2561
      %v2563 = vand.u32 %v2254, 4294901760
      %2564 = vmatmul.f32.gmra.mxu0 %v2563
      %v2565 = vpop.f32.mrf.mxu0
      %v2566 = vadd.f32 %v2506, %v2565
      %v2567 = vand.u32 %v2257, 4294901760
      %2568 = vmatmul.f32.gmra.mxu0 %v2567
      %v2569 = vpop.f32.mrf.mxu0
      %v2570 = vadd.f32 %v2512, %v2569
      %v2571 = vand.u32 %v2260, 4294901760
      %2572 = vmatmul.f32.gmra.mxu0 %v2571
      %v2573 = vpop.f32.mrf.mxu0
      %v2574 = vadd.f32 %v2518, %v2573
      %v2575 = vand.u32 %v2263, 4294901760
      %2576 = vmatmul.f32.gmra.mxu0 %v2575
      %v2577 = vpop.f32.mrf.mxu0
      %v2578 = vadd.f32 %v2524, %v2577
      %v2579 = vand.u32 %v2266, 4294901760
      %2580 = vmatmul.f32.gmra.mxu0 %v2579
      %v2581 = vpop.f32.mrf.mxu0
      %v2582 = vadd.f32 %v2530, %v2581
      %2583 = vdwg.mxu0
      %2584 = vmatpush.msra.mxu0 0.0
      %2585 = vmatpush.msra.mxu0 0.0
      %2586 = vmatpush.msra.mxu0 0.0
      %2587 = vmatpush.msra.mxu0 0.0
      %2588 = vmatpush.msra.mxu0 0.0
      %2589 = vmatpush.msra.mxu0 0.0
      %2590 = vmatpush.msra.mxu0 0.0
      %2591 = vmatpush.msra.mxu0 0.0
      %2592 = vmatpush.msra.mxu0 0.0
      %2593 = vmatpush.msra.mxu0 0.0
      %2594 = vmatpush.msra.mxu0 0.0
      %2595 = vmatpush.msra.mxu0 0.0
      %2596 = vmatpush.msra.mxu0 0.0
      %2597 = vmatpush.msra.mxu0 0.0
      %2598 = vmatpush.msra.mxu0 0.0
      %v2599 = vand.u32 %v2269, 4294901760
      %2600 = vmatpush.msra.mxu0 %v2599
      %v2601 = vand.u32 %v2245, 4294901760
      %2602 = vmatmul.f32.gmra.mxu0 %v2601
      %v2603 = vpop.f32.mrf.mxu0
      %v2604 = vadd.f32 %v2554, %v2603
      %v2605 = vand.u32 %v2248, 4294901760
      %2606 = vmatmul.f32.gmra.mxu0 %v2605
      %v2607 = vpop.f32.mrf.mxu0
      %v2608 = vadd.f32 %v2558, %v2607
      %v2609 = vand.u32 %v2251, 4294901760
      %2610 = vmatmul.f32.gmra.mxu0 %v2609
      %v2611 = vpop.f32.mrf.mxu0
      %v2612 = vadd.f32 %v2562, %v2611
      %v2613 = vand.u32 %v2254, 4294901760
      %2614 = vmatmul.f32.gmra.mxu0 %v2613
      %v2615 = vpop.f32.mrf.mxu0
      %v2616 = vadd.f32 %v2566, %v2615
      %v2617 = vand.u32 %v2257, 4294901760
      %2618 = vmatmul.f32.gmra.mxu0 %v2617
      %v2619 = vpop.f32.mrf.mxu0
      %v2620 = vadd.f32 %v2570, %v2619
      %v2621 = vand.u32 %v2260, 4294901760
      %2622 = vmatmul.f32.gmra.mxu0 %v2621
      %v2623 = vpop.f32.mrf.mxu0
      %v2624 = vadd.f32 %v2574, %v2623
      %v2625 = vand.u32 %v2263, 4294901760
      %2626 = vmatmul.f32.gmra.mxu0 %v2625
      %v2627 = vpop.f32.mrf.mxu0
      %v2628 = vadd.f32 %v2578, %v2627
      %v2629 = vand.u32 %v2266, 4294901760
      %2630 = vmatmul.f32.gmra.mxu0 %v2629
      %v2631 = vpop.f32.mrf.mxu0
      %v2632 = vadd.f32 %v2582, %v2631
      %2633 = vdwg.mxu0
      %v2634 = vadd.f32 %v2226, %v2604
      %v2635 = vadd.f32 %v2227, %v2608
      %v2636 = vadd.f32 %v2228, %v2612
      %v2637 = vadd.f32 %v2229, %v2616
      %v2638 = vadd.f32 %v2230, %v2620
      %v2639 = vadd.f32 %v2231, %v2624
      %v2640 = vadd.f32 %v2232, %v2628
      %v2641 = vadd.f32 %v2233, %v2632
      %v2642 = vld [vmem:[%s575 + $0x1] sm:$0xff]
      %v2643 = vld [vmem:[%s575 + $0x11] sm:$0xff]
      %v2644 = vld [vmem:[%s575 + $0x21] sm:$0xff]
      %v2645 = vld [vmem:[%s575 + $0x31] sm:$0xff]
      %v2646 = vld [vmem:[%s575 + $0x41] sm:$0xff]
      %v2647 = vld [vmem:[%s575 + $0x51] sm:$0xff]
      %v2648 = vld [vmem:[%s575 + $0x61] sm:$0xff]
      %v2649 = vld [vmem:[%s575 + $0x71] sm:$0xff]
      %s2650 = scalar_lea.vmem %s6, 20
      %v2651 = vld [vmem:[%s2650] sm:$0xf]
      %v2653 = vsel %vm610, %v2642, 0
      %v2656 = vsel %vm610, %v2643, 0
      %v2659 = vsel %vm610, %v2644, 0
      %v2662 = vsel %vm610, %v2645, 0
      %v2665 = vsel %vm610, %v2646, 0
      %v2668 = vsel %vm610, %v2647, 0
      %v2671 = vsel %vm610, %v2648, 0
      %v2674 = vsel %vm610, %v2649, 0
      %v2677 = vsel %vm635, %v2651, 0
      %2679 = vmatpush.msra.mxu0 0.0
      %2680 = vmatpush.msra.mxu0 0.0
      %2681 = vmatpush.msra.mxu0 0.0
      %2682 = vmatpush.msra.mxu0 0.0
      %2683 = vmatpush.msra.mxu0 0.0
      %2684 = vmatpush.msra.mxu0 0.0
      %2685 = vmatpush.msra.mxu0 0.0
      %2686 = vmatpush.msra.mxu0 0.0
      %2687 = vmatpush.msra.mxu0 0.0
      %2688 = vmatpush.msra.mxu0 0.0
      %2689 = vmatpush.msra.mxu0 0.0
      %2690 = vmatpush.msra.mxu0 0.0
      %2691 = vmatpush.msra.mxu0 0.0
      %2692 = vmatpush.msra.mxu0 0.0
      %2693 = vmatpush.msra.mxu0 0.0
      %v2694 = vand.u32 %v2677, 4294901760
      %2695 = vmatpush.msra.mxu0 %v2694
      %v2696 = vand.u32 %v2653, 4294901760
      %v2697 = vsub.f32 %v2653, %v2696
      %v2698 = vand.u32 %v2697, 4294901760
      %v2699 = vsub.f32 %v2697, %v2698
      %v2700 = vand.u32 %v2699, 4294901760
      %2701 = vmatmul.f32.gmra.mxu0 %v2700
      %v2702 = vpop.f32.mrf.mxu0
      %v2703 = vadd.f32 0.0, %v2702
      %v2704 = vand.u32 %v2656, 4294901760
      %v2705 = vsub.f32 %v2656, %v2704
      %v2706 = vand.u32 %v2705, 4294901760
      %v2707 = vsub.f32 %v2705, %v2706
      %v2708 = vand.u32 %v2707, 4294901760
      %2709 = vmatmul.f32.gmra.mxu0 %v2708
      %v2710 = vpop.f32.mrf.mxu0
      %v2711 = vadd.f32 0.0, %v2710
      %v2712 = vand.u32 %v2659, 4294901760
      %v2713 = vsub.f32 %v2659, %v2712
      %v2714 = vand.u32 %v2713, 4294901760
      %v2715 = vsub.f32 %v2713, %v2714
      %v2716 = vand.u32 %v2715, 4294901760
      %2717 = vmatmul.f32.gmra.mxu0 %v2716
      %v2718 = vpop.f32.mrf.mxu0
      %v2719 = vadd.f32 0.0, %v2718
      %v2720 = vand.u32 %v2662, 4294901760
      %v2721 = vsub.f32 %v2662, %v2720
      %v2722 = vand.u32 %v2721, 4294901760
      %v2723 = vsub.f32 %v2721, %v2722
      %v2724 = vand.u32 %v2723, 4294901760
      %2725 = vmatmul.f32.gmra.mxu0 %v2724
      %v2726 = vpop.f32.mrf.mxu0
      %v2727 = vadd.f32 0.0, %v2726
      %v2728 = vand.u32 %v2665, 4294901760
      %v2729 = vsub.f32 %v2665, %v2728
      %v2730 = vand.u32 %v2729, 4294901760
      %v2731 = vsub.f32 %v2729, %v2730
      %v2732 = vand.u32 %v2731, 4294901760
      %2733 = vmatmul.f32.gmra.mxu0 %v2732
      %v2734 = vpop.f32.mrf.mxu0
      %v2735 = vadd.f32 0.0, %v2734
      %v2736 = vand.u32 %v2668, 4294901760
      %v2737 = vsub.f32 %v2668, %v2736
      %v2738 = vand.u32 %v2737, 4294901760
      %v2739 = vsub.f32 %v2737, %v2738
      %v2740 = vand.u32 %v2739, 4294901760
      %2741 = vmatmul.f32.gmra.mxu0 %v2740
      %v2742 = vpop.f32.mrf.mxu0
      %v2743 = vadd.f32 0.0, %v2742
      %v2744 = vand.u32 %v2671, 4294901760
      %v2745 = vsub.f32 %v2671, %v2744
      %v2746 = vand.u32 %v2745, 4294901760
      %v2747 = vsub.f32 %v2745, %v2746
      %v2748 = vand.u32 %v2747, 4294901760
      %2749 = vmatmul.f32.gmra.mxu0 %v2748
      %v2750 = vpop.f32.mrf.mxu0
      %v2751 = vadd.f32 0.0, %v2750
      %v2752 = vand.u32 %v2674, 4294901760
      %v2753 = vsub.f32 %v2674, %v2752
      %v2754 = vand.u32 %v2753, 4294901760
      %v2755 = vsub.f32 %v2753, %v2754
      %v2756 = vand.u32 %v2755, 4294901760
      %2757 = vmatmul.f32.gmra.mxu0 %v2756
      %v2758 = vpop.f32.mrf.mxu0
      %v2759 = vadd.f32 0.0, %v2758
      %2760 = vdwg.mxu0
      %2761 = vmatpush.msra.mxu0 0.0
      %2762 = vmatpush.msra.mxu0 0.0
      %2763 = vmatpush.msra.mxu0 0.0
      %2764 = vmatpush.msra.mxu0 0.0
      %2765 = vmatpush.msra.mxu0 0.0
      %2766 = vmatpush.msra.mxu0 0.0
      %2767 = vmatpush.msra.mxu0 0.0
      %2768 = vmatpush.msra.mxu0 0.0
      %2769 = vmatpush.msra.mxu0 0.0
      %2770 = vmatpush.msra.mxu0 0.0
      %2771 = vmatpush.msra.mxu0 0.0
      %2772 = vmatpush.msra.mxu0 0.0
      %2773 = vmatpush.msra.mxu0 0.0
      %2774 = vmatpush.msra.mxu0 0.0
      %2775 = vmatpush.msra.mxu0 0.0
      %v2776 = vand.u32 %v2677, 4294901760
      %v2777 = vsub.f32 %v2677, %v2776
      %v2778 = vand.u32 %v2777, 4294901760
      %v2779 = vsub.f32 %v2777, %v2778
      %v2780 = vand.u32 %v2779, 4294901760
      %2781 = vmatpush.msra.mxu0 %v2780
      %v2782 = vand.u32 %v2653, 4294901760
      %2783 = vmatmul.f32.gmra.mxu0 %v2782
      %v2784 = vpop.f32.mrf.mxu0
      %v2785 = vadd.f32 %v2703, %v2784
      %v2786 = vand.u32 %v2656, 4294901760
      %2787 = vmatmul.f32.gmra.mxu0 %v2786
      %v2788 = vpop.f32.mrf.mxu0
      %v2789 = vadd.f32 %v2711, %v2788
      %v2790 = vand.u32 %v2659, 4294901760
      %2791 = vmatmul.f32.gmra.mxu0 %v2790
      %v2792 = vpop.f32.mrf.mxu0
      %v2793 = vadd.f32 %v2719, %v2792
      %v2794 = vand.u32 %v2662, 4294901760
      %2795 = vmatmul.f32.gmra.mxu0 %v2794
      %v2796 = vpop.f32.mrf.mxu0
      %v2797 = vadd.f32 %v2727, %v2796
      %v2798 = vand.u32 %v2665, 4294901760
      %2799 = vmatmul.f32.gmra.mxu0 %v2798
      %v2800 = vpop.f32.mrf.mxu0
      %v2801 = vadd.f32 %v2735, %v2800
      %v2802 = vand.u32 %v2668, 4294901760
      %2803 = vmatmul.f32.gmra.mxu0 %v2802
      %v2804 = vpop.f32.mrf.mxu0
      %v2805 = vadd.f32 %v2743, %v2804
      %v2806 = vand.u32 %v2671, 4294901760
      %2807 = vmatmul.f32.gmra.mxu0 %v2806
      %v2808 = vpop.f32.mrf.mxu0
      %v2809 = vadd.f32 %v2751, %v2808
      %v2810 = vand.u32 %v2674, 4294901760
      %2811 = vmatmul.f32.gmra.mxu0 %v2810
      %v2812 = vpop.f32.mrf.mxu0
      %v2813 = vadd.f32 %v2759, %v2812
      %2814 = vdwg.mxu0
      %2815 = vmatpush.msra.mxu0 0.0
      %2816 = vmatpush.msra.mxu0 0.0
      %2817 = vmatpush.msra.mxu0 0.0
      %2818 = vmatpush.msra.mxu0 0.0
      %2819 = vmatpush.msra.mxu0 0.0
      %2820 = vmatpush.msra.mxu0 0.0
      %2821 = vmatpush.msra.mxu0 0.0
      %2822 = vmatpush.msra.mxu0 0.0
      %2823 = vmatpush.msra.mxu0 0.0
      %2824 = vmatpush.msra.mxu0 0.0
      %2825 = vmatpush.msra.mxu0 0.0
      %2826 = vmatpush.msra.mxu0 0.0
      %2827 = vmatpush.msra.mxu0 0.0
      %2828 = vmatpush.msra.mxu0 0.0
      %2829 = vmatpush.msra.mxu0 0.0
      %v2830 = vand.u32 %v2677, 4294901760
      %v2831 = vsub.f32 %v2677, %v2830
      %2832 = vmatpush.msra.mxu0 %v2831
      %v2833 = vand.u32 %v2653, 4294901760
      %v2834 = vsub.f32 %v2653, %v2833
      %2835 = vmatmul.f32.gmra.mxu0 %v2834
      %v2836 = vpop.f32.mrf.mxu0
      %v2837 = vadd.f32 %v2785, %v2836
      %v2838 = vand.u32 %v2656, 4294901760
      %v2839 = vsub.f32 %v2656, %v2838
      %2840 = vmatmul.f32.gmra.mxu0 %v2839
      %v2841 = vpop.f32.mrf.mxu0
      %v2842 = vadd.f32 %v2789, %v2841
      %v2843 = vand.u32 %v2659, 4294901760
      %v2844 = vsub.f32 %v2659, %v2843
      %2845 = vmatmul.f32.gmra.mxu0 %v2844
      %v2846 = vpop.f32.mrf.mxu0
      %v2847 = vadd.f32 %v2793, %v2846
      %v2848 = vand.u32 %v2662, 4294901760
      %v2849 = vsub.f32 %v2662, %v2848
      %2850 = vmatmul.f32.gmra.mxu0 %v2849
      %v2851 = vpop.f32.mrf.mxu0
      %v2852 = vadd.f32 %v2797, %v2851
      %v2853 = vand.u32 %v2665, 4294901760
      %v2854 = vsub.f32 %v2665, %v2853
      %2855 = vmatmul.f32.gmra.mxu0 %v2854
      %v2856 = vpop.f32.mrf.mxu0
      %v2857 = vadd.f32 %v2801, %v2856
      %v2858 = vand.u32 %v2668, 4294901760
      %v2859 = vsub.f32 %v2668, %v2858
      %2860 = vmatmul.f32.gmra.mxu0 %v2859
      %v2861 = vpop.f32.mrf.mxu0
      %v2862 = vadd.f32 %v2805, %v2861
      %v2863 = vand.u32 %v2671, 4294901760
      %v2864 = vsub.f32 %v2671, %v2863
      %2865 = vmatmul.f32.gmra.mxu0 %v2864
      %v2866 = vpop.f32.mrf.mxu0
      %v2867 = vadd.f32 %v2809, %v2866
      %v2868 = vand.u32 %v2674, 4294901760
      %v2869 = vsub.f32 %v2674, %v2868
      %2870 = vmatmul.f32.gmra.mxu0 %v2869
      %v2871 = vpop.f32.mrf.mxu0
      %v2872 = vadd.f32 %v2813, %v2871
      %2873 = vdwg.mxu0
      %2874 = vmatpush.msra.mxu0 0.0
      %2875 = vmatpush.msra.mxu0 0.0
      %2876 = vmatpush.msra.mxu0 0.0
      %2877 = vmatpush.msra.mxu0 0.0
      %2878 = vmatpush.msra.mxu0 0.0
      %2879 = vmatpush.msra.mxu0 0.0
      %2880 = vmatpush.msra.mxu0 0.0
      %2881 = vmatpush.msra.mxu0 0.0
      %2882 = vmatpush.msra.mxu0 0.0
      %2883 = vmatpush.msra.mxu0 0.0
      %2884 = vmatpush.msra.mxu0 0.0
      %2885 = vmatpush.msra.mxu0 0.0
      %2886 = vmatpush.msra.mxu0 0.0
      %2887 = vmatpush.msra.mxu0 0.0
      %2888 = vmatpush.msra.mxu0 0.0
      %v2889 = vand.u32 %v2677, 4294901760
      %2890 = vmatpush.msra.mxu0 %v2889
      %v2891 = vand.u32 %v2653, 4294901760
      %v2892 = vsub.f32 %v2653, %v2891
      %v2893 = vand.u32 %v2892, 4294901760
      %2894 = vmatmul.f32.gmra.mxu0 %v2893
      %v2895 = vpop.f32.mrf.mxu0
      %v2896 = vadd.f32 %v2837, %v2895
      %v2897 = vand.u32 %v2656, 4294901760
      %v2898 = vsub.f32 %v2656, %v2897
      %v2899 = vand.u32 %v2898, 4294901760
      %2900 = vmatmul.f32.gmra.mxu0 %v2899
      %v2901 = vpop.f32.mrf.mxu0
      %v2902 = vadd.f32 %v2842, %v2901
      %v2903 = vand.u32 %v2659, 4294901760
      %v2904 = vsub.f32 %v2659, %v2903
      %v2905 = vand.u32 %v2904, 4294901760
      %2906 = vmatmul.f32.gmra.mxu0 %v2905
      %v2907 = vpop.f32.mrf.mxu0
      %v2908 = vadd.f32 %v2847, %v2907
      %v2909 = vand.u32 %v2662, 4294901760
      %v2910 = vsub.f32 %v2662, %v2909
      %v2911 = vand.u32 %v2910, 4294901760
      %2912 = vmatmul.f32.gmra.mxu0 %v2911
      %v2913 = vpop.f32.mrf.mxu0
      %v2914 = vadd.f32 %v2852, %v2913
      %v2915 = vand.u32 %v2665, 4294901760
      %v2916 = vsub.f32 %v2665, %v2915
      %v2917 = vand.u32 %v2916, 4294901760
      %2918 = vmatmul.f32.gmra.mxu0 %v2917
      %v2919 = vpop.f32.mrf.mxu0
      %v2920 = vadd.f32 %v2857, %v2919
      %v2921 = vand.u32 %v2668, 4294901760
      %v2922 = vsub.f32 %v2668, %v2921
      %v2923 = vand.u32 %v2922, 4294901760
      %2924 = vmatmul.f32.gmra.mxu0 %v2923
      %v2925 = vpop.f32.mrf.mxu0
      %v2926 = vadd.f32 %v2862, %v2925
      %v2927 = vand.u32 %v2671, 4294901760
      %v2928 = vsub.f32 %v2671, %v2927
      %v2929 = vand.u32 %v2928, 4294901760
      %2930 = vmatmul.f32.gmra.mxu0 %v2929
      %v2931 = vpop.f32.mrf.mxu0
      %v2932 = vadd.f32 %v2867, %v2931
      %v2933 = vand.u32 %v2674, 4294901760
      %v2934 = vsub.f32 %v2674, %v2933
      %v2935 = vand.u32 %v2934, 4294901760
      %2936 = vmatmul.f32.gmra.mxu0 %v2935
      %v2937 = vpop.f32.mrf.mxu0
      %v2938 = vadd.f32 %v2872, %v2937
      %2939 = vdwg.mxu0
      %2940 = vmatpush.msra.mxu0 0.0
      %2941 = vmatpush.msra.mxu0 0.0
      %2942 = vmatpush.msra.mxu0 0.0
      %2943 = vmatpush.msra.mxu0 0.0
      %2944 = vmatpush.msra.mxu0 0.0
      %2945 = vmatpush.msra.mxu0 0.0
      %2946 = vmatpush.msra.mxu0 0.0
      %2947 = vmatpush.msra.mxu0 0.0
      %2948 = vmatpush.msra.mxu0 0.0
      %2949 = vmatpush.msra.mxu0 0.0
      %2950 = vmatpush.msra.mxu0 0.0
      %2951 = vmatpush.msra.mxu0 0.0
      %2952 = vmatpush.msra.mxu0 0.0
      %2953 = vmatpush.msra.mxu0 0.0
      %2954 = vmatpush.msra.mxu0 0.0
      %v2955 = vand.u32 %v2677, 4294901760
      %v2956 = vsub.f32 %v2677, %v2955
      %v2957 = vand.u32 %v2956, 4294901760
      %2958 = vmatpush.msra.mxu0 %v2957
      %v2959 = vand.u32 %v2653, 4294901760
      %2960 = vmatmul.f32.gmra.mxu0 %v2959
      %v2961 = vpop.f32.mrf.mxu0
      %v2962 = vadd.f32 %v2896, %v2961
      %v2963 = vand.u32 %v2656, 4294901760
      %2964 = vmatmul.f32.gmra.mxu0 %v2963
      %v2965 = vpop.f32.mrf.mxu0
      %v2966 = vadd.f32 %v2902, %v2965
      %v2967 = vand.u32 %v2659, 4294901760
      %2968 = vmatmul.f32.gmra.mxu0 %v2967
      %v2969 = vpop.f32.mrf.mxu0
      %v2970 = vadd.f32 %v2908, %v2969
      %v2971 = vand.u32 %v2662, 4294901760
      %2972 = vmatmul.f32.gmra.mxu0 %v2971
      %v2973 = vpop.f32.mrf.mxu0
      %v2974 = vadd.f32 %v2914, %v2973
      %v2975 = vand.u32 %v2665, 4294901760
      %2976 = vmatmul.f32.gmra.mxu0 %v2975
      %v2977 = vpop.f32.mrf.mxu0
      %v2978 = vadd.f32 %v2920, %v2977
      %v2979 = vand.u32 %v2668, 4294901760
      %2980 = vmatmul.f32.gmra.mxu0 %v2979
      %v2981 = vpop.f32.mrf.mxu0
      %v2982 = vadd.f32 %v2926, %v2981
      %v2983 = vand.u32 %v2671, 4294901760
      %2984 = vmatmul.f32.gmra.mxu0 %v2983
      %v2985 = vpop.f32.mrf.mxu0
      %v2986 = vadd.f32 %v2932, %v2985
      %v2987 = vand.u32 %v2674, 4294901760
      %2988 = vmatmul.f32.gmra.mxu0 %v2987
      %v2989 = vpop.f32.mrf.mxu0
      %v2990 = vadd.f32 %v2938, %v2989
      %2991 = vdwg.mxu0
      %2992 = vmatpush.msra.mxu0 0.0
      %2993 = vmatpush.msra.mxu0 0.0
      %2994 = vmatpush.msra.mxu0 0.0
      %2995 = vmatpush.msra.mxu0 0.0
      %2996 = vmatpush.msra.mxu0 0.0
      %2997 = vmatpush.msra.mxu0 0.0
      %2998 = vmatpush.msra.mxu0 0.0
      %2999 = vmatpush.msra.mxu0 0.0
      %3000 = vmatpush.msra.mxu0 0.0
      %3001 = vmatpush.msra.mxu0 0.0
      %3002 = vmatpush.msra.mxu0 0.0
      %3003 = vmatpush.msra.mxu0 0.0
      %3004 = vmatpush.msra.mxu0 0.0
      %3005 = vmatpush.msra.mxu0 0.0
      %3006 = vmatpush.msra.mxu0 0.0
      %v3007 = vand.u32 %v2677, 4294901760
      %3008 = vmatpush.msra.mxu0 %v3007
      %v3009 = vand.u32 %v2653, 4294901760
      %3010 = vmatmul.f32.gmra.mxu0 %v3009
      %v3011 = vpop.f32.mrf.mxu0
      %v3012 = vadd.f32 %v2962, %v3011
      %v3013 = vand.u32 %v2656, 4294901760
      %3014 = vmatmul.f32.gmra.mxu0 %v3013
      %v3015 = vpop.f32.mrf.mxu0
      %v3016 = vadd.f32 %v2966, %v3015
      %v3017 = vand.u32 %v2659, 4294901760
      %3018 = vmatmul.f32.gmra.mxu0 %v3017
      %v3019 = vpop.f32.mrf.mxu0
      %v3020 = vadd.f32 %v2970, %v3019
      %v3021 = vand.u32 %v2662, 4294901760
      %3022 = vmatmul.f32.gmra.mxu0 %v3021
      %v3023 = vpop.f32.mrf.mxu0
      %v3024 = vadd.f32 %v2974, %v3023
      %v3025 = vand.u32 %v2665, 4294901760
      %3026 = vmatmul.f32.gmra.mxu0 %v3025
      %v3027 = vpop.f32.mrf.mxu0
      %v3028 = vadd.f32 %v2978, %v3027
      %v3029 = vand.u32 %v2668, 4294901760
      %3030 = vmatmul.f32.gmra.mxu0 %v3029
      %v3031 = vpop.f32.mrf.mxu0
      %v3032 = vadd.f32 %v2982, %v3031
      %v3033 = vand.u32 %v2671, 4294901760
      %3034 = vmatmul.f32.gmra.mxu0 %v3033
      %v3035 = vpop.f32.mrf.mxu0
      %v3036 = vadd.f32 %v2986, %v3035
      %v3037 = vand.u32 %v2674, 4294901760
      %3038 = vmatmul.f32.gmra.mxu0 %v3037
      %v3039 = vpop.f32.mrf.mxu0
      %v3040 = vadd.f32 %v2990, %v3039
      %3041 = vdwg.mxu0
      %v3042 = vadd.f32 %v2634, %v3012
      %v3043 = vadd.f32 %v2635, %v3016
      %v3044 = vadd.f32 %v2636, %v3020
      %v3045 = vadd.f32 %v2637, %v3024
      %v3046 = vadd.f32 %v2638, %v3028
      %v3047 = vadd.f32 %v2639, %v3032
      %v3048 = vadd.f32 %v2640, %v3036
      %v3049 = vadd.f32 %v2641, %v3040
      %v3050 = vld [vmem:[%s533] sm:$0xff]
      %s3051 = scalar_lea.vmem %s516, 16
      %v3052 = vld [vmem:[%s3051] sm:$0xff]
      %v3053 = vld [vmem:[%s3051 + $0x10] sm:$0xff]
      %v3054 = vld [vmem:[%s3051 + $0x20] sm:$0xff]
      %v3055 = vld [vmem:[%s3051 + $0x30] sm:$0xff]
      %v3056 = vld [vmem:[%s3051 + $0x40] sm:$0xff]
      %v3057 = vld [vmem:[%s3051 + $0x50] sm:$0xff]
      %v3058 = vld [vmem:[%s3051 + $0x60] sm:$0xff]
      %s3059 = scalar_lea.vmem %s6, 24
      %v3060 = vld [vmem:[%s3059] sm:$0xf]
      %v3062 = vsel %vm610, %v3052, 0
      %v3065 = vsel %vm610, %v3053, 0
      %v3068 = vsel %vm610, %v3054, 0
      %v3071 = vsel %vm610, %v3055, 0
      %v3074 = vsel %vm610, %v3056, 0
      %v3077 = vsel %vm610, %v3057, 0
      %v3080 = vsel %vm610, %v3058, 0
      %v3083 = vsel %vm610, %v3050, 0
      %v3086 = vsel %vm635, %v3060, 0
      %3088 = vmatpush.msra.mxu0 0.0
      %3089 = vmatpush.msra.mxu0 0.0
      %3090 = vmatpush.msra.mxu0 0.0
      %3091 = vmatpush.msra.mxu0 0.0
      %3092 = vmatpush.msra.mxu0 0.0
      %3093 = vmatpush.msra.mxu0 0.0
      %3094 = vmatpush.msra.mxu0 0.0
      %3095 = vmatpush.msra.mxu0 0.0
      %3096 = vmatpush.msra.mxu0 0.0
      %3097 = vmatpush.msra.mxu0 0.0
      %3098 = vmatpush.msra.mxu0 0.0
      %3099 = vmatpush.msra.mxu0 0.0
      %3100 = vmatpush.msra.mxu0 0.0
      %3101 = vmatpush.msra.mxu0 0.0
      %3102 = vmatpush.msra.mxu0 0.0
      %v3103 = vand.u32 %v3086, 4294901760
      %3104 = vmatpush.msra.mxu0 %v3103
      %v3105 = vand.u32 %v3062, 4294901760
      %v3106 = vsub.f32 %v3062, %v3105
      %v3107 = vand.u32 %v3106, 4294901760
      %v3108 = vsub.f32 %v3106, %v3107
      %v3109 = vand.u32 %v3108, 4294901760
      %3110 = vmatmul.f32.gmra.mxu0 %v3109
      %v3111 = vpop.f32.mrf.mxu0
      %v3112 = vadd.f32 0.0, %v3111
      %v3113 = vand.u32 %v3065, 4294901760
      %v3114 = vsub.f32 %v3065, %v3113
      %v3115 = vand.u32 %v3114, 4294901760
      %v3116 = vsub.f32 %v3114, %v3115
      %v3117 = vand.u32 %v3116, 4294901760
      %3118 = vmatmul.f32.gmra.mxu0 %v3117
      %v3119 = vpop.f32.mrf.mxu0
      %v3120 = vadd.f32 0.0, %v3119
      %v3121 = vand.u32 %v3068, 4294901760
      %v3122 = vsub.f32 %v3068, %v3121
      %v3123 = vand.u32 %v3122, 4294901760
      %v3124 = vsub.f32 %v3122, %v3123
      %v3125 = vand.u32 %v3124, 4294901760
      %3126 = vmatmul.f32.gmra.mxu0 %v3125
      %v3127 = vpop.f32.mrf.mxu0
      %v3128 = vadd.f32 0.0, %v3127
      %v3129 = vand.u32 %v3071, 4294901760
      %v3130 = vsub.f32 %v3071, %v3129
      %v3131 = vand.u32 %v3130, 4294901760
      %v3132 = vsub.f32 %v3130, %v3131
      %v3133 = vand.u32 %v3132, 4294901760
      %3134 = vmatmul.f32.gmra.mxu0 %v3133
      %v3135 = vpop.f32.mrf.mxu0
      %v3136 = vadd.f32 0.0, %v3135
      %v3137 = vand.u32 %v3074, 4294901760
      %v3138 = vsub.f32 %v3074, %v3137
      %v3139 = vand.u32 %v3138, 4294901760
      %v3140 = vsub.f32 %v3138, %v3139
      %v3141 = vand.u32 %v3140, 4294901760
      %3142 = vmatmul.f32.gmra.mxu0 %v3141
      %v3143 = vpop.f32.mrf.mxu0
      %v3144 = vadd.f32 0.0, %v3143
      %v3145 = vand.u32 %v3077, 4294901760
      %v3146 = vsub.f32 %v3077, %v3145
      %v3147 = vand.u32 %v3146, 4294901760
      %v3148 = vsub.f32 %v3146, %v3147
      %v3149 = vand.u32 %v3148, 4294901760
      %3150 = vmatmul.f32.gmra.mxu0 %v3149
      %v3151 = vpop.f32.mrf.mxu0
      %v3152 = vadd.f32 0.0, %v3151
      %v3153 = vand.u32 %v3080, 4294901760
      %v3154 = vsub.f32 %v3080, %v3153
      %v3155 = vand.u32 %v3154, 4294901760
      %v3156 = vsub.f32 %v3154, %v3155
      %v3157 = vand.u32 %v3156, 4294901760
      %3158 = vmatmul.f32.gmra.mxu0 %v3157
      %v3159 = vpop.f32.mrf.mxu0
      %v3160 = vadd.f32 0.0, %v3159
      %v3161 = vand.u32 %v3083, 4294901760
      %v3162 = vsub.f32 %v3083, %v3161
      %v3163 = vand.u32 %v3162, 4294901760
      %v3164 = vsub.f32 %v3162, %v3163
      %v3165 = vand.u32 %v3164, 4294901760
      %3166 = vmatmul.f32.gmra.mxu0 %v3165
      %v3167 = vpop.f32.mrf.mxu0
      %v3168 = vadd.f32 0.0, %v3167
      %3169 = vdwg.mxu0
      %3170 = vmatpush.msra.mxu0 0.0
      %3171 = vmatpush.msra.mxu0 0.0
      %3172 = vmatpush.msra.mxu0 0.0
      %3173 = vmatpush.msra.mxu0 0.0
      %3174 = vmatpush.msra.mxu0 0.0
      %3175 = vmatpush.msra.mxu0 0.0
      %3176 = vmatpush.msra.mxu0 0.0
      %3177 = vmatpush.msra.mxu0 0.0
      %3178 = vmatpush.msra.mxu0 0.0
      %3179 = vmatpush.msra.mxu0 0.0
      %3180 = vmatpush.msra.mxu0 0.0
      %3181 = vmatpush.msra.mxu0 0.0
      %3182 = vmatpush.msra.mxu0 0.0
      %3183 = vmatpush.msra.mxu0 0.0
      %3184 = vmatpush.msra.mxu0 0.0
      %v3185 = vand.u32 %v3086, 4294901760
      %v3186 = vsub.f32 %v3086, %v3185
      %v3187 = vand.u32 %v3186, 4294901760
      %v3188 = vsub.f32 %v3186, %v3187
      %v3189 = vand.u32 %v3188, 4294901760
      %3190 = vmatpush.msra.mxu0 %v3189
      %v3191 = vand.u32 %v3062, 4294901760
      %3192 = vmatmul.f32.gmra.mxu0 %v3191
      %v3193 = vpop.f32.mrf.mxu0
      %v3194 = vadd.f32 %v3112, %v3193
      %v3195 = vand.u32 %v3065, 4294901760
      %3196 = vmatmul.f32.gmra.mxu0 %v3195
      %v3197 = vpop.f32.mrf.mxu0
      %v3198 = vadd.f32 %v3120, %v3197
      %v3199 = vand.u32 %v3068, 4294901760
      %3200 = vmatmul.f32.gmra.mxu0 %v3199
      %v3201 = vpop.f32.mrf.mxu0
      %v3202 = vadd.f32 %v3128, %v3201
      %v3203 = vand.u32 %v3071, 4294901760
      %3204 = vmatmul.f32.gmra.mxu0 %v3203
      %v3205 = vpop.f32.mrf.mxu0
      %v3206 = vadd.f32 %v3136, %v3205
      %v3207 = vand.u32 %v3074, 4294901760
      %3208 = vmatmul.f32.gmra.mxu0 %v3207
      %v3209 = vpop.f32.mrf.mxu0
      %v3210 = vadd.f32 %v3144, %v3209
      %v3211 = vand.u32 %v3077, 4294901760
      %3212 = vmatmul.f32.gmra.mxu0 %v3211
      %v3213 = vpop.f32.mrf.mxu0
      %v3214 = vadd.f32 %v3152, %v3213
      %v3215 = vand.u32 %v3080, 4294901760
      %3216 = vmatmul.f32.gmra.mxu0 %v3215
      %v3217 = vpop.f32.mrf.mxu0
      %v3218 = vadd.f32 %v3160, %v3217
      %v3219 = vand.u32 %v3083, 4294901760
      %3220 = vmatmul.f32.gmra.mxu0 %v3219
      %v3221 = vpop.f32.mrf.mxu0
      %v3222 = vadd.f32 %v3168, %v3221
      %3223 = vdwg.mxu0
      %3224 = vmatpush.msra.mxu0 0.0
      %3225 = vmatpush.msra.mxu0 0.0
      %3226 = vmatpush.msra.mxu0 0.0
      %3227 = vmatpush.msra.mxu0 0.0
      %3228 = vmatpush.msra.mxu0 0.0
      %3229 = vmatpush.msra.mxu0 0.0
      %3230 = vmatpush.msra.mxu0 0.0
      %3231 = vmatpush.msra.mxu0 0.0
      %3232 = vmatpush.msra.mxu0 0.0
      %3233 = vmatpush.msra.mxu0 0.0
      %3234 = vmatpush.msra.mxu0 0.0
      %3235 = vmatpush.msra.mxu0 0.0
      %3236 = vmatpush.msra.mxu0 0.0
      %3237 = vmatpush.msra.mxu0 0.0
      %3238 = vmatpush.msra.mxu0 0.0
      %v3239 = vand.u32 %v3086, 4294901760
      %v3240 = vsub.f32 %v3086, %v3239
      %3241 = vmatpush.msra.mxu0 %v3240
      %v3242 = vand.u32 %v3062, 4294901760
      %v3243 = vsub.f32 %v3062, %v3242
      %3244 = vmatmul.f32.gmra.mxu0 %v3243
      %v3245 = vpop.f32.mrf.mxu0
      %v3246 = vadd.f32 %v3194, %v3245
      %v3247 = vand.u32 %v3065, 4294901760
      %v3248 = vsub.f32 %v3065, %v3247
      %3249 = vmatmul.f32.gmra.mxu0 %v3248
      %v3250 = vpop.f32.mrf.mxu0
      %v3251 = vadd.f32 %v3198, %v3250
      %v3252 = vand.u32 %v3068, 4294901760
      %v3253 = vsub.f32 %v3068, %v3252
      %3254 = vmatmul.f32.gmra.mxu0 %v3253
      %v3255 = vpop.f32.mrf.mxu0
      %v3256 = vadd.f32 %v3202, %v3255
      %v3257 = vand.u32 %v3071, 4294901760
      %v3258 = vsub.f32 %v3071, %v3257
      %3259 = vmatmul.f32.gmra.mxu0 %v3258
      %v3260 = vpop.f32.mrf.mxu0
      %v3261 = vadd.f32 %v3206, %v3260
      %v3262 = vand.u32 %v3074, 4294901760
      %v3263 = vsub.f32 %v3074, %v3262
      %3264 = vmatmul.f32.gmra.mxu0 %v3263
      %v3265 = vpop.f32.mrf.mxu0
      %v3266 = vadd.f32 %v3210, %v3265
      %v3267 = vand.u32 %v3077, 4294901760
      %v3268 = vsub.f32 %v3077, %v3267
      %3269 = vmatmul.f32.gmra.mxu0 %v3268
      %v3270 = vpop.f32.mrf.mxu0
      %v3271 = vadd.f32 %v3214, %v3270
      %v3272 = vand.u32 %v3080, 4294901760
      %v3273 = vsub.f32 %v3080, %v3272
      %3274 = vmatmul.f32.gmra.mxu0 %v3273
      %v3275 = vpop.f32.mrf.mxu0
      %v3276 = vadd.f32 %v3218, %v3275
      %v3277 = vand.u32 %v3083, 4294901760
      %v3278 = vsub.f32 %v3083, %v3277
      %3279 = vmatmul.f32.gmra.mxu0 %v3278
      %v3280 = vpop.f32.mrf.mxu0
      %v3281 = vadd.f32 %v3222, %v3280
      %3282 = vdwg.mxu0
      %3283 = vmatpush.msra.mxu0 0.0
      %3284 = vmatpush.msra.mxu0 0.0
      %3285 = vmatpush.msra.mxu0 0.0
      %3286 = vmatpush.msra.mxu0 0.0
      %3287 = vmatpush.msra.mxu0 0.0
      %3288 = vmatpush.msra.mxu0 0.0
      %3289 = vmatpush.msra.mxu0 0.0
      %3290 = vmatpush.msra.mxu0 0.0
      %3291 = vmatpush.msra.mxu0 0.0
      %3292 = vmatpush.msra.mxu0 0.0
      %3293 = vmatpush.msra.mxu0 0.0
      %3294 = vmatpush.msra.mxu0 0.0
      %3295 = vmatpush.msra.mxu0 0.0
      %3296 = vmatpush.msra.mxu0 0.0
      %3297 = vmatpush.msra.mxu0 0.0
      %v3298 = vand.u32 %v3086, 4294901760
      %3299 = vmatpush.msra.mxu0 %v3298
      %v3300 = vand.u32 %v3062, 4294901760
      %v3301 = vsub.f32 %v3062, %v3300
      %v3302 = vand.u32 %v3301, 4294901760
      %3303 = vmatmul.f32.gmra.mxu0 %v3302
      %v3304 = vpop.f32.mrf.mxu0
      %v3305 = vadd.f32 %v3246, %v3304
      %v3306 = vand.u32 %v3065, 4294901760
      %v3307 = vsub.f32 %v3065, %v3306
      %v3308 = vand.u32 %v3307, 4294901760
      %3309 = vmatmul.f32.gmra.mxu0 %v3308
      %v3310 = vpop.f32.mrf.mxu0
      %v3311 = vadd.f32 %v3251, %v3310
      %v3312 = vand.u32 %v3068, 4294901760
      %v3313 = vsub.f32 %v3068, %v3312
      %v3314 = vand.u32 %v3313, 4294901760
      %3315 = vmatmul.f32.gmra.mxu0 %v3314
      %v3316 = vpop.f32.mrf.mxu0
      %v3317 = vadd.f32 %v3256, %v3316
      %v3318 = vand.u32 %v3071, 4294901760
      %v3319 = vsub.f32 %v3071, %v3318
      %v3320 = vand.u32 %v3319, 4294901760
      %3321 = vmatmul.f32.gmra.mxu0 %v3320
      %v3322 = vpop.f32.mrf.mxu0
      %v3323 = vadd.f32 %v3261, %v3322
      %v3324 = vand.u32 %v3074, 4294901760
      %v3325 = vsub.f32 %v3074, %v3324
      %v3326 = vand.u32 %v3325, 4294901760
      %3327 = vmatmul.f32.gmra.mxu0 %v3326
      %v3328 = vpop.f32.mrf.mxu0
      %v3329 = vadd.f32 %v3266, %v3328
      %v3330 = vand.u32 %v3077, 4294901760
      %v3331 = vsub.f32 %v3077, %v3330
      %v3332 = vand.u32 %v3331, 4294901760
      %3333 = vmatmul.f32.gmra.mxu0 %v3332
      %v3334 = vpop.f32.mrf.mxu0
      %v3335 = vadd.f32 %v3271, %v3334
      %v3336 = vand.u32 %v3080, 4294901760
      %v3337 = vsub.f32 %v3080, %v3336
      %v3338 = vand.u32 %v3337, 4294901760
      %3339 = vmatmul.f32.gmra.mxu0 %v3338
      %v3340 = vpop.f32.mrf.mxu0
      %v3341 = vadd.f32 %v3276, %v3340
      %v3342 = vand.u32 %v3083, 4294901760
      %v3343 = vsub.f32 %v3083, %v3342
      %v3344 = vand.u32 %v3343, 4294901760
      %3345 = vmatmul.f32.gmra.mxu0 %v3344
      %v3346 = vpop.f32.mrf.mxu0
      %v3347 = vadd.f32 %v3281, %v3346
      %3348 = vdwg.mxu0
      %3349 = vmatpush.msra.mxu0 0.0
      %3350 = vmatpush.msra.mxu0 0.0
      %3351 = vmatpush.msra.mxu0 0.0
      %3352 = vmatpush.msra.mxu0 0.0
      %3353 = vmatpush.msra.mxu0 0.0
      %3354 = vmatpush.msra.mxu0 0.0
      %3355 = vmatpush.msra.mxu0 0.0
      %3356 = vmatpush.msra.mxu0 0.0
      %3357 = vmatpush.msra.mxu0 0.0
      %3358 = vmatpush.msra.mxu0 0.0
      %3359 = vmatpush.msra.mxu0 0.0
      %3360 = vmatpush.msra.mxu0 0.0
      %3361 = vmatpush.msra.mxu0 0.0
      %3362 = vmatpush.msra.mxu0 0.0
      %3363 = vmatpush.msra.mxu0 0.0
      %v3364 = vand.u32 %v3086, 4294901760
      %v3365 = vsub.f32 %v3086, %v3364
      %v3366 = vand.u32 %v3365, 4294901760
      %3367 = vmatpush.msra.mxu0 %v3366
      %v3368 = vand.u32 %v3062, 4294901760
      %3369 = vmatmul.f32.gmra.mxu0 %v3368
      %v3370 = vpop.f32.mrf.mxu0
      %v3371 = vadd.f32 %v3305, %v3370
      %v3372 = vand.u32 %v3065, 4294901760
      %3373 = vmatmul.f32.gmra.mxu0 %v3372
      %v3374 = vpop.f32.mrf.mxu0
      %v3375 = vadd.f32 %v3311, %v3374
      %v3376 = vand.u32 %v3068, 4294901760
      %3377 = vmatmul.f32.gmra.mxu0 %v3376
      %v3378 = vpop.f32.mrf.mxu0
      %v3379 = vadd.f32 %v3317, %v3378
      %v3380 = vand.u32 %v3071, 4294901760
      %3381 = vmatmul.f32.gmra.mxu0 %v3380
      %v3382 = vpop.f32.mrf.mxu0
      %v3383 = vadd.f32 %v3323, %v3382
      %v3384 = vand.u32 %v3074, 4294901760
      %3385 = vmatmul.f32.gmra.mxu0 %v3384
      %v3386 = vpop.f32.mrf.mxu0
      %v3387 = vadd.f32 %v3329, %v3386
      %v3388 = vand.u32 %v3077, 4294901760
      %3389 = vmatmul.f32.gmra.mxu0 %v3388
      %v3390 = vpop.f32.mrf.mxu0
      %v3391 = vadd.f32 %v3335, %v3390
      %v3392 = vand.u32 %v3080, 4294901760
      %3393 = vmatmul.f32.gmra.mxu0 %v3392
      %v3394 = vpop.f32.mrf.mxu0
      %v3395 = vadd.f32 %v3341, %v3394
      %v3396 = vand.u32 %v3083, 4294901760
      %3397 = vmatmul.f32.gmra.mxu0 %v3396
      %v3398 = vpop.f32.mrf.mxu0
      %v3399 = vadd.f32 %v3347, %v3398
      %3400 = vdwg.mxu0
      %3401 = vmatpush.msra.mxu0 0.0
      %3402 = vmatpush.msra.mxu0 0.0
      %3403 = vmatpush.msra.mxu0 0.0
      %3404 = vmatpush.msra.mxu0 0.0
      %3405 = vmatpush.msra.mxu0 0.0
      %3406 = vmatpush.msra.mxu0 0.0
      %3407 = vmatpush.msra.mxu0 0.0
      %3408 = vmatpush.msra.mxu0 0.0
      %3409 = vmatpush.msra.mxu0 0.0
      %3410 = vmatpush.msra.mxu0 0.0
      %3411 = vmatpush.msra.mxu0 0.0
      %3412 = vmatpush.msra.mxu0 0.0
      %3413 = vmatpush.msra.mxu0 0.0
      %3414 = vmatpush.msra.mxu0 0.0
      %3415 = vmatpush.msra.mxu0 0.0
      %v3416 = vand.u32 %v3086, 4294901760
      %3417 = vmatpush.msra.mxu0 %v3416
      %v3418 = vand.u32 %v3062, 4294901760
      %3419 = vmatmul.f32.gmra.mxu0 %v3418
      %v3420 = vpop.f32.mrf.mxu0
      %v3421 = vadd.f32 %v3371, %v3420
      %v3422 = vand.u32 %v3065, 4294901760
      %3423 = vmatmul.f32.gmra.mxu0 %v3422
      %v3424 = vpop.f32.mrf.mxu0
      %v3425 = vadd.f32 %v3375, %v3424
      %v3426 = vand.u32 %v3068, 4294901760
      %3427 = vmatmul.f32.gmra.mxu0 %v3426
      %v3428 = vpop.f32.mrf.mxu0
      %v3429 = vadd.f32 %v3379, %v3428
      %v3430 = vand.u32 %v3071, 4294901760
      %3431 = vmatmul.f32.gmra.mxu0 %v3430
      %v3432 = vpop.f32.mrf.mxu0
      %v3433 = vadd.f32 %v3383, %v3432
      %v3434 = vand.u32 %v3074, 4294901760
      %3435 = vmatmul.f32.gmra.mxu0 %v3434
      %v3436 = vpop.f32.mrf.mxu0
      %v3437 = vadd.f32 %v3387, %v3436
      %v3438 = vand.u32 %v3077, 4294901760
      %3439 = vmatmul.f32.gmra.mxu0 %v3438
      %v3440 = vpop.f32.mrf.mxu0
      %v3441 = vadd.f32 %v3391, %v3440
      %v3442 = vand.u32 %v3080, 4294901760
      %3443 = vmatmul.f32.gmra.mxu0 %v3442
      %v3444 = vpop.f32.mrf.mxu0
      %v3445 = vadd.f32 %v3395, %v3444
      %v3446 = vand.u32 %v3083, 4294901760
      %3447 = vmatmul.f32.gmra.mxu0 %v3446
      %v3448 = vpop.f32.mrf.mxu0
      %v3449 = vadd.f32 %v3399, %v3448
      %3450 = vdwg.mxu0
      %v3451 = vadd.f32 %v3042, %v3421
      %v3452 = vadd.f32 %v3043, %v3425
      %v3453 = vadd.f32 %v3044, %v3429
      %v3454 = vadd.f32 %v3045, %v3433
      %v3455 = vadd.f32 %v3046, %v3437
      %v3456 = vadd.f32 %v3047, %v3441
      %v3457 = vadd.f32 %v3048, %v3445
      %v3458 = vadd.f32 %v3049, %v3449
      %v3459 = vld [vmem:[%s563] sm:$0xff]
      %s3460 = scalar_lea.vmem %s548, 8
      %v3461 = vld [vmem:[%s3460] sm:$0xff]
      %v3462 = vld [vmem:[%s3460 + $0x8] sm:$0xff]
      %v3463 = vld [vmem:[%s3460 + $0x10] sm:$0xff]
      %v3464 = vld [vmem:[%s3460 + $0x18] sm:$0xff]
      %v3465 = vld [vmem:[%s3460 + $0x20] sm:$0xff]
      %v3466 = vld [vmem:[%s3460 + $0x28] sm:$0xff]
      %v3467 = vld [vmem:[%s3460 + $0x30] sm:$0xff]
      %s3468 = scalar_lea.vmem %s6, 28
      %v3469 = vld [vmem:[%s3468] sm:$0xf]
      %v3471 = vsel %vm610, %v3461, 0
      %v3474 = vsel %vm610, %v3462, 0
      %v3477 = vsel %vm610, %v3463, 0
      %v3480 = vsel %vm610, %v3464, 0
      %v3483 = vsel %vm610, %v3465, 0
      %v3486 = vsel %vm610, %v3466, 0
      %v3489 = vsel %vm610, %v3467, 0
      %v3492 = vsel %vm610, %v3459, 0
      %v3495 = vsel %vm635, %v3469, 0
      %3497 = vmatpush.msra.mxu0 0.0
      %3498 = vmatpush.msra.mxu0 0.0
      %3499 = vmatpush.msra.mxu0 0.0
      %3500 = vmatpush.msra.mxu0 0.0
      %3501 = vmatpush.msra.mxu0 0.0
      %3502 = vmatpush.msra.mxu0 0.0
      %3503 = vmatpush.msra.mxu0 0.0
      %3504 = vmatpush.msra.mxu0 0.0
      %3505 = vmatpush.msra.mxu0 0.0
      %3506 = vmatpush.msra.mxu0 0.0
      %3507 = vmatpush.msra.mxu0 0.0
      %3508 = vmatpush.msra.mxu0 0.0
      %3509 = vmatpush.msra.mxu0 0.0
      %3510 = vmatpush.msra.mxu0 0.0
      %3511 = vmatpush.msra.mxu0 0.0
      %v3512 = vand.u32 %v3495, 4294901760
      %3513 = vmatpush.msra.mxu0 %v3512
      %v3514 = vand.u32 %v3471, 4294901760
      %v3515 = vsub.f32 %v3471, %v3514
      %v3516 = vand.u32 %v3515, 4294901760
      %v3517 = vsub.f32 %v3515, %v3516
      %v3518 = vand.u32 %v3517, 4294901760
      %3519 = vmatmul.f32.gmra.mxu0 %v3518
      %v3520 = vpop.f32.mrf.mxu0
      %v3521 = vadd.f32 0.0, %v3520
      %v3522 = vand.u32 %v3474, 4294901760
      %v3523 = vsub.f32 %v3474, %v3522
      %v3524 = vand.u32 %v3523, 4294901760
      %v3525 = vsub.f32 %v3523, %v3524
      %v3526 = vand.u32 %v3525, 4294901760
      %3527 = vmatmul.f32.gmra.mxu0 %v3526
      %v3528 = vpop.f32.mrf.mxu0
      %v3529 = vadd.f32 0.0, %v3528
      %v3530 = vand.u32 %v3477, 4294901760
      %v3531 = vsub.f32 %v3477, %v3530
      %v3532 = vand.u32 %v3531, 4294901760
      %v3533 = vsub.f32 %v3531, %v3532
      %v3534 = vand.u32 %v3533, 4294901760
      %3535 = vmatmul.f32.gmra.mxu0 %v3534
      %v3536 = vpop.f32.mrf.mxu0
      %v3537 = vadd.f32 0.0, %v3536
      %v3538 = vand.u32 %v3480, 4294901760
      %v3539 = vsub.f32 %v3480, %v3538
      %v3540 = vand.u32 %v3539, 4294901760
      %v3541 = vsub.f32 %v3539, %v3540
      %v3542 = vand.u32 %v3541, 4294901760
      %3543 = vmatmul.f32.gmra.mxu0 %v3542
      %v3544 = vpop.f32.mrf.mxu0
      %v3545 = vadd.f32 0.0, %v3544
      %v3546 = vand.u32 %v3483, 4294901760
      %v3547 = vsub.f32 %v3483, %v3546
      %v3548 = vand.u32 %v3547, 4294901760
      %v3549 = vsub.f32 %v3547, %v3548
      %v3550 = vand.u32 %v3549, 4294901760
      %3551 = vmatmul.f32.gmra.mxu0 %v3550
      %v3552 = vpop.f32.mrf.mxu0
      %v3553 = vadd.f32 0.0, %v3552
      %v3554 = vand.u32 %v3486, 4294901760
      %v3555 = vsub.f32 %v3486, %v3554
      %v3556 = vand.u32 %v3555, 4294901760
      %v3557 = vsub.f32 %v3555, %v3556
      %v3558 = vand.u32 %v3557, 4294901760
      %3559 = vmatmul.f32.gmra.mxu0 %v3558
      %v3560 = vpop.f32.mrf.mxu0
      %v3561 = vadd.f32 0.0, %v3560
      %v3562 = vand.u32 %v3489, 4294901760
      %v3563 = vsub.f32 %v3489, %v3562
      %v3564 = vand.u32 %v3563, 4294901760
      %v3565 = vsub.f32 %v3563, %v3564
      %v3566 = vand.u32 %v3565, 4294901760
      %3567 = vmatmul.f32.gmra.mxu0 %v3566
      %v3568 = vpop.f32.mrf.mxu0
      %v3569 = vadd.f32 0.0, %v3568
      %v3570 = vand.u32 %v3492, 4294901760
      %v3571 = vsub.f32 %v3492, %v3570
      %v3572 = vand.u32 %v3571, 4294901760
      %v3573 = vsub.f32 %v3571, %v3572
      %v3574 = vand.u32 %v3573, 4294901760
      %3575 = vmatmul.f32.gmra.mxu0 %v3574
      %v3576 = vpop.f32.mrf.mxu0
      %v3577 = vadd.f32 0.0, %v3576
      %3578 = vdwg.mxu0
      %3579 = vmatpush.msra.mxu0 0.0
      %3580 = vmatpush.msra.mxu0 0.0
      %3581 = vmatpush.msra.mxu0 0.0
      %3582 = vmatpush.msra.mxu0 0.0
      %3583 = vmatpush.msra.mxu0 0.0
      %3584 = vmatpush.msra.mxu0 0.0
      %3585 = vmatpush.msra.mxu0 0.0
      %3586 = vmatpush.msra.mxu0 0.0
      %3587 = vmatpush.msra.mxu0 0.0
      %3588 = vmatpush.msra.mxu0 0.0
      %3589 = vmatpush.msra.mxu0 0.0
      %3590 = vmatpush.msra.mxu0 0.0
      %3591 = vmatpush.msra.mxu0 0.0
      %3592 = vmatpush.msra.mxu0 0.0
      %3593 = vmatpush.msra.mxu0 0.0
      %v3594 = vand.u32 %v3495, 4294901760
      %v3595 = vsub.f32 %v3495, %v3594
      %v3596 = vand.u32 %v3595, 4294901760
      %v3597 = vsub.f32 %v3595, %v3596
      %v3598 = vand.u32 %v3597, 4294901760
      %3599 = vmatpush.msra.mxu0 %v3598
      %v3600 = vand.u32 %v3471, 4294901760
      %3601 = vmatmul.f32.gmra.mxu0 %v3600
      %v3602 = vpop.f32.mrf.mxu0
      %v3603 = vadd.f32 %v3521, %v3602
      %v3604 = vand.u32 %v3474, 4294901760
      %3605 = vmatmul.f32.gmra.mxu0 %v3604
      %v3606 = vpop.f32.mrf.mxu0
      %v3607 = vadd.f32 %v3529, %v3606
      %v3608 = vand.u32 %v3477, 4294901760
      %3609 = vmatmul.f32.gmra.mxu0 %v3608
      %v3610 = vpop.f32.mrf.mxu0
      %v3611 = vadd.f32 %v3537, %v3610
      %v3612 = vand.u32 %v3480, 4294901760
      %3613 = vmatmul.f32.gmra.mxu0 %v3612
      %v3614 = vpop.f32.mrf.mxu0
      %v3615 = vadd.f32 %v3545, %v3614
      %v3616 = vand.u32 %v3483, 4294901760
      %3617 = vmatmul.f32.gmra.mxu0 %v3616
      %v3618 = vpop.f32.mrf.mxu0
      %v3619 = vadd.f32 %v3553, %v3618
      %v3620 = vand.u32 %v3486, 4294901760
      %3621 = vmatmul.f32.gmra.mxu0 %v3620
      %v3622 = vpop.f32.mrf.mxu0
      %v3623 = vadd.f32 %v3561, %v3622
      %v3624 = vand.u32 %v3489, 4294901760
      %3625 = vmatmul.f32.gmra.mxu0 %v3624
      %v3626 = vpop.f32.mrf.mxu0
      %v3627 = vadd.f32 %v3569, %v3626
      %v3628 = vand.u32 %v3492, 4294901760
      %3629 = vmatmul.f32.gmra.mxu0 %v3628
      %v3630 = vpop.f32.mrf.mxu0
      %v3631 = vadd.f32 %v3577, %v3630
      %3632 = vdwg.mxu0
      %3633 = vmatpush.msra.mxu0 0.0
      %3634 = vmatpush.msra.mxu0 0.0
      %3635 = vmatpush.msra.mxu0 0.0
      %3636 = vmatpush.msra.mxu0 0.0
      %3637 = vmatpush.msra.mxu0 0.0
      %3638 = vmatpush.msra.mxu0 0.0
      %3639 = vmatpush.msra.mxu0 0.0
      %3640 = vmatpush.msra.mxu0 0.0
      %3641 = vmatpush.msra.mxu0 0.0
      %3642 = vmatpush.msra.mxu0 0.0
      %3643 = vmatpush.msra.mxu0 0.0
      %3644 = vmatpush.msra.mxu0 0.0
      %3645 = vmatpush.msra.mxu0 0.0
      %3646 = vmatpush.msra.mxu0 0.0
      %3647 = vmatpush.msra.mxu0 0.0
      %v3648 = vand.u32 %v3495, 4294901760
      %v3649 = vsub.f32 %v3495, %v3648
      %3650 = vmatpush.msra.mxu0 %v3649
      %v3651 = vand.u32 %v3471, 4294901760
      %v3652 = vsub.f32 %v3471, %v3651
      %3653 = vmatmul.f32.gmra.mxu0 %v3652
      %v3654 = vpop.f32.mrf.mxu0
      %v3655 = vadd.f32 %v3603, %v3654
      %v3656 = vand.u32 %v3474, 4294901760
      %v3657 = vsub.f32 %v3474, %v3656
      %3658 = vmatmul.f32.gmra.mxu0 %v3657
      %v3659 = vpop.f32.mrf.mxu0
      %v3660 = vadd.f32 %v3607, %v3659
      %v3661 = vand.u32 %v3477, 4294901760
      %v3662 = vsub.f32 %v3477, %v3661
      %3663 = vmatmul.f32.gmra.mxu0 %v3662
      %v3664 = vpop.f32.mrf.mxu0
      %v3665 = vadd.f32 %v3611, %v3664
      %v3666 = vand.u32 %v3480, 4294901760
      %v3667 = vsub.f32 %v3480, %v3666
      %3668 = vmatmul.f32.gmra.mxu0 %v3667
      %v3669 = vpop.f32.mrf.mxu0
      %v3670 = vadd.f32 %v3615, %v3669
      %v3671 = vand.u32 %v3483, 4294901760
      %v3672 = vsub.f32 %v3483, %v3671
      %3673 = vmatmul.f32.gmra.mxu0 %v3672
      %v3674 = vpop.f32.mrf.mxu0
      %v3675 = vadd.f32 %v3619, %v3674
      %v3676 = vand.u32 %v3486, 4294901760
      %v3677 = vsub.f32 %v3486, %v3676
      %3678 = vmatmul.f32.gmra.mxu0 %v3677
      %v3679 = vpop.f32.mrf.mxu0
      %v3680 = vadd.f32 %v3623, %v3679
      %v3681 = vand.u32 %v3489, 4294901760
      %v3682 = vsub.f32 %v3489, %v3681
      %3683 = vmatmul.f32.gmra.mxu0 %v3682
      %v3684 = vpop.f32.mrf.mxu0
      %v3685 = vadd.f32 %v3627, %v3684
      %v3686 = vand.u32 %v3492, 4294901760
      %v3687 = vsub.f32 %v3492, %v3686
      %3688 = vmatmul.f32.gmra.mxu0 %v3687
      %v3689 = vpop.f32.mrf.mxu0
      %v3690 = vadd.f32 %v3631, %v3689
      %3691 = vdwg.mxu0
      %3692 = vmatpush.msra.mxu0 0.0
      %3693 = vmatpush.msra.mxu0 0.0
      %3694 = vmatpush.msra.mxu0 0.0
      %3695 = vmatpush.msra.mxu0 0.0
      %3696 = vmatpush.msra.mxu0 0.0
      %3697 = vmatpush.msra.mxu0 0.0
      %3698 = vmatpush.msra.mxu0 0.0
      %3699 = vmatpush.msra.mxu0 0.0
      %3700 = vmatpush.msra.mxu0 0.0
      %3701 = vmatpush.msra.mxu0 0.0
      %3702 = vmatpush.msra.mxu0 0.0
      %3703 = vmatpush.msra.mxu0 0.0
      %3704 = vmatpush.msra.mxu0 0.0
      %3705 = vmatpush.msra.mxu0 0.0
      %3706 = vmatpush.msra.mxu0 0.0
      %v3707 = vand.u32 %v3495, 4294901760
      %3708 = vmatpush.msra.mxu0 %v3707
      %v3709 = vand.u32 %v3471, 4294901760
      %v3710 = vsub.f32 %v3471, %v3709
      %v3711 = vand.u32 %v3710, 4294901760
      %3712 = vmatmul.f32.gmra.mxu0 %v3711
      %v3713 = vpop.f32.mrf.mxu0
      %v3714 = vadd.f32 %v3655, %v3713
      %v3715 = vand.u32 %v3474, 4294901760
      %v3716 = vsub.f32 %v3474, %v3715
      %v3717 = vand.u32 %v3716, 4294901760
      %3718 = vmatmul.f32.gmra.mxu0 %v3717
      %v3719 = vpop.f32.mrf.mxu0
      %v3720 = vadd.f32 %v3660, %v3719
      %v3721 = vand.u32 %v3477, 4294901760
      %v3722 = vsub.f32 %v3477, %v3721
      %v3723 = vand.u32 %v3722, 4294901760
      %3724 = vmatmul.f32.gmra.mxu0 %v3723
      %v3725 = vpop.f32.mrf.mxu0
      %v3726 = vadd.f32 %v3665, %v3725
      %v3727 = vand.u32 %v3480, 4294901760
      %v3728 = vsub.f32 %v3480, %v3727
      %v3729 = vand.u32 %v3728, 4294901760
      %3730 = vmatmul.f32.gmra.mxu0 %v3729
      %v3731 = vpop.f32.mrf.mxu0
      %v3732 = vadd.f32 %v3670, %v3731
      %v3733 = vand.u32 %v3483, 4294901760
      %v3734 = vsub.f32 %v3483, %v3733
      %v3735 = vand.u32 %v3734, 4294901760
      %3736 = vmatmul.f32.gmra.mxu0 %v3735
      %v3737 = vpop.f32.mrf.mxu0
      %v3738 = vadd.f32 %v3675, %v3737
      %v3739 = vand.u32 %v3486, 4294901760
      %v3740 = vsub.f32 %v3486, %v3739
      %v3741 = vand.u32 %v3740, 4294901760
      %3742 = vmatmul.f32.gmra.mxu0 %v3741
      %v3743 = vpop.f32.mrf.mxu0
      %v3744 = vadd.f32 %v3680, %v3743
      %v3745 = vand.u32 %v3489, 4294901760
      %v3746 = vsub.f32 %v3489, %v3745
      %v3747 = vand.u32 %v3746, 4294901760
      %3748 = vmatmul.f32.gmra.mxu0 %v3747
      %v3749 = vpop.f32.mrf.mxu0
      %v3750 = vadd.f32 %v3685, %v3749
      %v3751 = vand.u32 %v3492, 4294901760
      %v3752 = vsub.f32 %v3492, %v3751
      %v3753 = vand.u32 %v3752, 4294901760
      %3754 = vmatmul.f32.gmra.mxu0 %v3753
      %v3755 = vpop.f32.mrf.mxu0
      %v3756 = vadd.f32 %v3690, %v3755
      %3757 = vdwg.mxu0
      %3758 = vmatpush.msra.mxu0 0.0
      %3759 = vmatpush.msra.mxu0 0.0
      %3760 = vmatpush.msra.mxu0 0.0
      %3761 = vmatpush.msra.mxu0 0.0
      %3762 = vmatpush.msra.mxu0 0.0
      %3763 = vmatpush.msra.mxu0 0.0
      %3764 = vmatpush.msra.mxu0 0.0
      %3765 = vmatpush.msra.mxu0 0.0
      %3766 = vmatpush.msra.mxu0 0.0
      %3767 = vmatpush.msra.mxu0 0.0
      %3768 = vmatpush.msra.mxu0 0.0
      %3769 = vmatpush.msra.mxu0 0.0
      %3770 = vmatpush.msra.mxu0 0.0
      %3771 = vmatpush.msra.mxu0 0.0
      %3772 = vmatpush.msra.mxu0 0.0
      %v3773 = vand.u32 %v3495, 4294901760
      %v3774 = vsub.f32 %v3495, %v3773
      %v3775 = vand.u32 %v3774, 4294901760
      %3776 = vmatpush.msra.mxu0 %v3775
      %v3777 = vand.u32 %v3471, 4294901760
      %3778 = vmatmul.f32.gmra.mxu0 %v3777
      %v3779 = vpop.f32.mrf.mxu0
      %v3780 = vadd.f32 %v3714, %v3779
      %v3781 = vand.u32 %v3474, 4294901760
      %3782 = vmatmul.f32.gmra.mxu0 %v3781
      %v3783 = vpop.f32.mrf.mxu0
      %v3784 = vadd.f32 %v3720, %v3783
      %v3785 = vand.u32 %v3477, 4294901760
      %3786 = vmatmul.f32.gmra.mxu0 %v3785
      %v3787 = vpop.f32.mrf.mxu0
      %v3788 = vadd.f32 %v3726, %v3787
      %v3789 = vand.u32 %v3480, 4294901760
      %3790 = vmatmul.f32.gmra.mxu0 %v3789
      %v3791 = vpop.f32.mrf.mxu0
      %v3792 = vadd.f32 %v3732, %v3791
      %v3793 = vand.u32 %v3483, 4294901760
      %3794 = vmatmul.f32.gmra.mxu0 %v3793
      %v3795 = vpop.f32.mrf.mxu0
      %v3796 = vadd.f32 %v3738, %v3795
      %v3797 = vand.u32 %v3486, 4294901760
      %3798 = vmatmul.f32.gmra.mxu0 %v3797
      %v3799 = vpop.f32.mrf.mxu0
      %v3800 = vadd.f32 %v3744, %v3799
      %v3801 = vand.u32 %v3489, 4294901760
      %3802 = vmatmul.f32.gmra.mxu0 %v3801
      %v3803 = vpop.f32.mrf.mxu0
      %v3804 = vadd.f32 %v3750, %v3803
      %v3805 = vand.u32 %v3492, 4294901760
      %3806 = vmatmul.f32.gmra.mxu0 %v3805
      %v3807 = vpop.f32.mrf.mxu0
      %v3808 = vadd.f32 %v3756, %v3807
      %3809 = vdwg.mxu0
      %3810 = vmatpush.msra.mxu0 0.0
      %3811 = vmatpush.msra.mxu0 0.0
      %3812 = vmatpush.msra.mxu0 0.0
      %3813 = vmatpush.msra.mxu0 0.0
      %3814 = vmatpush.msra.mxu0 0.0
      %3815 = vmatpush.msra.mxu0 0.0
      %3816 = vmatpush.msra.mxu0 0.0
      %3817 = vmatpush.msra.mxu0 0.0
      %3818 = vmatpush.msra.mxu0 0.0
      %3819 = vmatpush.msra.mxu0 0.0
      %3820 = vmatpush.msra.mxu0 0.0
      %3821 = vmatpush.msra.mxu0 0.0
      %3822 = vmatpush.msra.mxu0 0.0
      %3823 = vmatpush.msra.mxu0 0.0
      %3824 = vmatpush.msra.mxu0 0.0
      %v3825 = vand.u32 %v3495, 4294901760
      %3826 = vmatpush.msra.mxu0 %v3825
      %v3827 = vand.u32 %v3471, 4294901760
      %3828 = vmatmul.f32.gmra.mxu0 %v3827
      %v3829 = vpop.f32.mrf.mxu0
      %v3830 = vadd.f32 %v3780, %v3829
      %v3831 = vand.u32 %v3474, 4294901760
      %3832 = vmatmul.f32.gmra.mxu0 %v3831
      %v3833 = vpop.f32.mrf.mxu0
      %v3834 = vadd.f32 %v3784, %v3833
      %v3835 = vand.u32 %v3477, 4294901760
      %3836 = vmatmul.f32.gmra.mxu0 %v3835
      %v3837 = vpop.f32.mrf.mxu0
      %v3838 = vadd.f32 %v3788, %v3837
      %v3839 = vand.u32 %v3480, 4294901760
      %3840 = vmatmul.f32.gmra.mxu0 %v3839
      %v3841 = vpop.f32.mrf.mxu0
      %v3842 = vadd.f32 %v3792, %v3841
      %v3843 = vand.u32 %v3483, 4294901760
      %3844 = vmatmul.f32.gmra.mxu0 %v3843
      %v3845 = vpop.f32.mrf.mxu0
      %v3846 = vadd.f32 %v3796, %v3845
      %v3847 = vand.u32 %v3486, 4294901760
      %3848 = vmatmul.f32.gmra.mxu0 %v3847
      %v3849 = vpop.f32.mrf.mxu0
      %v3850 = vadd.f32 %v3800, %v3849
      %v3851 = vand.u32 %v3489, 4294901760
      %3852 = vmatmul.f32.gmra.mxu0 %v3851
      %v3853 = vpop.f32.mrf.mxu0
      %v3854 = vadd.f32 %v3804, %v3853
      %v3855 = vand.u32 %v3492, 4294901760
      %3856 = vmatmul.f32.gmra.mxu0 %v3855
      %v3857 = vpop.f32.mrf.mxu0
      %v3858 = vadd.f32 %v3808, %v3857
      %3859 = vdwg.mxu0
      %v3860 = vadd.f32 %v3451, %v3830
      %v3861 = vadd.f32 %v3452, %v3834
      %v3862 = vadd.f32 %v3453, %v3838
      %v3863 = vadd.f32 %v3454, %v3842
      %v3864 = vadd.f32 %v3455, %v3846
      %v3865 = vadd.f32 %v3456, %v3850
      %v3866 = vadd.f32 %v3457, %v3854
      %v3867 = vadd.f32 %v3458, %v3858
      %v3868 = vld [vmem:[%s533 + $0x1] sm:$0xff]
      %v3869 = vld [vmem:[%s3051 + $0x1] sm:$0xff]
      %v3870 = vld [vmem:[%s3051 + $0x11] sm:$0xff]
      %v3871 = vld [vmem:[%s3051 + $0x21] sm:$0xff]
      %v3872 = vld [vmem:[%s3051 + $0x31] sm:$0xff]
      %v3873 = vld [vmem:[%s3051 + $0x41] sm:$0xff]
      %v3874 = vld [vmem:[%s3051 + $0x51] sm:$0xff]
      %v3875 = vld [vmem:[%s3051 + $0x61] sm:$0xff]
      %s3876 = scalar_lea.vmem %s6, 32
      %v3877 = vld [vmem:[%s3876] sm:$0xf]
      %v3879 = vsel %vm610, %v3869, 0
      %v3882 = vsel %vm610, %v3870, 0
      %v3885 = vsel %vm610, %v3871, 0
      %v3888 = vsel %vm610, %v3872, 0
      %v3891 = vsel %vm610, %v3873, 0
      %v3894 = vsel %vm610, %v3874, 0
      %v3897 = vsel %vm610, %v3875, 0
      %v3900 = vsel %vm610, %v3868, 0
      %v3903 = vsel %vm635, %v3877, 0
      %3905 = vmatpush.msra.mxu0 0.0
      %3906 = vmatpush.msra.mxu0 0.0
      %3907 = vmatpush.msra.mxu0 0.0
      %3908 = vmatpush.msra.mxu0 0.0
      %3909 = vmatpush.msra.mxu0 0.0
      %3910 = vmatpush.msra.mxu0 0.0
      %3911 = vmatpush.msra.mxu0 0.0
      %3912 = vmatpush.msra.mxu0 0.0
      %3913 = vmatpush.msra.mxu0 0.0
      %3914 = vmatpush.msra.mxu0 0.0
      %3915 = vmatpush.msra.mxu0 0.0
      %3916 = vmatpush.msra.mxu0 0.0
      %3917 = vmatpush.msra.mxu0 0.0
      %3918 = vmatpush.msra.mxu0 0.0
      %3919 = vmatpush.msra.mxu0 0.0
      %v3920 = vand.u32 %v3903, 4294901760
      %3921 = vmatpush.msra.mxu0 %v3920
      %v3922 = vand.u32 %v3879, 4294901760
      %v3923 = vsub.f32 %v3879, %v3922
      %v3924 = vand.u32 %v3923, 4294901760
      %v3925 = vsub.f32 %v3923, %v3924
      %v3926 = vand.u32 %v3925, 4294901760
      %3927 = vmatmul.f32.gmra.mxu0 %v3926
      %v3928 = vpop.f32.mrf.mxu0
      %v3929 = vadd.f32 0.0, %v3928
      %v3930 = vand.u32 %v3882, 4294901760
      %v3931 = vsub.f32 %v3882, %v3930
      %v3932 = vand.u32 %v3931, 4294901760
      %v3933 = vsub.f32 %v3931, %v3932
      %v3934 = vand.u32 %v3933, 4294901760
      %3935 = vmatmul.f32.gmra.mxu0 %v3934
      %v3936 = vpop.f32.mrf.mxu0
      %v3937 = vadd.f32 0.0, %v3936
      %v3938 = vand.u32 %v3885, 4294901760
      %v3939 = vsub.f32 %v3885, %v3938
      %v3940 = vand.u32 %v3939, 4294901760
      %v3941 = vsub.f32 %v3939, %v3940
      %v3942 = vand.u32 %v3941, 4294901760
      %3943 = vmatmul.f32.gmra.mxu0 %v3942
      %v3944 = vpop.f32.mrf.mxu0
      %v3945 = vadd.f32 0.0, %v3944
      %v3946 = vand.u32 %v3888, 4294901760
      %v3947 = vsub.f32 %v3888, %v3946
      %v3948 = vand.u32 %v3947, 4294901760
      %v3949 = vsub.f32 %v3947, %v3948
      %v3950 = vand.u32 %v3949, 4294901760
      %3951 = vmatmul.f32.gmra.mxu0 %v3950
      %v3952 = vpop.f32.mrf.mxu0
      %v3953 = vadd.f32 0.0, %v3952
      %v3954 = vand.u32 %v3891, 4294901760
      %v3955 = vsub.f32 %v3891, %v3954
      %v3956 = vand.u32 %v3955, 4294901760
      %v3957 = vsub.f32 %v3955, %v3956
      %v3958 = vand.u32 %v3957, 4294901760
      %3959 = vmatmul.f32.gmra.mxu0 %v3958
      %v3960 = vpop.f32.mrf.mxu0
      %v3961 = vadd.f32 0.0, %v3960
      %v3962 = vand.u32 %v3894, 4294901760
      %v3963 = vsub.f32 %v3894, %v3962
      %v3964 = vand.u32 %v3963, 4294901760
      %v3965 = vsub.f32 %v3963, %v3964
      %v3966 = vand.u32 %v3965, 4294901760
      %3967 = vmatmul.f32.gmra.mxu0 %v3966
      %v3968 = vpop.f32.mrf.mxu0
      %v3969 = vadd.f32 0.0, %v3968
      %v3970 = vand.u32 %v3897, 4294901760
      %v3971 = vsub.f32 %v3897, %v3970
      %v3972 = vand.u32 %v3971, 4294901760
      %v3973 = vsub.f32 %v3971, %v3972
      %v3974 = vand.u32 %v3973, 4294901760
      %3975 = vmatmul.f32.gmra.mxu0 %v3974
      %v3976 = vpop.f32.mrf.mxu0
      %v3977 = vadd.f32 0.0, %v3976
      %v3978 = vand.u32 %v3900, 4294901760
      %v3979 = vsub.f32 %v3900, %v3978
      %v3980 = vand.u32 %v3979, 4294901760
      %v3981 = vsub.f32 %v3979, %v3980
      %v3982 = vand.u32 %v3981, 4294901760
      %3983 = vmatmul.f32.gmra.mxu0 %v3982
      %v3984 = vpop.f32.mrf.mxu0
      %v3985 = vadd.f32 0.0, %v3984
      %3986 = vdwg.mxu0
      %3987 = vmatpush.msra.mxu0 0.0
      %3988 = vmatpush.msra.mxu0 0.0
      %3989 = vmatpush.msra.mxu0 0.0
      %3990 = vmatpush.msra.mxu0 0.0
      %3991 = vmatpush.msra.mxu0 0.0
      %3992 = vmatpush.msra.mxu0 0.0
      %3993 = vmatpush.msra.mxu0 0.0
      %3994 = vmatpush.msra.mxu0 0.0
      %3995 = vmatpush.msra.mxu0 0.0
      %3996 = vmatpush.msra.mxu0 0.0
      %3997 = vmatpush.msra.mxu0 0.0
      %3998 = vmatpush.msra.mxu0 0.0
      %3999 = vmatpush.msra.mxu0 0.0
      %4000 = vmatpush.msra.mxu0 0.0
      %4001 = vmatpush.msra.mxu0 0.0
      %v4002 = vand.u32 %v3903, 4294901760
      %v4003 = vsub.f32 %v3903, %v4002
      %v4004 = vand.u32 %v4003, 4294901760
      %v4005 = vsub.f32 %v4003, %v4004
      %v4006 = vand.u32 %v4005, 4294901760
      %4007 = vmatpush.msra.mxu0 %v4006
      %v4008 = vand.u32 %v3879, 4294901760
      %4009 = vmatmul.f32.gmra.mxu0 %v4008
      %v4010 = vpop.f32.mrf.mxu0
      %v4011 = vadd.f32 %v3929, %v4010
      %v4012 = vand.u32 %v3882, 4294901760
      %4013 = vmatmul.f32.gmra.mxu0 %v4012
      %v4014 = vpop.f32.mrf.mxu0
      %v4015 = vadd.f32 %v3937, %v4014
      %v4016 = vand.u32 %v3885, 4294901760
      %4017 = vmatmul.f32.gmra.mxu0 %v4016
      %v4018 = vpop.f32.mrf.mxu0
      %v4019 = vadd.f32 %v3945, %v4018
      %v4020 = vand.u32 %v3888, 4294901760
      %4021 = vmatmul.f32.gmra.mxu0 %v4020
      %v4022 = vpop.f32.mrf.mxu0
      %v4023 = vadd.f32 %v3953, %v4022
      %v4024 = vand.u32 %v3891, 4294901760
      %4025 = vmatmul.f32.gmra.mxu0 %v4024
      %v4026 = vpop.f32.mrf.mxu0
      %v4027 = vadd.f32 %v3961, %v4026
      %v4028 = vand.u32 %v3894, 4294901760
      %4029 = vmatmul.f32.gmra.mxu0 %v4028
      %v4030 = vpop.f32.mrf.mxu0
      %v4031 = vadd.f32 %v3969, %v4030
      %v4032 = vand.u32 %v3897, 4294901760
      %4033 = vmatmul.f32.gmra.mxu0 %v4032
      %v4034 = vpop.f32.mrf.mxu0
      %v4035 = vadd.f32 %v3977, %v4034
      %v4036 = vand.u32 %v3900, 4294901760
      %4037 = vmatmul.f32.gmra.mxu0 %v4036
      %v4038 = vpop.f32.mrf.mxu0
      %v4039 = vadd.f32 %v3985, %v4038
      %4040 = vdwg.mxu0
      %4041 = vmatpush.msra.mxu0 0.0
      %4042 = vmatpush.msra.mxu0 0.0
      %4043 = vmatpush.msra.mxu0 0.0
      %4044 = vmatpush.msra.mxu0 0.0
      %4045 = vmatpush.msra.mxu0 0.0
      %4046 = vmatpush.msra.mxu0 0.0
      %4047 = vmatpush.msra.mxu0 0.0
      %4048 = vmatpush.msra.mxu0 0.0
      %4049 = vmatpush.msra.mxu0 0.0
      %4050 = vmatpush.msra.mxu0 0.0
      %4051 = vmatpush.msra.mxu0 0.0
      %4052 = vmatpush.msra.mxu0 0.0
      %4053 = vmatpush.msra.mxu0 0.0
      %4054 = vmatpush.msra.mxu0 0.0
      %4055 = vmatpush.msra.mxu0 0.0
      %v4056 = vand.u32 %v3903, 4294901760
      %v4057 = vsub.f32 %v3903, %v4056
      %4058 = vmatpush.msra.mxu0 %v4057
      %v4059 = vand.u32 %v3879, 4294901760
      %v4060 = vsub.f32 %v3879, %v4059
      %4061 = vmatmul.f32.gmra.mxu0 %v4060
      %v4062 = vpop.f32.mrf.mxu0
      %v4063 = vadd.f32 %v4011, %v4062
      %v4064 = vand.u32 %v3882, 4294901760
      %v4065 = vsub.f32 %v3882, %v4064
      %4066 = vmatmul.f32.gmra.mxu0 %v4065
      %v4067 = vpop.f32.mrf.mxu0
      %v4068 = vadd.f32 %v4015, %v4067
      %v4069 = vand.u32 %v3885, 4294901760
      %v4070 = vsub.f32 %v3885, %v4069
      %4071 = vmatmul.f32.gmra.mxu0 %v4070
      %v4072 = vpop.f32.mrf.mxu0
      %v4073 = vadd.f32 %v4019, %v4072
      %v4074 = vand.u32 %v3888, 4294901760
      %v4075 = vsub.f32 %v3888, %v4074
      %4076 = vmatmul.f32.gmra.mxu0 %v4075
      %v4077 = vpop.f32.mrf.mxu0
      %v4078 = vadd.f32 %v4023, %v4077
      %v4079 = vand.u32 %v3891, 4294901760
      %v4080 = vsub.f32 %v3891, %v4079
      %4081 = vmatmul.f32.gmra.mxu0 %v4080
      %v4082 = vpop.f32.mrf.mxu0
      %v4083 = vadd.f32 %v4027, %v4082
      %v4084 = vand.u32 %v3894, 4294901760
      %v4085 = vsub.f32 %v3894, %v4084
      %4086 = vmatmul.f32.gmra.mxu0 %v4085
      %v4087 = vpop.f32.mrf.mxu0
      %v4088 = vadd.f32 %v4031, %v4087
      %v4089 = vand.u32 %v3897, 4294901760
      %v4090 = vsub.f32 %v3897, %v4089
      %4091 = vmatmul.f32.gmra.mxu0 %v4090
      %v4092 = vpop.f32.mrf.mxu0
      %v4093 = vadd.f32 %v4035, %v4092
      %v4094 = vand.u32 %v3900, 4294901760
      %v4095 = vsub.f32 %v3900, %v4094
      %4096 = vmatmul.f32.gmra.mxu0 %v4095
      %v4097 = vpop.f32.mrf.mxu0
      %v4098 = vadd.f32 %v4039, %v4097
      %4099 = vdwg.mxu0
      %4100 = vmatpush.msra.mxu0 0.0
      %4101 = vmatpush.msra.mxu0 0.0
      %4102 = vmatpush.msra.mxu0 0.0
      %4103 = vmatpush.msra.mxu0 0.0
      %4104 = vmatpush.msra.mxu0 0.0
      %4105 = vmatpush.msra.mxu0 0.0
      %4106 = vmatpush.msra.mxu0 0.0
      %4107 = vmatpush.msra.mxu0 0.0
      %4108 = vmatpush.msra.mxu0 0.0
      %4109 = vmatpush.msra.mxu0 0.0
      %4110 = vmatpush.msra.mxu0 0.0
      %4111 = vmatpush.msra.mxu0 0.0
      %4112 = vmatpush.msra.mxu0 0.0
      %4113 = vmatpush.msra.mxu0 0.0
      %4114 = vmatpush.msra.mxu0 0.0
      %v4115 = vand.u32 %v3903, 4294901760
      %4116 = vmatpush.msra.mxu0 %v4115
      %v4117 = vand.u32 %v3879, 4294901760
      %v4118 = vsub.f32 %v3879, %v4117
      %v4119 = vand.u32 %v4118, 4294901760
      %4120 = vmatmul.f32.gmra.mxu0 %v4119
      %v4121 = vpop.f32.mrf.mxu0
      %v4122 = vadd.f32 %v4063, %v4121
      %v4123 = vand.u32 %v3882, 4294901760
      %v4124 = vsub.f32 %v3882, %v4123
      %v4125 = vand.u32 %v4124, 4294901760
      %4126 = vmatmul.f32.gmra.mxu0 %v4125
      %v4127 = vpop.f32.mrf.mxu0
      %v4128 = vadd.f32 %v4068, %v4127
      %v4129 = vand.u32 %v3885, 4294901760
      %v4130 = vsub.f32 %v3885, %v4129
      %v4131 = vand.u32 %v4130, 4294901760
      %4132 = vmatmul.f32.gmra.mxu0 %v4131
      %v4133 = vpop.f32.mrf.mxu0
      %v4134 = vadd.f32 %v4073, %v4133
      %v4135 = vand.u32 %v3888, 4294901760
      %v4136 = vsub.f32 %v3888, %v4135
      %v4137 = vand.u32 %v4136, 4294901760
      %4138 = vmatmul.f32.gmra.mxu0 %v4137
      %v4139 = vpop.f32.mrf.mxu0
      %v4140 = vadd.f32 %v4078, %v4139
      %v4141 = vand.u32 %v3891, 4294901760
      %v4142 = vsub.f32 %v3891, %v4141
      %v4143 = vand.u32 %v4142, 4294901760
      %4144 = vmatmul.f32.gmra.mxu0 %v4143
      %v4145 = vpop.f32.mrf.mxu0
      %v4146 = vadd.f32 %v4083, %v4145
      %v4147 = vand.u32 %v3894, 4294901760
      %v4148 = vsub.f32 %v3894, %v4147
      %v4149 = vand.u32 %v4148, 4294901760
      %4150 = vmatmul.f32.gmra.mxu0 %v4149
      %v4151 = vpop.f32.mrf.mxu0
      %v4152 = vadd.f32 %v4088, %v4151
      %v4153 = vand.u32 %v3897, 4294901760
      %v4154 = vsub.f32 %v3897, %v4153
      %v4155 = vand.u32 %v4154, 4294901760
      %4156 = vmatmul.f32.gmra.mxu0 %v4155
      %v4157 = vpop.f32.mrf.mxu0
      %v4158 = vadd.f32 %v4093, %v4157
      %v4159 = vand.u32 %v3900, 4294901760
      %v4160 = vsub.f32 %v3900, %v4159
      %v4161 = vand.u32 %v4160, 4294901760
      %4162 = vmatmul.f32.gmra.mxu0 %v4161
      %v4163 = vpop.f32.mrf.mxu0
      %v4164 = vadd.f32 %v4098, %v4163
      %4165 = vdwg.mxu0
      %4166 = vmatpush.msra.mxu0 0.0
      %4167 = vmatpush.msra.mxu0 0.0
      %4168 = vmatpush.msra.mxu0 0.0
      %4169 = vmatpush.msra.mxu0 0.0
      %4170 = vmatpush.msra.mxu0 0.0
      %4171 = vmatpush.msra.mxu0 0.0
      %4172 = vmatpush.msra.mxu0 0.0
      %4173 = vmatpush.msra.mxu0 0.0
      %4174 = vmatpush.msra.mxu0 0.0
      %4175 = vmatpush.msra.mxu0 0.0
      %4176 = vmatpush.msra.mxu0 0.0
      %4177 = vmatpush.msra.mxu0 0.0
      %4178 = vmatpush.msra.mxu0 0.0
      %4179 = vmatpush.msra.mxu0 0.0
      %4180 = vmatpush.msra.mxu0 0.0
      %v4181 = vand.u32 %v3903, 4294901760
      %v4182 = vsub.f32 %v3903, %v4181
      %v4183 = vand.u32 %v4182, 4294901760
      %4184 = vmatpush.msra.mxu0 %v4183
      %v4185 = vand.u32 %v3879, 4294901760
      %4186 = vmatmul.f32.gmra.mxu0 %v4185
      %v4187 = vpop.f32.mrf.mxu0
      %v4188 = vadd.f32 %v4122, %v4187
      %v4189 = vand.u32 %v3882, 4294901760
      %4190 = vmatmul.f32.gmra.mxu0 %v4189
      %v4191 = vpop.f32.mrf.mxu0
      %v4192 = vadd.f32 %v4128, %v4191
      %v4193 = vand.u32 %v3885, 4294901760
      %4194 = vmatmul.f32.gmra.mxu0 %v4193
      %v4195 = vpop.f32.mrf.mxu0
      %v4196 = vadd.f32 %v4134, %v4195
      %v4197 = vand.u32 %v3888, 4294901760
      %4198 = vmatmul.f32.gmra.mxu0 %v4197
      %v4199 = vpop.f32.mrf.mxu0
      %v4200 = vadd.f32 %v4140, %v4199
      %v4201 = vand.u32 %v3891, 4294901760
      %4202 = vmatmul.f32.gmra.mxu0 %v4201
      %v4203 = vpop.f32.mrf.mxu0
      %v4204 = vadd.f32 %v4146, %v4203
      %v4205 = vand.u32 %v3894, 4294901760
      %4206 = vmatmul.f32.gmra.mxu0 %v4205
      %v4207 = vpop.f32.mrf.mxu0
      %v4208 = vadd.f32 %v4152, %v4207
      %v4209 = vand.u32 %v3897, 4294901760
      %4210 = vmatmul.f32.gmra.mxu0 %v4209
      %v4211 = vpop.f32.mrf.mxu0
      %v4212 = vadd.f32 %v4158, %v4211
      %v4213 = vand.u32 %v3900, 4294901760
      %4214 = vmatmul.f32.gmra.mxu0 %v4213
      %v4215 = vpop.f32.mrf.mxu0
      %v4216 = vadd.f32 %v4164, %v4215
      %4217 = vdwg.mxu0
      %4218 = vmatpush.msra.mxu0 0.0
      %4219 = vmatpush.msra.mxu0 0.0
      %4220 = vmatpush.msra.mxu0 0.0
      %4221 = vmatpush.msra.mxu0 0.0
      %4222 = vmatpush.msra.mxu0 0.0
      %4223 = vmatpush.msra.mxu0 0.0
      %4224 = vmatpush.msra.mxu0 0.0
      %4225 = vmatpush.msra.mxu0 0.0
      %4226 = vmatpush.msra.mxu0 0.0
      %4227 = vmatpush.msra.mxu0 0.0
      %4228 = vmatpush.msra.mxu0 0.0
      %4229 = vmatpush.msra.mxu0 0.0
      %4230 = vmatpush.msra.mxu0 0.0
      %4231 = vmatpush.msra.mxu0 0.0
      %4232 = vmatpush.msra.mxu0 0.0
      %v4233 = vand.u32 %v3903, 4294901760
      %4234 = vmatpush.msra.mxu0 %v4233
      %v4235 = vand.u32 %v3879, 4294901760
      %4236 = vmatmul.f32.gmra.mxu0 %v4235
      %v4237 = vpop.f32.mrf.mxu0
      %v4238 = vadd.f32 %v4188, %v4237
      %v4239 = vand.u32 %v3882, 4294901760
      %4240 = vmatmul.f32.gmra.mxu0 %v4239
      %v4241 = vpop.f32.mrf.mxu0
      %v4242 = vadd.f32 %v4192, %v4241
      %v4243 = vand.u32 %v3885, 4294901760
      %4244 = vmatmul.f32.gmra.mxu0 %v4243
      %v4245 = vpop.f32.mrf.mxu0
      %v4246 = vadd.f32 %v4196, %v4245
      %v4247 = vand.u32 %v3888, 4294901760
      %4248 = vmatmul.f32.gmra.mxu0 %v4247
      %v4249 = vpop.f32.mrf.mxu0
      %v4250 = vadd.f32 %v4200, %v4249
      %v4251 = vand.u32 %v3891, 4294901760
      %4252 = vmatmul.f32.gmra.mxu0 %v4251
      %v4253 = vpop.f32.mrf.mxu0
      %v4254 = vadd.f32 %v4204, %v4253
      %v4255 = vand.u32 %v3894, 4294901760
      %4256 = vmatmul.f32.gmra.mxu0 %v4255
      %v4257 = vpop.f32.mrf.mxu0
      %v4258 = vadd.f32 %v4208, %v4257
      %v4259 = vand.u32 %v3897, 4294901760
      %4260 = vmatmul.f32.gmra.mxu0 %v4259
      %v4261 = vpop.f32.mrf.mxu0
      %v4262 = vadd.f32 %v4212, %v4261
      %v4263 = vand.u32 %v3900, 4294901760
      %4264 = vmatmul.f32.gmra.mxu0 %v4263
      %v4265 = vpop.f32.mrf.mxu0
      %v4266 = vadd.f32 %v4216, %v4265
      %4267 = vdwg.mxu0
      %v4268 = vadd.f32 %v3860, %v4238
      %v4269 = vadd.f32 %v3861, %v4242
      %v4270 = vadd.f32 %v3862, %v4246
      %v4271 = vadd.f32 %v3863, %v4250
      %v4272 = vadd.f32 %v3864, %v4254
      %v4273 = vadd.f32 %v3865, %v4258
      %v4274 = vadd.f32 %v3866, %v4262
      %v4275 = vadd.f32 %v3867, %v4266
      %4276 = vst.msk [vmem:[%s595] sm:$0xff] %vm610, %v4268
      %4277 = vst.msk [vmem:[%s595 + $0x8] sm:$0xff] %vm610, %v4269
      %4278 = vst.msk [vmem:[%s595 + $0x10] sm:$0xff] %vm610, %v4270
      %4279 = vst.msk [vmem:[%s595 + $0x18] sm:$0xff] %vm610, %v4271
      %4280 = vst.msk [vmem:[%s595 + $0x20] sm:$0xff] %vm610, %v4272
      %4281 = vst.msk [vmem:[%s595 + $0x28] sm:$0xff] %vm610, %v4273
      %4282 = vst.msk [vmem:[%s595 + $0x30] sm:$0xff] %vm610, %v4274
      %4283 = vst.msk [vmem:[%s595 + $0x38] sm:$0xff] %vm610, %v4275
      %s4284 = smul.u32 8, %s24
      %p4285 = scmp.lt.s32.totalorder %s23, 1
      %s4286 = scalar_select %p4285, %s23, 1
      %p4287 = scmp.lt.s32.totalorder %s4284, 7
      %s4288 = scalar_select %p4287, %s4284, 7
      %s4289 = smul.addr %s4286, 8
      %s4290 = sadd.s32 %s4288, %s4289
      %s4291 = smul.addr %s4290, 8
      %s4292 = scalar_lea.vmem %s8, %s4291
      // Predicated region
      $region53: #{downsample.1} parent=51 // pred_check
        %p4293 = pneg %p269
      $region54: #{downsample.1} parent=51 // pred_check_branch
        %4295 = sbr.rel (%p4293) target = $region56
      $region55: #{downsample.1} parent=51 // pred_region
        %s4296 = smul.u32 8, %s24
      $region56: #{downsample.1} parent=51 // pred_fallthru
        _
    $region52: #{downsample.1} parent=5 // pred_fallthru
      _
    %p4297 = scmp.le.s32.totalorder 2, %s14
    // Predicated region
    $region57: #{downsample.1} parent=5 // pred_check
      %p4298 = pneg %p4297
    $region58: #{downsample.1} parent=5 // pred_check_branch
      %4300 = sbr.rel (%p4298) target = $region60
    $region59: #{downsample.1} parent=5 // pred_region
      %s4301 = ssub.s32 %s14, 2
      // Predicated region
      $region61: #{downsample.1} parent=59 // pred_check
        %p4302 = pneg %p275
      $region62: #{downsample.1} parent=59 // pred_check_branch
        %4304 = sbr.rel (%p4302) target = $region64
      $region63: #{downsample.1} parent=59 // pred_region
        %s4305 = smul.u32 8, %s26
        %p4306 = scmp.lt.s32.totalorder %s25, 1
        %s4307 = scalar_select %p4306, %s25, 1
        %p4308 = scmp.lt.s32.totalorder %s4305, 7
        %s4309 = scalar_select %p4308, %s4305, 7
        %s4310 = smul.addr %s4307, 8
        %s4311 = sadd.s32 %s4309, %s4310
        %s4312 = smul.addr %s4311, 8
        %s4313 = scalar_lea.vmem %s8, %s4312
      $region64: #{downsample.1} parent=59 // pred_fallthru
        _
    $region60: #{downsample.1} parent=5 // pred_fallthru
      _
  $region6: #{downsample.1} parent=0 // loop_footer
    %s18 = sadd.s32 1, %s14
  $region7: #{downsample.1} parent=0 // loop_footer_branch
    %13 = sbr.rel target = $region3
  $region8: #{downsample.1} parent=0 // loop_exit
    _

</llo_original>
